<compile_context>
chip_gen: v6e
topology: v6e:2x2x1
jax: 0.10.0
libtpu: 0.0.40
codegen_flags: <defaults>
</compile_context>

<pallas_src>
import functools

import jax
import jax.numpy as jnp
from jax import lax
from jax.experimental import pallas as pl
from jax.experimental.pallas import tpu as pltpu

BN_EPS = 1e-5


def _round_up(x, m):
    return (x + m - 1) // m * m


# ----------------------------- Pallas matmul -----------------------------
def _matmul_kernel(a_ref, b_ref, o_ref, acc_ref):
    @pl.when(pl.program_id(2) == 0)
    def _():
        acc_ref[...] = jnp.zeros_like(acc_ref)

    acc_ref[...] += jnp.dot(a_ref[...], b_ref[...],
                            preferred_element_type=jnp.float32)

    @pl.when(pl.program_id(2) == pl.num_programs(2) - 1)
    def _():
        o_ref[...] = acc_ref[...].astype(o_ref.dtype)


def pallas_matmul(a, b):
    """(M, K) @ (K, N) -> (M, N) f32.  Operands cast to bf16 (MXU rate),
    f32 accumulation.  Pads to tile multiples only when needed."""
    M, K = a.shape
    K2, N = b.shape
    assert K == K2
    a = a.astype(jnp.bfloat16)
    b = b.astype(jnp.bfloat16)

    Kp = _round_up(K, 128)
    if Kp % 512 == 0:
        tk = 512
    elif Kp % 256 == 0:
        tk = 256
    else:
        tk = 128
    Np = _round_up(N, 128)
    tn = 256 if Np % 256 == 0 else 128

    if M >= 1024:
        tm = 512
    elif M >= 512:
        tm = 256            # keeps >=2 M blocks for megacore sharding
    else:
        tm = _round_up(min(M, 256), 16)
    Mp = _round_up(M, tm)

    if (Mp, Kp) != (M, K):
        a = jnp.pad(a, ((0, Mp - M), (0, Kp - K)))
    if (Kp, Np) != (K, N):
        b = jnp.pad(b, ((0, Kp - K), (0, Np - N)))

    # double-buffered bf16 inputs + double-buffered f32 output + f32 acc
    vmem_bytes = 2 * (tm * tk + tk * tn) * 2 + 3 * tm * tn * 4
    vmem_limit = int(min(max(4 * vmem_bytes, 32 << 20), 64 << 20))

    out = pl.pallas_call(
        _matmul_kernel,
        out_shape=jax.ShapeDtypeStruct((Mp, Np), jnp.float32),
        grid_spec=pltpu.PrefetchScalarGridSpec(
            num_scalar_prefetch=0,
            grid=(Mp // tm, Np // tn, Kp // tk),
            in_specs=[pl.BlockSpec((tm, tk), lambda i, j, k: (i, k)),
                      pl.BlockSpec((tk, tn), lambda i, j, k: (k, j))],
            out_specs=pl.BlockSpec((tm, tn), lambda i, j, k: (i, j)),
            scratch_shapes=[pltpu.VMEM((tm, tn), jnp.float32)]),
        compiler_params=pltpu.CompilerParams(
            dimension_semantics=("parallel", "parallel", "arbitrary"),
            vmem_limit_bytes=vmem_limit),
    )(a, b)
    if (Mp, Np) != (M, N):
        out = out[:M, :N]
    return out


# ---------------- tiled BatchNorm: stats pass + apply pass ----------------
def _choose_row_tile(Mp, C):
    cap = max(8, (4 << 20) // (C * 4))     # keep each block <= ~4 MiB
    for t in (1024, 512, 256, 128, 64, 32, 16, 8):
        if t <= cap and Mp % t == 0:
            return t
    return 8


def _bn_stats_kernel(x_ref, o_ref):
    @pl.when(pl.program_id(0) == 0)
    def _():
        o_ref[...] = jnp.zeros_like(o_ref)
    x = x_ref[...]
    s = jnp.sum(x, axis=0, keepdims=True)        # (1, C)
    sq = jnp.sum(x * x, axis=0, keepdims=True)   # (1, C)
    o_ref[...] += jnp.concatenate([s, sq], axis=0)


def pallas_bn_stats(x2d):
    """Per-channel batch mean / biased variance of a (M, C) activation."""
    M, C = x2d.shape
    Mp = _round_up(M, 8)
    if Mp != M:
        x2d = jnp.pad(x2d, ((0, Mp - M), (0, 0)))   # zero rows: no effect on sums
    tm = _choose_row_tile(Mp, C)
    sums = pl.pallas_call(
        _bn_stats_kernel,
        out_shape=jax.ShapeDtypeStruct((2, C), jnp.float32),
        grid_spec=pltpu.PrefetchScalarGridSpec(
            num_scalar_prefetch=0, grid=(Mp // tm,),
            in_specs=[pl.BlockSpec((tm, C), lambda i: (i, 0))],
            out_specs=pl.BlockSpec((2, C), lambda i: (0, 0))),
        compiler_params=pltpu.CompilerParams(
            dimension_semantics=("arbitrary",)),
    )(x2d)
    mean = sums[0] / M
    var = jnp.maximum(sums[1] / M - mean * mean, 0.0)
    return mean, var


def _bn_scale_shift(gamma, beta, mean, var):
    scale = gamma * lax.rsqrt(var + BN_EPS)
    shift = beta - mean * scale
    return scale, shift


def _bn_apply_kernel(x_ref, s_ref, b_ref, o_ref, *, relu):
    y = x_ref[...] * s_ref[...] + b_ref[...]
    if relu:
        y = jnp.maximum(y, 0.0)
    o_ref[...] = y


def _bn_add_relu_kernel(x_ref, s1_ref, b1_ref, r_ref, s2_ref, b2_ref, o_ref):
    y = x_ref[...] * s1_ref[...] + b1_ref[...]
    y = y + r_ref[...] * s2_ref[...] + b2_ref[...]
    o_ref[...] = jnp.maximum(y, 0.0)


def pallas_bn_apply(x2d, scale, shift, *, relu):
    M, C = x2d.shape
    Mp = _round_up(M, 8)
    if Mp != M:
        x2d = jnp.pad(x2d, ((0, Mp - M), (0, 0)))
    tm = _choose_row_tile(Mp, C)
    row = pl.BlockSpec((tm, C), lambda i: (i, 0))
    chan = pl.BlockSpec((1, C), lambda i: (0, 0))
    out = pl.pallas_call(
        functools.partial(_bn_apply_kernel, relu=relu),
        out_shape=jax.ShapeDtypeStruct((Mp, C), jnp.float32),
        grid_spec=pltpu.PrefetchScalarGridSpec(
            num_scalar_prefetch=0, grid=(Mp // tm,),
            in_specs=[row, chan, chan],
            out_specs=row),
        compiler_params=pltpu.CompilerParams(
            dimension_semantics=("parallel",)),
    )(x2d, scale.reshape(1, C), shift.reshape(1, C))
    return out[:M] if Mp != M else out


def pallas_bn_add_relu(x2d, s1, b1, r2d, s2, b2):
    """relu(x*s1 + b1 + r*s2 + b2): fuses bn3, optional downsample-BN,
    residual add and the final ReLU into one elementwise pass."""
    M, C = x2d.shape
    Mp = _round_up(M, 8)
    if Mp != M:
        x2d = jnp.pad(x2d, ((0, Mp - M), (0, 0)))
        r2d = jnp.pad(r2d, ((0, Mp - M), (0, 0)))
    tm = _choose_row_tile(Mp, C)
    row = pl.BlockSpec((tm, C), lambda i: (i, 0))
    chan = pl.BlockSpec((1, C), lambda i: (0, 0))
    out = pl.pallas_call(
        _bn_add_relu_kernel,
        out_shape=jax.ShapeDtypeStruct((Mp, C), jnp.float32),
        grid_spec=pltpu.PrefetchScalarGridSpec(
            num_scalar_prefetch=0, grid=(Mp // tm,),
            in_specs=[row, chan, chan, row, chan, chan],
            out_specs=row),
        compiler_params=pltpu.CompilerParams(
            dimension_semantics=("parallel",)),
    )(x2d, s1.reshape(1, C), b1.reshape(1, C),
      r2d.astype(jnp.float32), s2.reshape(1, C), b2.reshape(1, C))
    return out[:M] if Mp != M else out


# --------------------------- 3x3 im2col (bf16) ----------------------------
def _im2col_3x3(x, stride):
    """x: (N, H, W, C) -> patches (N*Ho*Wo, 9*C) in x.dtype, plus (N, Ho, Wo)."""
    N, H, W, C = x.shape
    Ho = (H + 2 - 3) // stride + 1
    Wo = (W + 2 - 3) // stride + 1
    xp = jnp.pad(x, ((0, 0), (1, 1), (1, 1), (0, 0)))
    cols = [xp[:, i:i + stride * (Ho - 1) + 1:stride,
               j:j + stride * (Wo - 1) + 1:stride, :]
            for i in range(3) for j in range(3)]
    patches = jnp.concatenate(cols, axis=-1).reshape(N * Ho * Wo, 9 * C)
    return patches, (N, Ho, Wo)


# ------------------------------ Bottleneck --------------------------------
def bottleneck_forward(x_nchw, params, *, stride):
    """Forward pass of the ResNet Bottleneck block (train-mode BatchNorm)."""
    x = jnp.transpose(x_nchw, (0, 2, 3, 1)).astype(jnp.float32)   # NCHW->NHWC
    N, H, W, Cin = x.shape

    # conv1: 1x1 -> BN -> ReLU   (1x1 conv == plain matmul, no im2col)
    w1 = params['conv1_w']
    width = w1.shape[-1]
    out = pallas_matmul(x.reshape(N * H * W, Cin), w1.reshape(Cin, width))
    mean, var = pallas_bn_stats(out)
    s, b = _bn_scale_shift(params['bn1_g'], params['bn1_b'], mean, var)
    out = pallas_bn_apply(out, s, b, relu=True)

    # conv2: 3x3 stride s pad 1 -> BN -> ReLU   (im2col built directly in bf16)
    patches, (_, Ho, Wo) = _im2col_3x3(
        out.reshape(N, H, W, width).astype(jnp.bfloat16), stride)
    out = pallas_matmul(patches, params['conv2_w'].reshape(9 * width, width))
    mean, var = pallas_bn_stats(out)
    s, b = _bn_scale_shift(params['bn2_g'], params['bn2_b'], mean, var)
    out = pallas_bn_apply(out, s, b, relu=True)

    # conv3: 1x1 (its BN is fused into the final add/ReLU kernel)
    w3 = params['conv3_w']
    cout = w3.shape[-1]
    out = pallas_matmul(out, w3.reshape(width, cout))
    mean3, var3 = pallas_bn_stats(out)
    s3, b3 = _bn_scale_shift(params['bn3_g'], params['bn3_b'], mean3, var3)

    # identity / downsample (1x1 stride-s conv == subsample + matmul; its BN
    # is folded into the fused add kernel as a second scale/shift pair)
    if 'down_w' in params:
        xs = x[:, ::stride, ::stride, :]
        idn = pallas_matmul(xs.reshape(N * Ho * Wo, Cin),
                            params['down_w'].reshape(Cin, cout))
        mean_d, var_d = pallas_bn_stats(idn)
        s_d, b_d = _bn_scale_shift(params['down_g'], params['down_b'],
                                   mean_d, var_d)
    else:
        idn = x.reshape(N * H * W, Cin)
        s_d = jnp.ones((cout,), jnp.float32)
        b_d = jnp.zeros((cout,), jnp.float32)

    out = pallas_bn_add_relu(out, s3, b3, idn, s_d, b_d)
    out = out.reshape(N, Ho, Wo, cout)
    return jnp.transpose(out, (0, 3, 1, 2))                       # NHWC->NCHW


# --------------------------- parameter init --------------------------------
def init_bottleneck_params(key, inplanes, planes, stride,
                           base_width=64, groups=1):
    expansion = 4
    width = int(planes * (base_width / 64.0)) * groups
    keys = iter(jax.random.split(key, 12))

    def conv_w(kh, kw, cin, cout):
        std = (2.0 / (cout * kh * kw)) ** 0.5   # kaiming_normal_, fan_out, relu
        return std * jax.random.normal(next(keys), (kh, kw, cin, cout),
                                       jnp.float32)

    def bn(c):
        k = next(keys)
        g = 1.0 + 0.1 * jax.random.normal(k, (c,), jnp.float32)
        be = 0.1 * jax.random.normal(jax.random.fold_in(k, 1), (c,), jnp.float32)
        return g, be

    p = {'conv1_w': conv_w(1, 1, inplanes, width)}
    p['bn1_g'], p['bn1_b'] = bn(width)
    p['conv2_w'] = conv_w(3, 3, width, width)
    p['bn2_g'], p['bn2_b'] = bn(width)
    p['conv3_w'] = conv_w(1, 1, width, planes * expansion)
    p['bn3_g'], p['bn3_b'] = bn(planes * expansion)
    if stride != 1 or inplanes != planes * expansion:
        p['down_w'] = conv_w(1, 1, inplanes, planes * expansion)
        p['down_g'], p['down_b'] = bn(planes * expansion)
    return p


# --------------------------- pure-JAX reference -----------------------------
def bottleneck_ref(x_nhwc, params, stride):
    def conv(x, w, s, pad):
        return lax.conv_general_dilated(
            x.astype(jnp.bfloat16), w.astype(jnp.bfloat16),
            window_strides=(s, s), padding=[(pad, pad), (pad, pad)],
            dimension_numbers=('NHWC', 'HWIO', 'NHWC'),
            preferred_element_type=jnp.float32)

    def bn(x, g, b, relu):
        mean = jnp.mean(x, axis=(0, 1, 2))
        var = jnp.mean(jnp.square(x - mean), axis=(0, 1, 2))
        y = (x - mean) * lax.rsqrt(var + BN_EPS) * g + b
        return jnp.maximum(y, 0.0) if relu else y

    out = bn(conv(x_nhwc, params['conv1_w'], 1, 0),
             params['bn1_g'], params['bn1_b'], True)
    out = bn(conv(out, params['conv2_w'], stride, 1),
             params['bn2_g'], params['bn2_b'], True)
    out = bn(conv(out, params['conv3_w'], 1, 0),
             params['bn3_g'], params['bn3_b'], False)
    if 'down_w' in params:
        idn = bn(conv(x_nhwc, params['down_w'], stride, 0),
                 params['down_g'], params['down_b'], False)
    else:
        idn = x_nhwc
    return jnp.maximum(out + idn, 0.0)


# --------------------------------- main -------------------------------------
if __name__ == "__main__":
    root = jax.random.PRNGKey(0)
    fwd = jax.jit(bottleneck_forward, static_argnames=('stride',))

    configs = [
        # (inplanes, planes, stride, H, W): first exercises the downsample path
        (64, 32, 2, 16, 16),
        (128, 32, 1, 8, 8),
    ]
    for idx, (inplanes, planes, stride, H, W) in enumerate(configs):
        kp, kx = jax.random.split(jax.random.fold_in(root, idx))
        params = init_bottleneck_params(kp, inplanes, planes, stride)
        x = jax.random.normal(kx, (2, inplanes, H, W), jnp.float32)  # NCHW

        out = fwd(x, params, stride=stride)
        jax.block_until_ready(out)

        Ho, Wo = H // stride, W // stride
        assert out.shape == (2, planes * 4, Ho, Wo), out.shape
        assert out.dtype == jnp.float32
        assert bool(jnp.all(jnp.isfinite(out)))

        ref = bottleneck_ref(jnp.transpose(x, (0, 2, 3, 1)), params, stride)
        ref = jnp.transpose(ref, (0, 3, 1, 2))
        err = float(jnp.max(jnp.abs(out - ref)))
        assert err < 5e-2, f"config {idx}: max abs err {err}"

    print("KERNEL_OK")
</pallas_src>

<mosaic_0001>
module attributes {stable_mosaic.version = 11 : i64} {
  func.func @_matmul_kernel(%arg0: i32, %arg1: i32, %arg2: i32, %arg3: memref<256x128xbf16, #tpu.memory_space<vmem>>, %arg4: memref<128x128xbf16, #tpu.memory_space<vmem>>, %arg5: memref<256x128xf32, #tpu.memory_space<vmem>>, %arg6: memref<256x128xf32, #tpu.memory_space<vmem>>) attributes {dimension_semantics = [#tpu.dimension_semantics<parallel>, #tpu.dimension_semantics<parallel>, #tpu.dimension_semantics<arbitrary>], iteration_bounds = array<i64: 2, 1, 1>, scalar_prefetch = 0 : i64, scratch_operands = 1 : i64, tpu.core_type = #tpu.core_type<tc>, window_params = [{transform_indices = @transform_0, window_bounds = array<i64: 256, 128>}, {transform_indices = @transform_1, window_bounds = array<i64: 128, 128>}, {transform_indices = @transform_2, window_bounds = array<i64: 256, 128>}]} {
    %c0_i32 = arith.constant 0 : i32
    %0 = arith.cmpi eq, %arg2, %c0_i32 : i32
    %1 = arith.extui %0 : i1 to i32
    %c0_i32_0 = arith.constant 0 : i32
    %2 = arith.cmpi ne, %1, %c0_i32_0 : i32
    scf.if %2 {
      %cst_10 = arith.constant 0.000000e+00 : f32
      %12 = vector.broadcast %cst_10 : f32 to vector<256x128xf32>
      %c0_11 = arith.constant 0 : index
      %c0_12 = arith.constant 0 : index
      %13 = vector.load %arg6[%c0_11, %c0_12] : memref<256x128xf32, #tpu.memory_space<vmem>>, vector<256x128xf32>
      tpu.vector_store %arg6[%c0_11, %c0_12], %12 {strides = array<i32>} : memref<256x128xf32, #tpu.memory_space<vmem>>, vector<256x128xf32>,
    } else {
    }
    %c0 = arith.constant 0 : index
    %c0_1 = arith.constant 0 : index
    %3 = vector.load %arg6[%c0, %c0_1] : memref<256x128xf32, #tpu.memory_space<vmem>>, vector<256x128xf32>
    %c0_2 = arith.constant 0 : index
    %c0_3 = arith.constant 0 : index
    %4 = vector.load %arg3[%c0_2, %c0_3] : memref<256x128xbf16, #tpu.memory_space<vmem>>, vector<256x128xbf16>
    %c0_4 = arith.constant 0 : index
    %c0_5 = arith.constant 0 : index
    %5 = vector.load %arg4[%c0_4, %c0_5] : memref<128x128xbf16, #tpu.memory_space<vmem>>, vector<128x128xbf16>
    %cst = arith.constant dense<0.000000e+00> : vector<256x128xf32>
    %6 = tpu.matmul %4, %5, %cst {dimension_numbers = #tpu.dot_dimension_numbers<[1], [0], [0], [1], [0, 0, 1, 1], [], []>} : vector<256x128xbf16>, vector<128x128xbf16>, vector<256x128xf32> -> vector<256x128xf32>
    %7 = arith.addf %3, %6 : vector<256x128xf32>
    %c0_6 = arith.constant 0 : index
    %c0_7 = arith.constant 0 : index
    %8 = vector.load %arg6[%c0_6, %c0_7] : memref<256x128xf32, #tpu.memory_space<vmem>>, vector<256x128xf32>
    tpu.vector_store %arg6[%c0_6, %c0_7], %7 {strides = array<i32>} : memref<256x128xf32, #tpu.memory_space<vmem>>, vector<256x128xf32>,
    %c0_i32_8 = arith.constant 0 : i32
    %9 = arith.cmpi eq, %arg2, %c0_i32_8 : i32
    %10 = arith.extui %9 : i1 to i32
    %c0_i32_9 = arith.constant 0 : i32
    %11 = arith.cmpi ne, %10, %c0_i32_9 : i32
    scf.if %11 {
      %c0_10 = arith.constant 0 : index
      %c0_11 = arith.constant 0 : index
      %12 = vector.load %arg6[%c0_10, %c0_11] : memref<256x128xf32, #tpu.memory_space<vmem>>, vector<256x128xf32>
      %c0_12 = arith.constant 0 : index
      %c0_13 = arith.constant 0 : index
      %13 = vector.load %arg5[%c0_12, %c0_13] : memref<256x128xf32, #tpu.memory_space<vmem>>, vector<256x128xf32>
      tpu.vector_store %arg5[%c0_12, %c0_13], %12 {strides = array<i32>} : memref<256x128xf32, #tpu.memory_space<vmem>>, vector<256x128xf32>,
    } else {
    }
    return
  }
  func.func @transform_0(%arg0: i32, %arg1: i32, %arg2: i32) -> (i32, i32) {
    %c0_i32 = arith.constant 0 : i32
    return %arg0, %arg2 : i32, i32
  }
  func.func @transform_1(%arg0: i32, %arg1: i32, %arg2: i32) -> (i32, i32) {
    %c0_i32 = arith.constant 0 : i32
    return %arg2, %arg1 : i32, i32
  }
  func.func @transform_2(%arg0: i32, %arg1: i32, %arg2: i32) -> (i32, i32) {
    %c0_i32 = arith.constant 0 : i32
    return %arg0, %arg1 : i32, i32
  }
}

module attributes {stable_mosaic.version = 11 : i64} {
  func.func @_bn_stats_kernel(%arg0: i32, %arg1: memref<512x32xf32, #tpu.memory_space<vmem>>, %arg2: memref<2x32xf32, #tpu.memory_space<vmem>>) attributes {dimension_semantics = [#tpu.dimension_semantics<arbitrary>], iteration_bounds = array<i64: 1>, scalar_prefetch = 0 : i64, scratch_operands = 0 : i64, tpu.core_type = #tpu.core_type<tc>, window_params = [{transform_indices = @transform_0, window_bounds = array<i64: 512, 32>}, {pipeline_mode = #tpu.pipeline_mode<synchronous>, transform_indices = @transform_1, window_bounds = array<i64: 2, 32>}]} {
    %c0_i32 = arith.constant 0 : i32
    %0 = arith.cmpi eq, %arg0, %c0_i32 : i32
    %1 = arith.extui %0 : i1 to i32
    %c0_i32_0 = arith.constant 0 : i32
    %2 = arith.cmpi ne, %1, %c0_i32_0 : i32
    scf.if %2 {
      %cst_7 = arith.constant 0.000000e+00 : f32
      %13 = vector.broadcast %cst_7 : f32 to vector<2x32xf32>
      %c0_8 = arith.constant 0 : index
      %c0_9 = arith.constant 0 : index
      %14 = vector.load %arg2[%c0_8, %c0_9] : memref<2x32xf32, #tpu.memory_space<vmem>>, vector<2x32xf32>
      tpu.vector_store %arg2[%c0_8, %c0_9], %13 {strides = array<i32>} : memref<2x32xf32, #tpu.memory_space<vmem>>, vector<2x32xf32>,
    } else {
    }
    %c0 = arith.constant 0 : index
    %c0_1 = arith.constant 0 : index
    %3 = vector.load %arg1[%c0, %c0_1] : memref<512x32xf32, #tpu.memory_space<vmem>>, vector<512x32xf32>
    %cst = arith.constant dense<0.000000e+00> : vector<32xf32>
    %4 = vector.multi_reduction <add>, %3, %cst [0] : vector<512x32xf32> to vector<32xf32>
    %5 = vector.shape_cast %4 : vector<32xf32> to vector<1x32xf32>
    %6 = arith.mulf %3, %3 : vector<512x32xf32>
    %cst_2 = arith.constant dense<0.000000e+00> : vector<32xf32>
    %7 = vector.multi_reduction <add>, %6, %cst_2 [0] : vector<512x32xf32> to vector<32xf32>
    %8 = vector.shape_cast %7 : vector<32xf32> to vector<1x32xf32>
    %c0_3 = arith.constant 0 : index
    %c0_4 = arith.constant 0 : index
    %9 = vector.load %arg2[%c0_3, %c0_4] : memref<2x32xf32, #tpu.memory_space<vmem>>, vector<2x32xf32>
    %10 = tpu.concatenate %5, %8 in 0 : vector<1x32xf32>, vector<1x32xf32> -> vector<2x32xf32>
    %11 = arith.addf %9, %10 : vector<2x32xf32>
    %c0_5 = arith.constant 0 : index
    %c0_6 = arith.constant 0 : index
    %12 = vector.load %arg2[%c0_5, %c0_6] : memref<2x32xf32, #tpu.memory_space<vmem>>, vector<2x32xf32>
    tpu.vector_store %arg2[%c0_5, %c0_6], %11 {strides = array<i32>} : memref<2x32xf32, #tpu.memory_space<vmem>>, vector<2x32xf32>,
    return
  }
  func.func @transform_0(%arg0: i32) -> (i32, i32) {
    %c0_i32 = arith.constant 0 : i32
    %c0_i32_0 = arith.constant 0 : i32
    return %arg0, %c0_i32 : i32, i32
  }
  func.func @transform_1(%arg0: i32) -> (i32, i32) {
    %c0_i32 = arith.constant 0 : i32
    %c0_i32_0 = arith.constant 0 : i32
    %c0_i32_1 = arith.constant 0 : i32
    return %c0_i32, %c0_i32_0 : i32, i32
  }
}

module attributes {stable_mosaic.version = 11 : i64} {
  func.func @_bn_apply_kernel(%arg0: i32, %arg1: memref<512x32xf32, #tpu.memory_space<vmem>>, %arg2: memref<1x32xf32, #tpu.memory_space<vmem>>, %arg3: memref<1x32xf32, #tpu.memory_space<vmem>>, %arg4: memref<512x32xf32, #tpu.memory_space<vmem>>) attributes {dimension_semantics = [#tpu.dimension_semantics<parallel>], iteration_bounds = array<i64: 1>, scalar_prefetch = 0 : i64, scratch_operands = 0 : i64, tpu.core_type = #tpu.core_type<tc>, window_params = [{transform_indices = @transform_0, window_bounds = array<i64: 512, 32>}, {pipeline_mode = #tpu.pipeline_mode<synchronous>, transform_indices = @transform_1, window_bounds = array<i64: 1, 32>}, {pipeline_mode = #tpu.pipeline_mode<synchronous>, transform_indices = @transform_2, window_bounds = array<i64: 1, 32>}, {transform_indices = @transform_3, window_bounds = array<i64: 512, 32>}]} {
    %c0 = arith.constant 0 : index
    %c0_0 = arith.constant 0 : index
    %0 = vector.load %arg1[%c0, %c0_0] : memref<512x32xf32, #tpu.memory_space<vmem>>, vector<512x32xf32>
    %c0_1 = arith.constant 0 : index
    %c0_2 = arith.constant 0 : index
    %1 = vector.load %arg2[%c0_1, %c0_2] : memref<1x32xf32, #tpu.memory_space<vmem>>, vector<1x32xf32>
    %2 = vector.broadcast %1 : vector<1x32xf32> to vector<512x32xf32>
    %3 = arith.mulf %0, %2 : vector<512x32xf32>
    %c0_3 = arith.constant 0 : index
    %c0_4 = arith.constant 0 : index
    %4 = vector.load %arg3[%c0_3, %c0_4] : memref<1x32xf32, #tpu.memory_space<vmem>>, vector<1x32xf32>
    %5 = vector.broadcast %4 : vector<1x32xf32> to vector<512x32xf32>
    %6 = arith.addf %3, %5 : vector<512x32xf32>
    %cst = arith.constant 0.000000e+00 : f32
    %7 = vector.broadcast %cst : f32 to vector<512x32xf32>
    %8 = arith.maximumf %6, %7 : vector<512x32xf32>
    %c0_5 = arith.constant 0 : index
    %c0_6 = arith.constant 0 : index
    %9 = vector.load %arg4[%c0_5, %c0_6] : memref<512x32xf32, #tpu.memory_space<vmem>>, vector<512x32xf32>
    tpu.vector_store %arg4[%c0_5, %c0_6], %8 {strides = array<i32>} : memref<512x32xf32, #tpu.memory_space<vmem>>, vector<512x32xf32>,
    return
  }
  func.func @transform_0(%arg0: i32) -> (i32, i32) {
    %c0_i32 = arith.constant 0 : i32
    %c0_i32_0 = arith.constant 0 : i32
    return %arg0, %c0_i32 : i32, i32
  }
  func.func @transform_1(%arg0: i32) -> (i32, i32) {
    %c0_i32 = arith.constant 0 : i32
    %c0_i32_0 = arith.constant 0 : i32
    %c0_i32_1 = arith.constant 0 : i32
    return %c0_i32, %c0_i32_0 : i32, i32
  }
  func.func @transform_2(%arg0: i32) -> (i32, i32) {
    %c0_i32 = arith.constant 0 : i32
    %c0_i32_0 = arith.constant 0 : i32
    %c0_i32_1 = arith.constant 0 : i32
    return %c0_i32, %c0_i32_0 : i32, i32
  }
  func.func @transform_3(%arg0: i32) -> (i32, i32) {
    %c0_i32 = arith.constant 0 : i32
    %c0_i32_0 = arith.constant 0 : i32
    return %arg0, %c0_i32 : i32, i32
  }
}

module attributes {stable_mosaic.version = 11 : i64} {
  func.func @_matmul_kernel(%arg0: i32, %arg1: i32, %arg2: i32, %arg3: memref<128x128xbf16, #tpu.memory_space<vmem>>, %arg4: memref<128x128xbf16, #tpu.memory_space<vmem>>, %arg5: memref<128x128xf32, #tpu.memory_space<vmem>>, %arg6: memref<128x128xf32, #tpu.memory_space<vmem>>) attributes {dimension_semantics = [#tpu.dimension_semantics<parallel>, #tpu.dimension_semantics<parallel>, #tpu.dimension_semantics<arbitrary>], iteration_bounds = array<i64: 1, 1, 3>, scalar_prefetch = 0 : i64, scratch_operands = 1 : i64, tpu.core_type = #tpu.core_type<tc>, window_params = [{transform_indices = @transform_0, window_bounds = array<i64: 128, 128>}, {transform_indices = @transform_1, window_bounds = array<i64: 128, 128>}, {transform_indices = @transform_2, window_bounds = array<i64: 128, 128>}]} {
    %c0_i32 = arith.constant 0 : i32
    %0 = arith.cmpi eq, %arg2, %c0_i32 : i32
    %1 = arith.extui %0 : i1 to i32
    %c0_i32_0 = arith.constant 0 : i32
    %2 = arith.cmpi ne, %1, %c0_i32_0 : i32
    scf.if %2 {
      %cst_9 = arith.constant 0.000000e+00 : f32
      %12 = vector.broadcast %cst_9 : f32 to vector<128x128xf32>
      %c0_10 = arith.constant 0 : index
      %c0_11 = arith.constant 0 : index
      %13 = vector.load %arg6[%c0_10, %c0_11] : memref<128x128xf32, #tpu.memory_space<vmem>>, vector<128x128xf32>
      tpu.vector_store %arg6[%c0_10, %c0_11], %12 {strides = array<i32>} : memref<128x128xf32, #tpu.memory_space<vmem>>, vector<128x128xf32>,
    } else {
    }
    %c0 = arith.constant 0 : index
    %c0_1 = arith.constant 0 : index
    %3 = vector.load %arg6[%c0, %c0_1] : memref<128x128xf32, #tpu.memory_space<vmem>>, vector<128x128xf32>
    %c0_2 = arith.constant 0 : index
    %c0_3 = arith.constant 0 : index
    %4 = vector.load %arg3[%c0_2, %c0_3] : memref<128x128xbf16, #tpu.memory_space<vmem>>, vector<128x128xbf16>
    %c0_4 = arith.constant 0 : index
    %c0_5 = arith.constant 0 : index
    %5 = vector.load %arg4[%c0_4, %c0_5] : memref<128x128xbf16, #tpu.memory_space<vmem>>, vector<128x128xbf16>
    %cst = arith.constant dense<0.000000e+00> : vector<128x128xf32>
    %6 = tpu.matmul %4, %5, %cst {dimension_numbers = #tpu.dot_dimension_numbers<[1], [0], [0], [1], [0, 0, 1, 1], [], []>} : vector<128x128xbf16>, vector<128x128xbf16>, vector<128x128xf32> -> vector<128x128xf32>
    %7 = arith.addf %3, %6 : vector<128x128xf32>
    %c0_6 = arith.constant 0 : index
    %c0_7 = arith.constant 0 : index
    %8 = vector.load %arg6[%c0_6, %c0_7] : memref<128x128xf32, #tpu.memory_space<vmem>>, vector<128x128xf32>
    tpu.vector_store %arg6[%c0_6, %c0_7], %7 {strides = array<i32>} : memref<128x128xf32, #tpu.memory_space<vmem>>, vector<128x128xf32>,
    %c2_i32 = arith.constant 2 : i32
    %9 = arith.cmpi eq, %arg2, %c2_i32 : i32
    %10 = arith.extui %9 : i1 to i32
    %c0_i32_8 = arith.constant 0 : i32
    %11 = arith.cmpi ne, %10, %c0_i32_8 : i32
    scf.if %11 {
      %c0_9 = arith.constant 0 : index
      %c0_10 = arith.constant 0 : index
      %12 = vector.load %arg6[%c0_9, %c0_10] : memref<128x128xf32, #tpu.memory_space<vmem>>, vector<128x128xf32>
      %c0_11 = arith.constant 0 : index
      %c0_12 = arith.constant 0 : index
      %13 = vector.load %arg5[%c0_11, %c0_12] : memref<128x128xf32, #tpu.memory_space<vmem>>, vector<128x128xf32>
      tpu.vector_store %arg5[%c0_11, %c0_12], %12 {strides = array<i32>} : memref<128x128xf32, #tpu.memory_space<vmem>>, vector<128x128xf32>,
    } else {
    }
    return
  }
  func.func @transform_0(%arg0: i32, %arg1: i32, %arg2: i32) -> (i32, i32) {
    %c0_i32 = arith.constant 0 : i32
    return %arg0, %arg2 : i32, i32
  }
  func.func @transform_1(%arg0: i32, %arg1: i32, %arg2: i32) -> (i32, i32) {
    %c0_i32 = arith.constant 0 : i32
    return %arg2, %arg1 : i32, i32
  }
  func.func @transform_2(%arg0: i32, %arg1: i32, %arg2: i32) -> (i32, i32) {
    %c0_i32 = arith.constant 0 : i32
    return %arg0, %arg1 : i32, i32
  }
}

module attributes {stable_mosaic.version = 11 : i64} {
  func.func @_bn_stats_kernel(%arg0: i32, %arg1: memref<128x32xf32, #tpu.memory_space<vmem>>, %arg2: memref<2x32xf32, #tpu.memory_space<vmem>>) attributes {dimension_semantics = [#tpu.dimension_semantics<arbitrary>], iteration_bounds = array<i64: 1>, scalar_prefetch = 0 : i64, scratch_operands = 0 : i64, tpu.core_type = #tpu.core_type<tc>, window_params = [{transform_indices = @transform_0, window_bounds = array<i64: 128, 32>}, {pipeline_mode = #tpu.pipeline_mode<synchronous>, transform_indices = @transform_1, window_bounds = array<i64: 2, 32>}]} {
    %c0_i32 = arith.constant 0 : i32
    %0 = arith.cmpi eq, %arg0, %c0_i32 : i32
    %1 = arith.extui %0 : i1 to i32
    %c0_i32_0 = arith.constant 0 : i32
    %2 = arith.cmpi ne, %1, %c0_i32_0 : i32
    scf.if %2 {
      %cst_7 = arith.constant 0.000000e+00 : f32
      %13 = vector.broadcast %cst_7 : f32 to vector<2x32xf32>
      %c0_8 = arith.constant 0 : index
      %c0_9 = arith.constant 0 : index
      %14 = vector.load %arg2[%c0_8, %c0_9] : memref<2x32xf32, #tpu.memory_space<vmem>>, vector<2x32xf32>
      tpu.vector_store %arg2[%c0_8, %c0_9], %13 {strides = array<i32>} : memref<2x32xf32, #tpu.memory_space<vmem>>, vector<2x32xf32>,
    } else {
    }
    %c0 = arith.constant 0 : index
    %c0_1 = arith.constant 0 : index
    %3 = vector.load %arg1[%c0, %c0_1] : memref<128x32xf32, #tpu.memory_space<vmem>>, vector<128x32xf32>
    %cst = arith.constant dense<0.000000e+00> : vector<32xf32>
    %4 = vector.multi_reduction <add>, %3, %cst [0] : vector<128x32xf32> to vector<32xf32>
    %5 = vector.shape_cast %4 : vector<32xf32> to vector<1x32xf32>
    %6 = arith.mulf %3, %3 : vector<128x32xf32>
    %cst_2 = arith.constant dense<0.000000e+00> : vector<32xf32>
    %7 = vector.multi_reduction <add>, %6, %cst_2 [0] : vector<128x32xf32> to vector<32xf32>
    %8 = vector.shape_cast %7 : vector<32xf32> to vector<1x32xf32>
    %c0_3 = arith.constant 0 : index
    %c0_4 = arith.constant 0 : index
    %9 = vector.load %arg2[%c0_3, %c0_4] : memref<2x32xf32, #tpu.memory_space<vmem>>, vector<2x32xf32>
    %10 = tpu.concatenate %5, %8 in 0 : vector<1x32xf32>, vector<1x32xf32> -> vector<2x32xf32>
    %11 = arith.addf %9, %10 : vector<2x32xf32>
    %c0_5 = arith.constant 0 : index
    %c0_6 = arith.constant 0 : index
    %12 = vector.load %arg2[%c0_5, %c0_6] : memref<2x32xf32, #tpu.memory_space<vmem>>, vector<2x32xf32>
    tpu.vector_store %arg2[%c0_5, %c0_6], %11 {strides = array<i32>} : memref<2x32xf32, #tpu.memory_space<vmem>>, vector<2x32xf32>,
    return
  }
  func.func @transform_0(%arg0: i32) -> (i32, i32) {
    %c0_i32 = arith.constant 0 : i32
    %c0_i32_0 = arith.constant 0 : i32
    return %arg0, %c0_i32 : i32, i32
  }
  func.func @transform_1(%arg0: i32) -> (i32, i32) {
    %c0_i32 = arith.constant 0 : i32
    %c0_i32_0 = arith.constant 0 : i32
    %c0_i32_1 = arith.constant 0 : i32
    return %c0_i32, %c0_i32_0 : i32, i32
  }
}

module attributes {stable_mosaic.version = 11 : i64} {
  func.func @_bn_apply_kernel(%arg0: i32, %arg1: memref<128x32xf32, #tpu.memory_space<vmem>>, %arg2: memref<1x32xf32, #tpu.memory_space<vmem>>, %arg3: memref<1x32xf32, #tpu.memory_space<vmem>>, %arg4: memref<128x32xf32, #tpu.memory_space<vmem>>) attributes {dimension_semantics = [#tpu.dimension_semantics<parallel>], iteration_bounds = array<i64: 1>, scalar_prefetch = 0 : i64, scratch_operands = 0 : i64, tpu.core_type = #tpu.core_type<tc>, window_params = [{transform_indices = @transform_0, window_bounds = array<i64: 128, 32>}, {pipeline_mode = #tpu.pipeline_mode<synchronous>, transform_indices = @transform_1, window_bounds = array<i64: 1, 32>}, {pipeline_mode = #tpu.pipeline_mode<synchronous>, transform_indices = @transform_2, window_bounds = array<i64: 1, 32>}, {transform_indices = @transform_3, window_bounds = array<i64: 128, 32>}]} {
    %c0 = arith.constant 0 : index
    %c0_0 = arith.constant 0 : index
    %0 = vector.load %arg1[%c0, %c0_0] : memref<128x32xf32, #tpu.memory_space<vmem>>, vector<128x32xf32>
    %c0_1 = arith.constant 0 : index
    %c0_2 = arith.constant 0 : index
    %1 = vector.load %arg2[%c0_1, %c0_2] : memref<1x32xf32, #tpu.memory_space<vmem>>, vector<1x32xf32>
    %2 = vector.broadcast %1 : vector<1x32xf32> to vector<128x32xf32>
    %3 = arith.mulf %0, %2 : vector<128x32xf32>
    %c0_3 = arith.constant 0 : index
    %c0_4 = arith.constant 0 : index
    %4 = vector.load %arg3[%c0_3, %c0_4] : memref<1x32xf32, #tpu.memory_space<vmem>>, vector<1x32xf32>
    %5 = vector.broadcast %4 : vector<1x32xf32> to vector<128x32xf32>
    %6 = arith.addf %3, %5 : vector<128x32xf32>
    %cst = arith.constant 0.000000e+00 : f32
    %7 = vector.broadcast %cst : f32 to vector<128x32xf32>
    %8 = arith.maximumf %6, %7 : vector<128x32xf32>
    %c0_5 = arith.constant 0 : index
    %c0_6 = arith.constant 0 : index
    %9 = vector.load %arg4[%c0_5, %c0_6] : memref<128x32xf32, #tpu.memory_space<vmem>>, vector<128x32xf32>
    tpu.vector_store %arg4[%c0_5, %c0_6], %8 {strides = array<i32>} : memref<128x32xf32, #tpu.memory_space<vmem>>, vector<128x32xf32>,
    return
  }
  func.func @transform_0(%arg0: i32) -> (i32, i32) {
    %c0_i32 = arith.constant 0 : i32
    %c0_i32_0 = arith.constant 0 : i32
    return %arg0, %c0_i32 : i32, i32
  }
  func.func @transform_1(%arg0: i32) -> (i32, i32) {
    %c0_i32 = arith.constant 0 : i32
    %c0_i32_0 = arith.constant 0 : i32
    %c0_i32_1 = arith.constant 0 : i32
    return %c0_i32, %c0_i32_0 : i32, i32
  }
  func.func @transform_2(%arg0: i32) -> (i32, i32) {
    %c0_i32 = arith.constant 0 : i32
    %c0_i32_0 = arith.constant 0 : i32
    %c0_i32_1 = arith.constant 0 : i32
    return %c0_i32, %c0_i32_0 : i32, i32
  }
  func.func @transform_3(%arg0: i32) -> (i32, i32) {
    %c0_i32 = arith.constant 0 : i32
    %c0_i32_0 = arith.constant 0 : i32
    return %arg0, %c0_i32 : i32, i32
  }
}

module attributes {stable_mosaic.version = 11 : i64} {
  func.func @_matmul_kernel(%arg0: i32, %arg1: i32, %arg2: i32, %arg3: memref<128x128xbf16, #tpu.memory_space<vmem>>, %arg4: memref<128x128xbf16, #tpu.memory_space<vmem>>, %arg5: memref<128x128xf32, #tpu.memory_space<vmem>>, %arg6: memref<128x128xf32, #tpu.memory_space<vmem>>) attributes {dimension_semantics = [#tpu.dimension_semantics<parallel>, #tpu.dimension_semantics<parallel>, #tpu.dimension_semantics<arbitrary>], iteration_bounds = array<i64: 1, 1, 1>, scalar_prefetch = 0 : i64, scratch_operands = 1 : i64, tpu.core_type = #tpu.core_type<tc>, window_params = [{transform_indices = @transform_0, window_bounds = array<i64: 128, 128>}, {transform_indices = @transform_1, window_bounds = array<i64: 128, 128>}, {transform_indices = @transform_2, window_bounds = array<i64: 128, 128>}]} {
    %c0_i32 = arith.constant 0 : i32
    %0 = arith.cmpi eq, %arg2, %c0_i32 : i32
    %1 = arith.extui %0 : i1 to i32
    %c0_i32_0 = arith.constant 0 : i32
    %2 = arith.cmpi ne, %1, %c0_i32_0 : i32
    scf.if %2 {
      %cst_10 = arith.constant 0.000000e+00 : f32
      %12 = vector.broadcast %cst_10 : f32 to vector<128x128xf32>
      %c0_11 = arith.constant 0 : index
      %c0_12 = arith.constant 0 : index
      %13 = vector.load %arg6[%c0_11, %c0_12] : memref<128x128xf32, #tpu.memory_space<vmem>>, vector<128x128xf32>
      tpu.vector_store %arg6[%c0_11, %c0_12], %12 {strides = array<i32>} : memref<128x128xf32, #tpu.memory_space<vmem>>, vector<128x128xf32>,
    } else {
    }
    %c0 = arith.constant 0 : index
    %c0_1 = arith.constant 0 : index
    %3 = vector.load %arg6[%c0, %c0_1] : memref<128x128xf32, #tpu.memory_space<vmem>>, vector<128x128xf32>
    %c0_2 = arith.constant 0 : index
    %c0_3 = arith.constant 0 : index
    %4 = vector.load %arg3[%c0_2, %c0_3] : memref<128x128xbf16, #tpu.memory_space<vmem>>, vector<128x128xbf16>
    %c0_4 = arith.constant 0 : index
    %c0_5 = arith.constant 0 : index
    %5 = vector.load %arg4[%c0_4, %c0_5] : memref<128x128xbf16, #tpu.memory_space<vmem>>, vector<128x128xbf16>
    %cst = arith.constant dense<0.000000e+00> : vector<128x128xf32>
    %6 = tpu.matmul %4, %5, %cst {dimension_numbers = #tpu.dot_dimension_numbers<[1], [0], [0], [1], [0, 0, 1, 1], [], []>} : vector<128x128xbf16>, vector<128x128xbf16>, vector<128x128xf32> -> vector<128x128xf32>
    %7 = arith.addf %3, %6 : vector<128x128xf32>
    %c0_6 = arith.constant 0 : index
    %c0_7 = arith.constant 0 : index
    %8 = vector.load %arg6[%c0_6, %c0_7] : memref<128x128xf32, #tpu.memory_space<vmem>>, vector<128x128xf32>
    tpu.vector_store %arg6[%c0_6, %c0_7], %7 {strides = array<i32>} : memref<128x128xf32, #tpu.memory_space<vmem>>, vector<128x128xf32>,
    %c0_i32_8 = arith.constant 0 : i32
    %9 = arith.cmpi eq, %arg2, %c0_i32_8 : i32
    %10 = arith.extui %9 : i1 to i32
    %c0_i32_9 = arith.constant 0 : i32
    %11 = arith.cmpi ne, %10, %c0_i32_9 : i32
    scf.if %11 {
      %c0_10 = arith.constant 0 : index
      %c0_11 = arith.constant 0 : index
      %12 = vector.load %arg6[%c0_10, %c0_11] : memref<128x128xf32, #tpu.memory_space<vmem>>, vector<128x128xf32>
      %c0_12 = arith.constant 0 : index
      %c0_13 = arith.constant 0 : index
      %13 = vector.load %arg5[%c0_12, %c0_13] : memref<128x128xf32, #tpu.memory_space<vmem>>, vector<128x128xf32>
      tpu.vector_store %arg5[%c0_12, %c0_13], %12 {strides = array<i32>} : memref<128x128xf32, #tpu.memory_space<vmem>>, vector<128x128xf32>,
    } else {
    }
    return
  }
  func.func @transform_0(%arg0: i32, %arg1: i32, %arg2: i32) -> (i32, i32) {
    %c0_i32 = arith.constant 0 : i32
    return %arg0, %arg2 : i32, i32
  }
  func.func @transform_1(%arg0: i32, %arg1: i32, %arg2: i32) -> (i32, i32) {
    %c0_i32 = arith.constant 0 : i32
    return %arg2, %arg1 : i32, i32
  }
  func.func @transform_2(%arg0: i32, %arg1: i32, %arg2: i32) -> (i32, i32) {
    %c0_i32 = arith.constant 0 : i32
    return %arg0, %arg1 : i32, i32
  }
}

module attributes {stable_mosaic.version = 11 : i64} {
  func.func @_bn_stats_kernel(%arg0: i32, %arg1: memref<128x128xf32, #tpu.memory_space<vmem>>, %arg2: memref<2x128xf32, #tpu.memory_space<vmem>>) attributes {dimension_semantics = [#tpu.dimension_semantics<arbitrary>], iteration_bounds = array<i64: 1>, scalar_prefetch = 0 : i64, scratch_operands = 0 : i64, tpu.core_type = #tpu.core_type<tc>, window_params = [{transform_indices = @transform_0, window_bounds = array<i64: 128, 128>}, {pipeline_mode = #tpu.pipeline_mode<synchronous>, transform_indices = @transform_1, window_bounds = array<i64: 2, 128>}]} {
    %c0_i32 = arith.constant 0 : i32
    %0 = arith.cmpi eq, %arg0, %c0_i32 : i32
    %1 = arith.extui %0 : i1 to i32
    %c0_i32_0 = arith.constant 0 : i32
    %2 = arith.cmpi ne, %1, %c0_i32_0 : i32
    scf.if %2 {
      %cst_7 = arith.constant 0.000000e+00 : f32
      %13 = vector.broadcast %cst_7 : f32 to vector<2x128xf32>
      %c0_8 = arith.constant 0 : index
      %c0_9 = arith.constant 0 : index
      %14 = vector.load %arg2[%c0_8, %c0_9] : memref<2x128xf32, #tpu.memory_space<vmem>>, vector<2x128xf32>
      tpu.vector_store %arg2[%c0_8, %c0_9], %13 {strides = array<i32>} : memref<2x128xf32, #tpu.memory_space<vmem>>, vector<2x128xf32>,
    } else {
    }
    %c0 = arith.constant 0 : index
    %c0_1 = arith.constant 0 : index
    %3 = vector.load %arg1[%c0, %c0_1] : memref<128x128xf32, #tpu.memory_space<vmem>>, vector<128x128xf32>
    %cst = arith.constant dense<0.000000e+00> : vector<128xf32>
    %4 = vector.multi_reduction <add>, %3, %cst [0] : vector<128x128xf32> to vector<128xf32>
    %5 = vector.shape_cast %4 : vector<128xf32> to vector<1x128xf32>
    %6 = arith.mulf %3, %3 : vector<128x128xf32>
    %cst_2 = arith.constant dense<0.000000e+00> : vector<128xf32>
    %7 = vector.multi_reduction <add>, %6, %cst_2 [0] : vector<128x128xf32> to vector<128xf32>
    %8 = vector.shape_cast %7 : vector<128xf32> to vector<1x128xf32>
    %c0_3 = arith.constant 0 : index
    %c0_4 = arith.constant 0 : index
    %9 = vector.load %arg2[%c0_3, %c0_4] : memref<2x128xf32, #tpu.memory_space<vmem>>, vector<2x128xf32>
    %10 = tpu.concatenate %5, %8 in 0 : vector<1x128xf32>, vector<1x128xf32> -> vector<2x128xf32>
    %11 = arith.addf %9, %10 : vector<2x128xf32>
    %c0_5 = arith.constant 0 : index
    %c0_6 = arith.constant 0 : index
    %12 = vector.load %arg2[%c0_5, %c0_6] : memref<2x128xf32, #tpu.memory_space<vmem>>, vector<2x128xf32>
    tpu.vector_store %arg2[%c0_5, %c0_6], %11 {strides = array<i32>} : memref<2x128xf32, #tpu.memory_space<vmem>>, vector<2x128xf32>,
    return
  }
  func.func @transform_0(%arg0: i32) -> (i32, i32) {
    %c0_i32 = arith.constant 0 : i32
    %c0_i32_0 = arith.constant 0 : i32
    return %arg0, %c0_i32 : i32, i32
  }
  func.func @transform_1(%arg0: i32) -> (i32, i32) {
    %c0_i32 = arith.constant 0 : i32
    %c0_i32_0 = arith.constant 0 : i32
    %c0_i32_1 = arith.constant 0 : i32
    return %c0_i32, %c0_i32_0 : i32, i32
  }
}

module attributes {stable_mosaic.version = 11 : i64} {
  func.func @_bn_add_relu_kernel(%arg0: i32, %arg1: memref<128x128xf32, #tpu.memory_space<vmem>>, %arg2: memref<1x128xf32, #tpu.memory_space<vmem>>, %arg3: memref<1x128xf32, #tpu.memory_space<vmem>>, %arg4: memref<128x128xf32, #tpu.memory_space<vmem>>, %arg5: memref<1x128xf32, #tpu.memory_space<vmem>>, %arg6: memref<1x128xf32, #tpu.memory_space<vmem>>, %arg7: memref<128x128xf32, #tpu.memory_space<vmem>>) attributes {dimension_semantics = [#tpu.dimension_semantics<parallel>], iteration_bounds = array<i64: 1>, scalar_prefetch = 0 : i64, scratch_operands = 0 : i64, tpu.core_type = #tpu.core_type<tc>, window_params = [{transform_indices = @transform_0, window_bounds = array<i64: 128, 128>}, {pipeline_mode = #tpu.pipeline_mode<synchronous>, transform_indices = @transform_1, window_bounds = array<i64: 1, 128>}, {pipeline_mode = #tpu.pipeline_mode<synchronous>, transform_indices = @transform_2, window_bounds = array<i64: 1, 128>}, {transform_indices = @transform_3, window_bounds = array<i64: 128, 128>}, {pipeline_mode = #tpu.pipeline_mode<synchronous>, transform_indices = @transform_4, window_bounds = array<i64: 1, 128>}, {pipeline_mode = #tpu.pipeline_mode<synchronous>, transform_indices = @transform_5, window_bounds = array<i64: 1, 128>}, {transform_indices = @transform_6, window_bounds = array<i64: 128, 128>}]} {
    %c0 = arith.constant 0 : index
    %c0_0 = arith.constant 0 : index
    %0 = vector.load %arg1[%c0, %c0_0] : memref<128x128xf32, #tpu.memory_space<vmem>>, vector<128x128xf32>
    %c0_1 = arith.constant 0 : index
    %c0_2 = arith.constant 0 : index
    %1 = vector.load %arg2[%c0_1, %c0_2] : memref<1x128xf32, #tpu.memory_space<vmem>>, vector<1x128xf32>
    %2 = vector.broadcast %1 : vector<1x128xf32> to vector<128x128xf32>
    %3 = arith.mulf %0, %2 : vector<128x128xf32>
    %c0_3 = arith.constant 0 : index
    %c0_4 = arith.constant 0 : index
    %4 = vector.load %arg3[%c0_3, %c0_4] : memref<1x128xf32, #tpu.memory_space<vmem>>, vector<1x128xf32>
    %5 = vector.broadcast %4 : vector<1x128xf32> to vector<128x128xf32>
    %6 = arith.addf %3, %5 : vector<128x128xf32>
    %c0_5 = arith.constant 0 : index
    %c0_6 = arith.constant 0 : index
    %7 = vector.load %arg4[%c0_5, %c0_6] : memref<128x128xf32, #tpu.memory_space<vmem>>, vector<128x128xf32>
    %c0_7 = arith.constant 0 : index
    %c0_8 = arith.constant 0 : index
    %8 = vector.load %arg5[%c0_7, %c0_8] : memref<1x128xf32, #tpu.memory_space<vmem>>, vector<1x128xf32>
    %9 = vector.broadcast %8 : vector<1x128xf32> to vector<128x128xf32>
    %10 = arith.mulf %7, %9 : vector<128x128xf32>
    %11 = arith.addf %6, %10 : vector<128x128xf32>
    %c0_9 = arith.constant 0 : index
    %c0_10 = arith.constant 0 : index
    %12 = vector.load %arg6[%c0_9, %c0_10] : memref<1x128xf32, #tpu.memory_space<vmem>>, vector<1x128xf32>
    %13 = vector.broadcast %12 : vector<1x128xf32> to vector<128x128xf32>
    %14 = arith.addf %11, %13 : vector<128x128xf32>
    %cst = arith.constant 0.000000e+00 : f32
    %15 = vector.broadcast %cst : f32 to vector<128x128xf32>
    %16 = arith.maximumf %14, %15 : vector<128x128xf32>
    %c0_11 = arith.constant 0 : index
    %c0_12 = arith.constant 0 : index
    %17 = vector.load %arg7[%c0_11, %c0_12] : memref<128x128xf32, #tpu.memory_space<vmem>>, vector<128x128xf32>
    tpu.vector_store %arg7[%c0_11, %c0_12], %16 {strides = array<i32>} : memref<128x128xf32, #tpu.memory_space<vmem>>, vector<128x128xf32>,
    return
  }
  func.func @transform_0(%arg0: i32) -> (i32, i32) {
    %c0_i32 = arith.constant 0 : i32
    %c0_i32_0 = arith.constant 0 : i32
    return %arg0, %c0_i32 : i32, i32
  }
  func.func @transform_1(%arg0: i32) -> (i32, i32) {
    %c0_i32 = arith.constant 0 : i32
    %c0_i32_0 = arith.constant 0 : i32
    %c0_i32_1 = arith.constant 0 : i32
    return %c0_i32, %c0_i32_0 : i32, i32
  }
  func.func @transform_2(%arg0: i32) -> (i32, i32) {
    %c0_i32 = arith.constant 0 : i32
    %c0_i32_0 = arith.constant 0 : i32
    %c0_i32_1 = arith.constant 0 : i32
    return %c0_i32, %c0_i32_0 : i32, i32
  }
  func.func @transform_3(%arg0: i32) -> (i32, i32) {
    %c0_i32 = arith.constant 0 : i32
    %c0_i32_0 = arith.constant 0 : i32
    return %arg0, %c0_i32 : i32, i32
  }
  func.func @transform_4(%arg0: i32) -> (i32, i32) {
    %c0_i32 = arith.constant 0 : i32
    %c0_i32_0 = arith.constant 0 : i32
    %c0_i32_1 = arith.constant 0 : i32
    return %c0_i32, %c0_i32_0 : i32, i32
  }
  func.func @transform_5(%arg0: i32) -> (i32, i32) {
    %c0_i32 = arith.constant 0 : i32
    %c0_i32_0 = arith.constant 0 : i32
    %c0_i32_1 = arith.constant 0 : i32
    return %c0_i32, %c0_i32_0 : i32, i32
  }
  func.func @transform_6(%arg0: i32) -> (i32, i32) {
    %c0_i32 = arith.constant 0 : i32
    %c0_i32_0 = arith.constant 0 : i32
    return %arg0, %c0_i32 : i32, i32
  }
}

</mosaic_0001>

<llo_original>
// kernel: bottleneck_forward.12
$region0: #{bottleneck_forward.12}
  #allocation0 [shape = 'u32[]', space=smem, size = 0x4, offset = 0x4, fixed_abs, tag = 'smem constant byte address 0x4 - core index']
  #allocation1 [shape = 'u32[144,128]{1,0:T(1,128)}', space=vmem, size = 0x12000, scoped, tag = 'internal scratch']
  %s0 = inlined_call_operand.vmem [shape: f32[512,32], index: 0, kind: input, shape index: {}]
  %s1 = inlined_call_operand.vmem [shape: f32[2,32], index: 1, kind: output, shape index: {}]
  %s2 = sld [smem:[#allocation0]]
  $region18: #{bottleneck_forward.12} parent=0
    _
  %s4 = ssub.s32 1, %s2
  %s5 = scalar_select 0, %s4, %s2
  // Predicated region
  $region2: #{bottleneck_forward.12} parent=0 // pred_check
    _
  $region3: #{bottleneck_forward.12} parent=0 // pred_check_branch
    %7 = sbr.rel (0) target = $region5
  $region4: #{bottleneck_forward.12} parent=0 // pred_region
    _
  $region5: #{bottleneck_forward.12} parent=0 // pred_fallthru
    _
  %p8 = scmp.eq.s32.totalorder 0, 0
  // Predicated region
  $region6: #{bottleneck_forward.12} parent=0 // pred_check
    %p9 = pneg %p8
  $region7: #{bottleneck_forward.12} parent=0 // pred_check_branch
    %11 = sbr.rel (%p9) target = $region9
  $region8: #{bottleneck_forward.12} parent=0 // pred_region
    %vm12 = vcmask 254976
    %13 = vst.msk [vmem:[%s1] sm:$0x3] %vm12, 0.0
  $region9: #{bottleneck_forward.12} parent=0 // pred_fallthru
    _
  %v14 = vld [vmem:[%s0] sm:$0xff]
  %v15 = vld [vmem:[%s0 + $0x8] sm:$0xff]
  %v16 = vld [vmem:[%s0 + $0x10] sm:$0xff]
  %v17 = vld [vmem:[%s0 + $0x18] sm:$0xff]
  %v18 = vld [vmem:[%s0 + $0x20] sm:$0xff]
  %v19 = vld [vmem:[%s0 + $0x28] sm:$0xff]
  %v20 = vld [vmem:[%s0 + $0x30] sm:$0xff]
  %v21 = vld [vmem:[%s0 + $0x38] sm:$0xff]
  %v22 = vld [vmem:[%s0 + $0x40] sm:$0xff]
  %v23 = vld [vmem:[%s0 + $0x48] sm:$0xff]
  %v24 = vld [vmem:[%s0 + $0x50] sm:$0xff]
  %v25 = vld [vmem:[%s0 + $0x58] sm:$0xff]
  %v26 = vld [vmem:[%s0 + $0x60] sm:$0xff]
  %v27 = vld [vmem:[%s0 + $0x68] sm:$0xff]
  %v28 = vld [vmem:[%s0 + $0x70] sm:$0xff]
  %v29 = vld [vmem:[%s0 + $0x78] sm:$0xff]
  %v30 = vld [vmem:[%s0 + $0x80] sm:$0xff]
  %v31 = vld [vmem:[%s0 + $0x88] sm:$0xff]
  %v32 = vld [vmem:[%s0 + $0x90] sm:$0xff]
  %v33 = vld [vmem:[%s0 + $0x98] sm:$0xff]
  %v34 = vld [vmem:[%s0 + $0xa0] sm:$0xff]
  %v35 = vld [vmem:[%s0 + $0xa8] sm:$0xff]
  %v36 = vld [vmem:[%s0 + $0xb0] sm:$0xff]
  %v37 = vld [vmem:[%s0 + $0xb8] sm:$0xff]
  %v38 = vld [vmem:[%s0 + $0xc0] sm:$0xff]
  %v39 = vld [vmem:[%s0 + $0xc8] sm:$0xff]
  %v40 = vld [vmem:[%s0 + $0xd0] sm:$0xff]
  %v41 = vld [vmem:[%s0 + $0xd8] sm:$0xff]
  %v42 = vld [vmem:[%s0 + $0xe0] sm:$0xff]
  %v43 = vld [vmem:[%s0 + $0xe8] sm:$0xff]
  %v44 = vld [vmem:[%s0 + $0xf0] sm:$0xff]
  %v45 = vld [vmem:[%s0 + $0xf8] sm:$0xff]
  %v46 = vld [vmem:[%s0 + $0x100] sm:$0xff]
  %v47 = vld [vmem:[%s0 + $0x108] sm:$0xff]
  %v48 = vld [vmem:[%s0 + $0x110] sm:$0xff]
  %v49 = vld [vmem:[%s0 + $0x118] sm:$0xff]
  %v50 = vld [vmem:[%s0 + $0x120] sm:$0xff]
  %v51 = vld [vmem:[%s0 + $0x128] sm:$0xff]
  %v52 = vld [vmem:[%s0 + $0x130] sm:$0xff]
  %v53 = vld [vmem:[%s0 + $0x138] sm:$0xff]
  %v54 = vld [vmem:[%s0 + $0x140] sm:$0xff]
  %v55 = vld [vmem:[%s0 + $0x148] sm:$0xff]
  %v56 = vld [vmem:[%s0 + $0x150] sm:$0xff]
  %v57 = vld [vmem:[%s0 + $0x158] sm:$0xff]
  %v58 = vld [vmem:[%s0 + $0x160] sm:$0xff]
  %v59 = vld [vmem:[%s0 + $0x168] sm:$0xff]
  %v60 = vld [vmem:[%s0 + $0x170] sm:$0xff]
  %v61 = vld [vmem:[%s0 + $0x178] sm:$0xff]
  %v62 = vld [vmem:[%s0 + $0x180] sm:$0xff]
  %v63 = vld [vmem:[%s0 + $0x188] sm:$0xff]
  %v64 = vld [vmem:[%s0 + $0x190] sm:$0xff]
  %v65 = vld [vmem:[%s0 + $0x198] sm:$0xff]
  %v66 = vld [vmem:[%s0 + $0x1a0] sm:$0xff]
  %v67 = vld [vmem:[%s0 + $0x1a8] sm:$0xff]
  %v68 = vld [vmem:[%s0 + $0x1b0] sm:$0xff]
  %v69 = vld [vmem:[%s0 + $0x1b8] sm:$0xff]
  %v70 = vld [vmem:[%s0 + $0x1c0] sm:$0xff]
  %v71 = vld [vmem:[%s0 + $0x1c8] sm:$0xff]
  %v72 = vld [vmem:[%s0 + $0x1d0] sm:$0xff]
  %v73 = vld [vmem:[%s0 + $0x1d8] sm:$0xff]
  %v74 = vld [vmem:[%s0 + $0x1e0] sm:$0xff]
  %v75 = vld [vmem:[%s0 + $0x1e8] sm:$0xff]
  %v76 = vld [vmem:[%s0 + $0x1f0] sm:$0xff]
  %v77 = vld [vmem:[%s0 + $0x1f8] sm:$0xff]
  %vm78 = vcmask 261120
  %v79 = vsel %vm78, %v14, 0.0
  %v80 = vsel %vm78, %v15, 0.0
  %v81 = vadd.f32 %v79, %v80
  %v82 = vsel %vm78, %v16, 0.0
  %v83 = vadd.f32 %v81, %v82
  %v84 = vsel %vm78, %v17, 0.0
  %v85 = vadd.f32 %v83, %v84
  %v86 = vsel %vm78, %v18, 0.0
  %v87 = vadd.f32 %v85, %v86
  %v88 = vsel %vm78, %v19, 0.0
  %v89 = vadd.f32 %v87, %v88
  %v90 = vsel %vm78, %v20, 0.0
  %v91 = vadd.f32 %v89, %v90
  %v92 = vsel %vm78, %v21, 0.0
  %v93 = vadd.f32 %v91, %v92
  %v94 = vsel %vm78, %v22, 0.0
  %v95 = vadd.f32 %v93, %v94
  %v96 = vsel %vm78, %v23, 0.0
  %v97 = vadd.f32 %v95, %v96
  %v98 = vsel %vm78, %v24, 0.0
  %v99 = vadd.f32 %v97, %v98
  %v100 = vsel %vm78, %v25, 0.0
  %v101 = vadd.f32 %v99, %v100
  %v102 = vsel %vm78, %v26, 0.0
  %v103 = vadd.f32 %v101, %v102
  %v104 = vsel %vm78, %v27, 0.0
  %v105 = vadd.f32 %v103, %v104
  %v106 = vsel %vm78, %v28, 0.0
  %v107 = vadd.f32 %v105, %v106
  %v108 = vsel %vm78, %v29, 0.0
  %v109 = vadd.f32 %v107, %v108
  %v110 = vsel %vm78, %v30, 0.0
  %v111 = vadd.f32 %v109, %v110
  %v112 = vsel %vm78, %v31, 0.0
  %v113 = vadd.f32 %v111, %v112
  %v114 = vsel %vm78, %v32, 0.0
  %v115 = vadd.f32 %v113, %v114
  %v116 = vsel %vm78, %v33, 0.0
  %v117 = vadd.f32 %v115, %v116
  %v118 = vsel %vm78, %v34, 0.0
  %v119 = vadd.f32 %v117, %v118
  %v120 = vsel %vm78, %v35, 0.0
  %v121 = vadd.f32 %v119, %v120
  %v122 = vsel %vm78, %v36, 0.0
  %v123 = vadd.f32 %v121, %v122
  %v124 = vsel %vm78, %v37, 0.0
  %v125 = vadd.f32 %v123, %v124
  %v126 = vsel %vm78, %v38, 0.0
  %v127 = vadd.f32 %v125, %v126
  %v128 = vsel %vm78, %v39, 0.0
  %v129 = vadd.f32 %v127, %v128
  %v130 = vsel %vm78, %v40, 0.0
  %v131 = vadd.f32 %v129, %v130
  %v132 = vsel %vm78, %v41, 0.0
  %v133 = vadd.f32 %v131, %v132
  %v134 = vsel %vm78, %v42, 0.0
  %v135 = vadd.f32 %v133, %v134
  %v136 = vsel %vm78, %v43, 0.0
  %v137 = vadd.f32 %v135, %v136
  %v138 = vsel %vm78, %v44, 0.0
  %v139 = vadd.f32 %v137, %v138
  %v140 = vsel %vm78, %v45, 0.0
  %v141 = vadd.f32 %v139, %v140
  %v142 = vsel %vm78, %v46, 0.0
  %v143 = vadd.f32 %v141, %v142
  %v144 = vsel %vm78, %v47, 0.0
  %v145 = vadd.f32 %v143, %v144
  %v146 = vsel %vm78, %v48, 0.0
  %v147 = vadd.f32 %v145, %v146
  %v148 = vsel %vm78, %v49, 0.0
  %v149 = vadd.f32 %v147, %v148
  %v150 = vsel %vm78, %v50, 0.0
  %v151 = vadd.f32 %v149, %v150
  %v152 = vsel %vm78, %v51, 0.0
  %v153 = vadd.f32 %v151, %v152
  %v154 = vsel %vm78, %v52, 0.0
  %v155 = vadd.f32 %v153, %v154
  %v156 = vsel %vm78, %v53, 0.0
  %v157 = vadd.f32 %v155, %v156
  %v158 = vsel %vm78, %v54, 0.0
  %v159 = vadd.f32 %v157, %v158
  %v160 = vsel %vm78, %v55, 0.0
  %v161 = vadd.f32 %v159, %v160
  %v162 = vsel %vm78, %v56, 0.0
  %v163 = vadd.f32 %v161, %v162
  %v164 = vsel %vm78, %v57, 0.0
  %v165 = vadd.f32 %v163, %v164
  %v166 = vsel %vm78, %v58, 0.0
  %v167 = vadd.f32 %v165, %v166
  %v168 = vsel %vm78, %v59, 0.0
  %v169 = vadd.f32 %v167, %v168
  %v170 = vsel %vm78, %v60, 0.0
  %v171 = vadd.f32 %v169, %v170
  %v172 = vsel %vm78, %v61, 0.0
  %v173 = vadd.f32 %v171, %v172
  %v174 = vsel %vm78, %v62, 0.0
  %v175 = vadd.f32 %v173, %v174
  %v176 = vsel %vm78, %v63, 0.0
  %v177 = vadd.f32 %v175, %v176
  %v178 = vsel %vm78, %v64, 0.0
  %v179 = vadd.f32 %v177, %v178
  %v180 = vsel %vm78, %v65, 0.0
  %v181 = vadd.f32 %v179, %v180
  %v182 = vsel %vm78, %v66, 0.0
  %v183 = vadd.f32 %v181, %v182
  %v184 = vsel %vm78, %v67, 0.0
  %v185 = vadd.f32 %v183, %v184
  %v186 = vsel %vm78, %v68, 0.0
  %v187 = vadd.f32 %v185, %v186
  %v188 = vsel %vm78, %v69, 0.0
  %v189 = vadd.f32 %v187, %v188
  %v190 = vsel %vm78, %v70, 0.0
  %v191 = vadd.f32 %v189, %v190
  %v192 = vsel %vm78, %v71, 0.0
  %v193 = vadd.f32 %v191, %v192
  %v194 = vsel %vm78, %v72, 0.0
  %v195 = vadd.f32 %v193, %v194
  %v196 = vsel %vm78, %v73, 0.0
  %v197 = vadd.f32 %v195, %v196
  %v198 = vsel %vm78, %v74, 0.0
  %v199 = vadd.f32 %v197, %v198
  %v200 = vsel %vm78, %v75, 0.0
  %v201 = vadd.f32 %v199, %v200
  %v202 = vsel %vm78, %v76, 0.0
  %v203 = vadd.f32 %v201, %v202
  %v204 = vsel %vm78, %v77, 0.0
  %v205 = vadd.f32 %v203, %v204
  %v206 = vrot.slane %v205, 4
  %v207 = vadd.f32 %v205, %v206
  %v208 = vrot.slane %v207, 2
  %v209 = vadd.f32 %v207, %v208
  %v210 = vrot.slane %v209, 1
  %v211 = vadd.f32 %v209, %v210
  %v212 = vmul.f32 %v14, %v14
  %v213 = vmul.f32 %v15, %v15
  %v214 = vmul.f32 %v16, %v16
  %v215 = vmul.f32 %v17, %v17
  %v216 = vmul.f32 %v18, %v18
  %v217 = vmul.f32 %v19, %v19
  %v218 = vmul.f32 %v20, %v20
  %v219 = vmul.f32 %v21, %v21
  %v220 = vmul.f32 %v22, %v22
  %v221 = vmul.f32 %v23, %v23
  %v222 = vmul.f32 %v24, %v24
  %v223 = vmul.f32 %v25, %v25
  %v224 = vmul.f32 %v26, %v26
  %v225 = vmul.f32 %v27, %v27
  %v226 = vmul.f32 %v28, %v28
  %v227 = vmul.f32 %v29, %v29
  %v228 = vmul.f32 %v30, %v30
  %v229 = vmul.f32 %v31, %v31
  %v230 = vmul.f32 %v32, %v32
  %v231 = vmul.f32 %v33, %v33
  %v232 = vmul.f32 %v34, %v34
  %v233 = vmul.f32 %v35, %v35
  %v234 = vmul.f32 %v36, %v36
  %v235 = vmul.f32 %v37, %v37
  %v236 = vmul.f32 %v38, %v38
  %v237 = vmul.f32 %v39, %v39
  %v238 = vmul.f32 %v40, %v40
  %v239 = vmul.f32 %v41, %v41
  %v240 = vmul.f32 %v42, %v42
  %v241 = vmul.f32 %v43, %v43
  %v242 = vmul.f32 %v44, %v44
  %v243 = vmul.f32 %v45, %v45
  %v244 = vmul.f32 %v46, %v46
  %v245 = vmul.f32 %v47, %v47
  %v246 = vmul.f32 %v48, %v48
  %v247 = vmul.f32 %v49, %v49
  %v248 = vmul.f32 %v50, %v50
  %v249 = vmul.f32 %v51, %v51
  %v250 = vmul.f32 %v52, %v52
  %v251 = vmul.f32 %v53, %v53
  %v252 = vmul.f32 %v54, %v54
  %v253 = vmul.f32 %v55, %v55
  %v254 = vmul.f32 %v56, %v56
  %v255 = vmul.f32 %v57, %v57
  %v256 = vmul.f32 %v58, %v58
  %v257 = vmul.f32 %v59, %v59
  %v258 = vmul.f32 %v60, %v60
  %v259 = vmul.f32 %v61, %v61
  %v260 = vmul.f32 %v62, %v62
  %v261 = vmul.f32 %v63, %v63
  %v262 = vmul.f32 %v64, %v64
  %v263 = vmul.f32 %v65, %v65
  %v264 = vmul.f32 %v66, %v66
  %v265 = vmul.f32 %v67, %v67
  %v266 = vmul.f32 %v68, %v68
  %v267 = vmul.f32 %v69, %v69
  %v268 = vmul.f32 %v70, %v70
  %v269 = vmul.f32 %v71, %v71
  %v270 = vmul.f32 %v72, %v72
  %v271 = vmul.f32 %v73, %v73
  %v272 = vmul.f32 %v74, %v74
  %v273 = vmul.f32 %v75, %v75
  %v274 = vmul.f32 %v76, %v76
  %v275 = vmul.f32 %v77, %v77
  %v276 = vsel %vm78, %v212, 0.0
  %v277 = vsel %vm78, %v213, 0.0
  %v278 = vadd.f32 %v276, %v277
  %v279 = vsel %vm78, %v214, 0.0
  %v280 = vadd.f32 %v278, %v279
  %v281 = vsel %vm78, %v215, 0.0
  %v282 = vadd.f32 %v280, %v281
  %v283 = vsel %vm78, %v216, 0.0
  %v284 = vadd.f32 %v282, %v283
  %v285 = vsel %vm78, %v217, 0.0
  %v286 = vadd.f32 %v284, %v285
  %v287 = vsel %vm78, %v218, 0.0
  %v288 = vadd.f32 %v286, %v287
  %v289 = vsel %vm78, %v219, 0.0
  %v290 = vadd.f32 %v288, %v289
  %v291 = vsel %vm78, %v220, 0.0
  %v292 = vadd.f32 %v290, %v291
  %v293 = vsel %vm78, %v221, 0.0
  %v294 = vadd.f32 %v292, %v293
  %v295 = vsel %vm78, %v222, 0.0
  %v296 = vadd.f32 %v294, %v295
  %v297 = vsel %vm78, %v223, 0.0
  %v298 = vadd.f32 %v296, %v297
  %v299 = vsel %vm78, %v224, 0.0
  %v300 = vadd.f32 %v298, %v299
  %v301 = vsel %vm78, %v225, 0.0
  %v302 = vadd.f32 %v300, %v301
  %v303 = vsel %vm78, %v226, 0.0
  %v304 = vadd.f32 %v302, %v303
  %v305 = vsel %vm78, %v227, 0.0
  %v306 = vadd.f32 %v304, %v305
  %v307 = vsel %vm78, %v228, 0.0
  %v308 = vadd.f32 %v306, %v307
  %v309 = vsel %vm78, %v229, 0.0
  %v310 = vadd.f32 %v308, %v309
  %v311 = vsel %vm78, %v230, 0.0
  %v312 = vadd.f32 %v310, %v311
  %v313 = vsel %vm78, %v231, 0.0
  %v314 = vadd.f32 %v312, %v313
  %v315 = vsel %vm78, %v232, 0.0
  %v316 = vadd.f32 %v314, %v315
  %v317 = vsel %vm78, %v233, 0.0
  %v318 = vadd.f32 %v316, %v317
  %v319 = vsel %vm78, %v234, 0.0
  %v320 = vadd.f32 %v318, %v319
  %v321 = vsel %vm78, %v235, 0.0
  %v322 = vadd.f32 %v320, %v321
  %v323 = vsel %vm78, %v236, 0.0
  %v324 = vadd.f32 %v322, %v323
  %v325 = vsel %vm78, %v237, 0.0
  %v326 = vadd.f32 %v324, %v325
  %v327 = vsel %vm78, %v238, 0.0
  %v328 = vadd.f32 %v326, %v327
  %v329 = vsel %vm78, %v239, 0.0
  %v330 = vadd.f32 %v328, %v329
  %v331 = vsel %vm78, %v240, 0.0
  %v332 = vadd.f32 %v330, %v331
  %v333 = vsel %vm78, %v241, 0.0
  %v334 = vadd.f32 %v332, %v333
  %v335 = vsel %vm78, %v242, 0.0
  %v336 = vadd.f32 %v334, %v335
  %v337 = vsel %vm78, %v243, 0.0
  %v338 = vadd.f32 %v336, %v337
  %v339 = vsel %vm78, %v244, 0.0
  %v340 = vadd.f32 %v338, %v339
  %v341 = vsel %vm78, %v245, 0.0
  %v342 = vadd.f32 %v340, %v341
  %v343 = vsel %vm78, %v246, 0.0
  %v344 = vadd.f32 %v342, %v343
  %v345 = vsel %vm78, %v247, 0.0
  %v346 = vadd.f32 %v344, %v345
  %v347 = vsel %vm78, %v248, 0.0
  %v348 = vadd.f32 %v346, %v347
  %v349 = vsel %vm78, %v249, 0.0
  %v350 = vadd.f32 %v348, %v349
  %v351 = vsel %vm78, %v250, 0.0
  %v352 = vadd.f32 %v350, %v351
  %v353 = vsel %vm78, %v251, 0.0
  %v354 = vadd.f32 %v352, %v353
  %v355 = vsel %vm78, %v252, 0.0
  %v356 = vadd.f32 %v354, %v355
  %v357 = vsel %vm78, %v253, 0.0
  %v358 = vadd.f32 %v356, %v357
  %v359 = vsel %vm78, %v254, 0.0
  %v360 = vadd.f32 %v358, %v359
  %v361 = vsel %vm78, %v255, 0.0
  %v362 = vadd.f32 %v360, %v361
  %v363 = vsel %vm78, %v256, 0.0
  %v364 = vadd.f32 %v362, %v363
  %v365 = vsel %vm78, %v257, 0.0
  %v366 = vadd.f32 %v364, %v365
  %v367 = vsel %vm78, %v258, 0.0
  %v368 = vadd.f32 %v366, %v367
  %v369 = vsel %vm78, %v259, 0.0
  %v370 = vadd.f32 %v368, %v369
  %v371 = vsel %vm78, %v260, 0.0
  %v372 = vadd.f32 %v370, %v371
  %v373 = vsel %vm78, %v261, 0.0
  %v374 = vadd.f32 %v372, %v373
  %v375 = vsel %vm78, %v262, 0.0
  %v376 = vadd.f32 %v374, %v375
  %v377 = vsel %vm78, %v263, 0.0
  %v378 = vadd.f32 %v376, %v377
  %v379 = vsel %vm78, %v264, 0.0
  %v380 = vadd.f32 %v378, %v379
  %v381 = vsel %vm78, %v265, 0.0
  %v382 = vadd.f32 %v380, %v381
  %v383 = vsel %vm78, %v266, 0.0
  %v384 = vadd.f32 %v382, %v383
  %v385 = vsel %vm78, %v267, 0.0
  %v386 = vadd.f32 %v384, %v385
  %v387 = vsel %vm78, %v268, 0.0
  %v388 = vadd.f32 %v386, %v387
  %v389 = vsel %vm78, %v269, 0.0
  %v390 = vadd.f32 %v388, %v389
  %v391 = vsel %vm78, %v270, 0.0
  %v392 = vadd.f32 %v390, %v391
  %v393 = vsel %vm78, %v271, 0.0
  %v394 = vadd.f32 %v392, %v393
  %v395 = vsel %vm78, %v272, 0.0
  %v396 = vadd.f32 %v394, %v395
  %v397 = vsel %vm78, %v273, 0.0
  %v398 = vadd.f32 %v396, %v397
  %v399 = vsel %vm78, %v274, 0.0
  %v400 = vadd.f32 %v398, %v399
  %v401 = vsel %vm78, %v275, 0.0
  %v402 = vadd.f32 %v400, %v401
  %v403 = vrot.slane %v402, 4
  %v404 = vadd.f32 %v402, %v403
  %v405 = vrot.slane %v404, 2
  %v406 = vadd.f32 %v404, %v405
  %v407 = vrot.slane %v406, 1
  %v408 = vadd.f32 %v406, %v407
  %v409 = vld [vmem:[%s1] sm:$0x3]
  %vm410 = vcmask 1040384
  %v411 = vsel %vm410, %v211, %v408
  %v412 = vadd.f32 %v409, %v411
  %vm413 = vcmask 254976
  %414 = vst.msk [vmem:[%s1] sm:$0x3] %vm413, %v412
  // Predicated region
  $region10: #{bottleneck_forward.12} parent=0 // pred_check
    _
  $region11: #{bottleneck_forward.12} parent=0 // pred_check_branch
    %416 = sbr.rel (0) target = $region13
  $region12: #{bottleneck_forward.12} parent=0 // pred_region
    _
  $region13: #{bottleneck_forward.12} parent=0 // pred_fallthru
    _
  // Predicated region
  $region14: #{bottleneck_forward.12} parent=0 // pred_check
    _
  $region15: #{bottleneck_forward.12} parent=0 // pred_check_branch
    %418 = sbr.rel (0) target = $region17
  $region16: #{bottleneck_forward.12} parent=0 // pred_region
    _
  $region17: #{bottleneck_forward.12} parent=0 // pred_fallthru
    _

// kernel: bottleneck_forward.13
$region0: #{bottleneck_forward.13}
  #allocation0 [shape = 'u32[]', space=smem, size = 0x4, offset = 0x4, fixed_abs, tag = 'smem constant byte address 0x4 - core index']
  #allocation1 [shape = 'u32[144,128]{1,0:T(1,128)}', space=vmem, size = 0x12000, scoped, tag = 'internal scratch']
  %s0 = inlined_call_operand.vmem [shape: f32[512,32], index: 0, kind: input, shape index: {}]
  %s1 = inlined_call_operand.vmem [shape: f32[1,32], index: 1, kind: input, shape index: {}]
  %s2 = inlined_call_operand.vmem [shape: f32[1,32], index: 2, kind: input, shape index: {}]
  %s3 = inlined_call_operand.vmem [shape: f32[512,32], index: 3, kind: output, shape index: {}]
  %s4 = sld [smem:[#allocation0]]
  $region22: #{bottleneck_forward.13} parent=0
    _
  %s6 = ssub.s32 1, %s4
  %s7 = scalar_select 0, %s6, %s4
  // Predicated region
  $region2: #{bottleneck_forward.13} parent=0 // pred_check
    _
  $region3: #{bottleneck_forward.13} parent=0 // pred_check_branch
    %9 = sbr.rel (0) target = $region5
  $region4: #{bottleneck_forward.13} parent=0 // pred_region
    _
  $region5: #{bottleneck_forward.13} parent=0 // pred_fallthru
    _
  // Predicated region
  $region6: #{bottleneck_forward.13} parent=0 // pred_check
    _
  $region7: #{bottleneck_forward.13} parent=0 // pred_check_branch
    %11 = sbr.rel (0) target = $region9
  $region8: #{bottleneck_forward.13} parent=0 // pred_region
    _
  $region9: #{bottleneck_forward.13} parent=0 // pred_fallthru
    _
  // Predicated region
  $region10: #{bottleneck_forward.13} parent=0 // pred_check
    _
  $region11: #{bottleneck_forward.13} parent=0 // pred_check_branch
    %13 = sbr.rel (0) target = $region13
  $region12: #{bottleneck_forward.13} parent=0 // pred_region
    _
  $region13: #{bottleneck_forward.13} parent=0 // pred_fallthru
    _
  %v14 = vld [vmem:[%s0] sm:$0xff]
  %v15 = vld [vmem:[%s0 + $0x8] sm:$0xff]
  %v16 = vld [vmem:[%s0 + $0x10] sm:$0xff]
  %v17 = vld [vmem:[%s0 + $0x18] sm:$0xff]
  %v18 = vld [vmem:[%s0 + $0x20] sm:$0xff]
  %v19 = vld [vmem:[%s0 + $0x28] sm:$0xff]
  %v20 = vld [vmem:[%s0 + $0x30] sm:$0xff]
  %v21 = vld [vmem:[%s0 + $0x38] sm:$0xff]
  %v22 = vld [vmem:[%s0 + $0x40] sm:$0xff]
  %v23 = vld [vmem:[%s0 + $0x48] sm:$0xff]
  %v24 = vld [vmem:[%s0 + $0x50] sm:$0xff]
  %v25 = vld [vmem:[%s0 + $0x58] sm:$0xff]
  %v26 = vld [vmem:[%s0 + $0x60] sm:$0xff]
  %v27 = vld [vmem:[%s0 + $0x68] sm:$0xff]
  %v28 = vld [vmem:[%s0 + $0x70] sm:$0xff]
  %v29 = vld [vmem:[%s0 + $0x78] sm:$0xff]
  %v30 = vld [vmem:[%s0 + $0x80] sm:$0xff]
  %v31 = vld [vmem:[%s0 + $0x88] sm:$0xff]
  %v32 = vld [vmem:[%s0 + $0x90] sm:$0xff]
  %v33 = vld [vmem:[%s0 + $0x98] sm:$0xff]
  %v34 = vld [vmem:[%s0 + $0xa0] sm:$0xff]
  %v35 = vld [vmem:[%s0 + $0xa8] sm:$0xff]
  %v36 = vld [vmem:[%s0 + $0xb0] sm:$0xff]
  %v37 = vld [vmem:[%s0 + $0xb8] sm:$0xff]
  %v38 = vld [vmem:[%s0 + $0xc0] sm:$0xff]
  %v39 = vld [vmem:[%s0 + $0xc8] sm:$0xff]
  %v40 = vld [vmem:[%s0 + $0xd0] sm:$0xff]
  %v41 = vld [vmem:[%s0 + $0xd8] sm:$0xff]
  %v42 = vld [vmem:[%s0 + $0xe0] sm:$0xff]
  %v43 = vld [vmem:[%s0 + $0xe8] sm:$0xff]
  %v44 = vld [vmem:[%s0 + $0xf0] sm:$0xff]
  %v45 = vld [vmem:[%s0 + $0xf8] sm:$0xff]
  %v46 = vld [vmem:[%s0 + $0x100] sm:$0xff]
  %v47 = vld [vmem:[%s0 + $0x108] sm:$0xff]
  %v48 = vld [vmem:[%s0 + $0x110] sm:$0xff]
  %v49 = vld [vmem:[%s0 + $0x118] sm:$0xff]
  %v50 = vld [vmem:[%s0 + $0x120] sm:$0xff]
  %v51 = vld [vmem:[%s0 + $0x128] sm:$0xff]
  %v52 = vld [vmem:[%s0 + $0x130] sm:$0xff]
  %v53 = vld [vmem:[%s0 + $0x138] sm:$0xff]
  %v54 = vld [vmem:[%s0 + $0x140] sm:$0xff]
  %v55 = vld [vmem:[%s0 + $0x148] sm:$0xff]
  %v56 = vld [vmem:[%s0 + $0x150] sm:$0xff]
  %v57 = vld [vmem:[%s0 + $0x158] sm:$0xff]
  %v58 = vld [vmem:[%s0 + $0x160] sm:$0xff]
  %v59 = vld [vmem:[%s0 + $0x168] sm:$0xff]
  %v60 = vld [vmem:[%s0 + $0x170] sm:$0xff]
  %v61 = vld [vmem:[%s0 + $0x178] sm:$0xff]
  %v62 = vld [vmem:[%s0 + $0x180] sm:$0xff]
  %v63 = vld [vmem:[%s0 + $0x188] sm:$0xff]
  %v64 = vld [vmem:[%s0 + $0x190] sm:$0xff]
  %v65 = vld [vmem:[%s0 + $0x198] sm:$0xff]
  %v66 = vld [vmem:[%s0 + $0x1a0] sm:$0xff]
  %v67 = vld [vmem:[%s0 + $0x1a8] sm:$0xff]
  %v68 = vld [vmem:[%s0 + $0x1b0] sm:$0xff]
  %v69 = vld [vmem:[%s0 + $0x1b8] sm:$0xff]
  %v70 = vld [vmem:[%s0 + $0x1c0] sm:$0xff]
  %v71 = vld [vmem:[%s0 + $0x1c8] sm:$0xff]
  %v72 = vld [vmem:[%s0 + $0x1d0] sm:$0xff]
  %v73 = vld [vmem:[%s0 + $0x1d8] sm:$0xff]
  %v74 = vld [vmem:[%s0 + $0x1e0] sm:$0xff]
  %v75 = vld [vmem:[%s0 + $0x1e8] sm:$0xff]
  %v76 = vld [vmem:[%s0 + $0x1f0] sm:$0xff]
  %v77 = vld [vmem:[%s0 + $0x1f8] sm:$0xff]
  %v78 = vld [vmem:[%s1] sm:$0x1]
  %v80 = vlaneseq
  %v81 = vshrl.u32 %v80, 7
  %v82 = vsub.s32 0, %v81
  %v83 = vrot.slane %v78, %v82
  %v85 = vmul.f32 %v14, %v83
  %v86 = vmul.f32 %v15, %v83
  %v87 = vmul.f32 %v16, %v83
  %v88 = vmul.f32 %v17, %v83
  %v89 = vmul.f32 %v18, %v83
  %v90 = vmul.f32 %v19, %v83
  %v91 = vmul.f32 %v20, %v83
  %v92 = vmul.f32 %v21, %v83
  %v93 = vmul.f32 %v22, %v83
  %v94 = vmul.f32 %v23, %v83
  %v95 = vmul.f32 %v24, %v83
  %v96 = vmul.f32 %v25, %v83
  %v97 = vmul.f32 %v26, %v83
  %v98 = vmul.f32 %v27, %v83
  %v99 = vmul.f32 %v28, %v83
  %v100 = vmul.f32 %v29, %v83
  %v101 = vmul.f32 %v30, %v83
  %v102 = vmul.f32 %v31, %v83
  %v103 = vmul.f32 %v32, %v83
  %v104 = vmul.f32 %v33, %v83
  %v105 = vmul.f32 %v34, %v83
  %v106 = vmul.f32 %v35, %v83
  %v107 = vmul.f32 %v36, %v83
  %v108 = vmul.f32 %v37, %v83
  %v109 = vmul.f32 %v38, %v83
  %v110 = vmul.f32 %v39, %v83
  %v111 = vmul.f32 %v40, %v83
  %v112 = vmul.f32 %v41, %v83
  %v113 = vmul.f32 %v42, %v83
  %v114 = vmul.f32 %v43, %v83
  %v115 = vmul.f32 %v44, %v83
  %v116 = vmul.f32 %v45, %v83
  %v117 = vmul.f32 %v46, %v83
  %v118 = vmul.f32 %v47, %v83
  %v119 = vmul.f32 %v48, %v83
  %v120 = vmul.f32 %v49, %v83
  %v121 = vmul.f32 %v50, %v83
  %v122 = vmul.f32 %v51, %v83
  %v123 = vmul.f32 %v52, %v83
  %v124 = vmul.f32 %v53, %v83
  %v125 = vmul.f32 %v54, %v83
  %v126 = vmul.f32 %v55, %v83
  %v127 = vmul.f32 %v56, %v83
  %v128 = vmul.f32 %v57, %v83
  %v129 = vmul.f32 %v58, %v83
  %v130 = vmul.f32 %v59, %v83
  %v131 = vmul.f32 %v60, %v83
  %v132 = vmul.f32 %v61, %v83
  %v133 = vmul.f32 %v62, %v83
  %v134 = vmul.f32 %v63, %v83
  %v135 = vmul.f32 %v64, %v83
  %v136 = vmul.f32 %v65, %v83
  %v137 = vmul.f32 %v66, %v83
  %v138 = vmul.f32 %v67, %v83
  %v139 = vmul.f32 %v68, %v83
  %v140 = vmul.f32 %v69, %v83
  %v141 = vmul.f32 %v70, %v83
  %v142 = vmul.f32 %v71, %v83
  %v143 = vmul.f32 %v72, %v83
  %v144 = vmul.f32 %v73, %v83
  %v145 = vmul.f32 %v74, %v83
  %v146 = vmul.f32 %v75, %v83
  %v147 = vmul.f32 %v76, %v83
  %v148 = vmul.f32 %v77, %v83
  %v149 = vld [vmem:[%s2] sm:$0x1]
  %v151 = vlaneseq
  %v152 = vshrl.u32 %v151, 7
  %v153 = vsub.s32 0, %v152
  %v154 = vrot.slane %v149, %v153
  %v156 = vadd.f32 %v85, %v154
  %v157 = vadd.f32 %v86, %v154
  %v158 = vadd.f32 %v87, %v154
  %v159 = vadd.f32 %v88, %v154
  %v160 = vadd.f32 %v89, %v154
  %v161 = vadd.f32 %v90, %v154
  %v162 = vadd.f32 %v91, %v154
  %v163 = vadd.f32 %v92, %v154
  %v164 = vadd.f32 %v93, %v154
  %v165 = vadd.f32 %v94, %v154
  %v166 = vadd.f32 %v95, %v154
  %v167 = vadd.f32 %v96, %v154
  %v168 = vadd.f32 %v97, %v154
  %v169 = vadd.f32 %v98, %v154
  %v170 = vadd.f32 %v99, %v154
  %v171 = vadd.f32 %v100, %v154
  %v172 = vadd.f32 %v101, %v154
  %v173 = vadd.f32 %v102, %v154
  %v174 = vadd.f32 %v103, %v154
  %v175 = vadd.f32 %v104, %v154
  %v176 = vadd.f32 %v105, %v154
  %v177 = vadd.f32 %v106, %v154
  %v178 = vadd.f32 %v107, %v154
  %v179 = vadd.f32 %v108, %v154
  %v180 = vadd.f32 %v109, %v154
  %v181 = vadd.f32 %v110, %v154
  %v182 = vadd.f32 %v111, %v154
  %v183 = vadd.f32 %v112, %v154
  %v184 = vadd.f32 %v113, %v154
  %v185 = vadd.f32 %v114, %v154
  %v186 = vadd.f32 %v115, %v154
  %v187 = vadd.f32 %v116, %v154
  %v188 = vadd.f32 %v117, %v154
  %v189 = vadd.f32 %v118, %v154
  %v190 = vadd.f32 %v119, %v154
  %v191 = vadd.f32 %v120, %v154
  %v192 = vadd.f32 %v121, %v154
  %v193 = vadd.f32 %v122, %v154
  %v194 = vadd.f32 %v123, %v154
  %v195 = vadd.f32 %v124, %v154
  %v196 = vadd.f32 %v125, %v154
  %v197 = vadd.f32 %v126, %v154
  %v198 = vadd.f32 %v127, %v154
  %v199 = vadd.f32 %v128, %v154
  %v200 = vadd.f32 %v129, %v154
  %v201 = vadd.f32 %v130, %v154
  %v202 = vadd.f32 %v131, %v154
  %v203 = vadd.f32 %v132, %v154
  %v204 = vadd.f32 %v133, %v154
  %v205 = vadd.f32 %v134, %v154
  %v206 = vadd.f32 %v135, %v154
  %v207 = vadd.f32 %v136, %v154
  %v208 = vadd.f32 %v137, %v154
  %v209 = vadd.f32 %v138, %v154
  %v210 = vadd.f32 %v139, %v154
  %v211 = vadd.f32 %v140, %v154
  %v212 = vadd.f32 %v141, %v154
  %v213 = vadd.f32 %v142, %v154
  %v214 = vadd.f32 %v143, %v154
  %v215 = vadd.f32 %v144, %v154
  %v216 = vadd.f32 %v145, %v154
  %v217 = vadd.f32 %v146, %v154
  %v218 = vadd.f32 %v147, %v154
  %v219 = vadd.f32 %v148, %v154
  %v220 = vmax.f32 %v156, 0.0
  %v221 = vmax.f32 %v157, 0.0
  %v222 = vmax.f32 %v158, 0.0
  %v223 = vmax.f32 %v159, 0.0
  %v224 = vmax.f32 %v160, 0.0
  %v225 = vmax.f32 %v161, 0.0
  %v226 = vmax.f32 %v162, 0.0
  %v227 = vmax.f32 %v163, 0.0
  %v228 = vmax.f32 %v164, 0.0
  %v229 = vmax.f32 %v165, 0.0
  %v230 = vmax.f32 %v166, 0.0
  %v231 = vmax.f32 %v167, 0.0
  %v232 = vmax.f32 %v168, 0.0
  %v233 = vmax.f32 %v169, 0.0
  %v234 = vmax.f32 %v170, 0.0
  %v235 = vmax.f32 %v171, 0.0
  %v236 = vmax.f32 %v172, 0.0
  %v237 = vmax.f32 %v173, 0.0
  %v238 = vmax.f32 %v174, 0.0
  %v239 = vmax.f32 %v175, 0.0
  %v240 = vmax.f32 %v176, 0.0
  %v241 = vmax.f32 %v177, 0.0
  %v242 = vmax.f32 %v178, 0.0
  %v243 = vmax.f32 %v179, 0.0
  %v244 = vmax.f32 %v180, 0.0
  %v245 = vmax.f32 %v181, 0.0
  %v246 = vmax.f32 %v182, 0.0
  %v247 = vmax.f32 %v183, 0.0
  %v248 = vmax.f32 %v184, 0.0
  %v249 = vmax.f32 %v185, 0.0
  %v250 = vmax.f32 %v186, 0.0
  %v251 = vmax.f32 %v187, 0.0
  %v252 = vmax.f32 %v188, 0.0
  %v253 = vmax.f32 %v189, 0.0
  %v254 = vmax.f32 %v190, 0.0
  %v255 = vmax.f32 %v191, 0.0
  %v256 = vmax.f32 %v192, 0.0
  %v257 = vmax.f32 %v193, 0.0
  %v258 = vmax.f32 %v194, 0.0
  %v259 = vmax.f32 %v195, 0.0
  %v260 = vmax.f32 %v196, 0.0
  %v261 = vmax.f32 %v197, 0.0
  %v262 = vmax.f32 %v198, 0.0
  %v263 = vmax.f32 %v199, 0.0
  %v264 = vmax.f32 %v200, 0.0
  %v265 = vmax.f32 %v201, 0.0
  %v266 = vmax.f32 %v202, 0.0
  %v267 = vmax.f32 %v203, 0.0
  %v268 = vmax.f32 %v204, 0.0
  %v269 = vmax.f32 %v205, 0.0
  %v270 = vmax.f32 %v206, 0.0
  %v271 = vmax.f32 %v207, 0.0
  %v272 = vmax.f32 %v208, 0.0
  %v273 = vmax.f32 %v209, 0.0
  %v274 = vmax.f32 %v210, 0.0
  %v275 = vmax.f32 %v211, 0.0
  %v276 = vmax.f32 %v212, 0.0
  %v277 = vmax.f32 %v213, 0.0
  %v278 = vmax.f32 %v214, 0.0
  %v279 = vmax.f32 %v215, 0.0
  %v280 = vmax.f32 %v216, 0.0
  %v281 = vmax.f32 %v217, 0.0
  %v282 = vmax.f32 %v218, 0.0
  %v283 = vmax.f32 %v219, 0.0
  %vm284 = vcmask 261120
  %285 = vst.msk [vmem:[%s3] sm:$0xff] %vm284, %v220
  %286 = vst.msk [vmem:[%s3 + $0x8] sm:$0xff] %vm284, %v221
  %287 = vst.msk [vmem:[%s3 + $0x10] sm:$0xff] %vm284, %v222
  %288 = vst.msk [vmem:[%s3 + $0x18] sm:$0xff] %vm284, %v223
  %289 = vst.msk [vmem:[%s3 + $0x20] sm:$0xff] %vm284, %v224
  %290 = vst.msk [vmem:[%s3 + $0x28] sm:$0xff] %vm284, %v225
  %291 = vst.msk [vmem:[%s3 + $0x30] sm:$0xff] %vm284, %v226
  %292 = vst.msk [vmem:[%s3 + $0x38] sm:$0xff] %vm284, %v227
  %293 = vst.msk [vmem:[%s3 + $0x40] sm:$0xff] %vm284, %v228
  %294 = vst.msk [vmem:[%s3 + $0x48] sm:$0xff] %vm284, %v229
  %295 = vst.msk [vmem:[%s3 + $0x50] sm:$0xff] %vm284, %v230
  %296 = vst.msk [vmem:[%s3 + $0x58] sm:$0xff] %vm284, %v231
  %297 = vst.msk [vmem:[%s3 + $0x60] sm:$0xff] %vm284, %v232
  %298 = vst.msk [vmem:[%s3 + $0x68] sm:$0xff] %vm284, %v233
  %299 = vst.msk [vmem:[%s3 + $0x70] sm:$0xff] %vm284, %v234
  %300 = vst.msk [vmem:[%s3 + $0x78] sm:$0xff] %vm284, %v235
  %301 = vst.msk [vmem:[%s3 + $0x80] sm:$0xff] %vm284, %v236
  %302 = vst.msk [vmem:[%s3 + $0x88] sm:$0xff] %vm284, %v237
  %303 = vst.msk [vmem:[%s3 + $0x90] sm:$0xff] %vm284, %v238
  %304 = vst.msk [vmem:[%s3 + $0x98] sm:$0xff] %vm284, %v239
  %305 = vst.msk [vmem:[%s3 + $0xa0] sm:$0xff] %vm284, %v240
  %306 = vst.msk [vmem:[%s3 + $0xa8] sm:$0xff] %vm284, %v241
  %307 = vst.msk [vmem:[%s3 + $0xb0] sm:$0xff] %vm284, %v242
  %308 = vst.msk [vmem:[%s3 + $0xb8] sm:$0xff] %vm284, %v243
  %309 = vst.msk [vmem:[%s3 + $0xc0] sm:$0xff] %vm284, %v244
  %310 = vst.msk [vmem:[%s3 + $0xc8] sm:$0xff] %vm284, %v245
  %311 = vst.msk [vmem:[%s3 + $0xd0] sm:$0xff] %vm284, %v246
  %312 = vst.msk [vmem:[%s3 + $0xd8] sm:$0xff] %vm284, %v247
  %313 = vst.msk [vmem:[%s3 + $0xe0] sm:$0xff] %vm284, %v248
  %314 = vst.msk [vmem:[%s3 + $0xe8] sm:$0xff] %vm284, %v249
  %315 = vst.msk [vmem:[%s3 + $0xf0] sm:$0xff] %vm284, %v250
  %316 = vst.msk [vmem:[%s3 + $0xf8] sm:$0xff] %vm284, %v251
  %317 = vst.msk [vmem:[%s3 + $0x100] sm:$0xff] %vm284, %v252
  %318 = vst.msk [vmem:[%s3 + $0x108] sm:$0xff] %vm284, %v253
  %319 = vst.msk [vmem:[%s3 + $0x110] sm:$0xff] %vm284, %v254
  %320 = vst.msk [vmem:[%s3 + $0x118] sm:$0xff] %vm284, %v255
  %321 = vst.msk [vmem:[%s3 + $0x120] sm:$0xff] %vm284, %v256
  %322 = vst.msk [vmem:[%s3 + $0x128] sm:$0xff] %vm284, %v257
  %323 = vst.msk [vmem:[%s3 + $0x130] sm:$0xff] %vm284, %v258
  %324 = vst.msk [vmem:[%s3 + $0x138] sm:$0xff] %vm284, %v259
  %325 = vst.msk [vmem:[%s3 + $0x140] sm:$0xff] %vm284, %v260
  %326 = vst.msk [vmem:[%s3 + $0x148] sm:$0xff] %vm284, %v261
  %327 = vst.msk [vmem:[%s3 + $0x150] sm:$0xff] %vm284, %v262
  %328 = vst.msk [vmem:[%s3 + $0x158] sm:$0xff] %vm284, %v263
  %329 = vst.msk [vmem:[%s3 + $0x160] sm:$0xff] %vm284, %v264
  %330 = vst.msk [vmem:[%s3 + $0x168] sm:$0xff] %vm284, %v265
  %331 = vst.msk [vmem:[%s3 + $0x170] sm:$0xff] %vm284, %v266
  %332 = vst.msk [vmem:[%s3 + $0x178] sm:$0xff] %vm284, %v267
  %333 = vst.msk [vmem:[%s3 + $0x180] sm:$0xff] %vm284, %v268
  %334 = vst.msk [vmem:[%s3 + $0x188] sm:$0xff] %vm284, %v269
  %335 = vst.msk [vmem:[%s3 + $0x190] sm:$0xff] %vm284, %v270
  %336 = vst.msk [vmem:[%s3 + $0x198] sm:$0xff] %vm284, %v271
  %337 = vst.msk [vmem:[%s3 + $0x1a0] sm:$0xff] %vm284, %v272
  %338 = vst.msk [vmem:[%s3 + $0x1a8] sm:$0xff] %vm284, %v273
  %339 = vst.msk [vmem:[%s3 + $0x1b0] sm:$0xff] %vm284, %v274
  %340 = vst.msk [vmem:[%s3 + $0x1b8] sm:$0xff] %vm284, %v275
  %341 = vst.msk [vmem:[%s3 + $0x1c0] sm:$0xff] %vm284, %v276
  %342 = vst.msk [vmem:[%s3 + $0x1c8] sm:$0xff] %vm284, %v277
  %343 = vst.msk [vmem:[%s3 + $0x1d0] sm:$0xff] %vm284, %v278
  %344 = vst.msk [vmem:[%s3 + $0x1d8] sm:$0xff] %vm284, %v279
  %345 = vst.msk [vmem:[%s3 + $0x1e0] sm:$0xff] %vm284, %v280
  %346 = vst.msk [vmem:[%s3 + $0x1e8] sm:$0xff] %vm284, %v281
  %347 = vst.msk [vmem:[%s3 + $0x1f0] sm:$0xff] %vm284, %v282
  %348 = vst.msk [vmem:[%s3 + $0x1f8] sm:$0xff] %vm284, %v283
  // Predicated region
  $region14: #{bottleneck_forward.13} parent=0 // pred_check
    _
  $region15: #{bottleneck_forward.13} parent=0 // pred_check_branch
    %350 = sbr.rel (0) target = $region17
  $region16: #{bottleneck_forward.13} parent=0 // pred_region
    _
  $region17: #{bottleneck_forward.13} parent=0 // pred_fallthru
    _
  // Predicated region
  $region18: #{bottleneck_forward.13} parent=0 // pred_check
    _
  $region19: #{bottleneck_forward.13} parent=0 // pred_check_branch
    %352 = sbr.rel (0) target = $region21
  $region20: #{bottleneck_forward.13} parent=0 // pred_region
    _
  $region21: #{bottleneck_forward.13} parent=0 // pred_fallthru
    _

// kernel: bottleneck_forward.11
$region0: #{bottleneck_forward.11}
  #allocation0 [shape = 'u32[]', space=smem, size = 0x4, offset = 0x4, fixed_abs, tag = 'smem constant byte address 0x4 - core index']
  #allocation1 [shape = 'u32[144,128]{1,0:T(1,128)}', space=vmem, size = 0x12000, scoped, tag = 'internal scratch']
  #allocation2 [shape = 'f32[256,128]{1,0:T(8,128)}', space=vmem, size = 0x20000, scoped, tag = 'scratch operand']
  %s0 = inlined_call_operand.vmem [shape: bf16[512,128], index: 0, kind: input, shape index: {}]
  %s1 = inlined_call_operand.vmem [shape: bf16[128,128], index: 1, kind: input, shape index: {}]
  %s2 = inlined_call_operand.vmem [shape: f32[512,128], index: 2, kind: output, shape index: {}]
  %s3 = sld [smem:[#allocation0]]
  $region49: #{bottleneck_forward.11} parent=0
    _
  %s5 = ssub.s32 1, %s3
  %s6 = scalar_select 0, %s5, %s3
  loop: start=0, step=1, limit=4
  $region2: #{bottleneck_forward.11} parent=0 // loop_pre_header
    _
  $region3: #{bottleneck_forward.11} parent=0 // loop_header
    %s8 = sphi 0, %s12
    %p9 = scmp.ge.s32.totalorder %s8, 4
    %s15 = sphi 0, %s34
    %s16 = sphi 0, %s30
    %s17 = sphi 0, %s26
    %s18 = sphi 0, %s15
    %s19 = sphi 0, %s16
    %s20 = sphi 0, %s17
    %s21 = sphi 0, %s18
    %s22 = sphi 0, %s19
    %s23 = sphi 0, %s20
    %s39 = sphi 0, %s41
    %s42 = sphi 0, %s39
    %s43 = sphi 0, %s42
    %s59 = sphi 0, %s43
    %s67 = sphi 0, %s69
    %s70 = sphi 0, %s67
    %s71 = sphi 0, %s70
    %s87 = sphi 0, %s71
    %s95 = sphi 0, %s97
    %s98 = sphi 0, %s95
    %s99 = sphi 0, %s98
    %s115 = sphi 0, %s99
  $region4: #{bottleneck_forward.11} parent=0 // loop_header_branch
    %11 = sbr.rel (%p9) target = $region8
  $region5: #{bottleneck_forward.11} parent=0 // loop_body
    %s13 = ssub.s32 %s8, 1
    %s14 = ssub.s32 %s8, 2
    %s24 = sadd.s32 1, %s17
    %p25 = scmp.ge.s32.totalorder %s24, 1
    %s26 = scalar_select %p25, 0, %s24
    %s27 = sadd.s32 1, %s16
    %s28 = scalar_select %p25, %s27, %s16
    %p29 = scmp.ge.s32.totalorder %s28, 1
    %s30 = scalar_select %p29, 0, %s28
    %s31 = sadd.s32 1, %s15
    %s32 = scalar_select %p29, %s31, %s15
    %p33 = scmp.ge.s32.totalorder %s32, 2
    %s34 = scalar_select %p33, 0, %s32
    %s35 = ssub.s32 %s15, %s34
    %s36 = ssub.s32 %s17, %s26
    %s37 = sor.u32 %s35, %s36
    %p38 = scmp.eq.s32.totalorder %s37, 0
    %s40 = sadd.s32 %s39, 1
    %s41 = scalar_select %p38, %s39, %s40
    %p44 = pneg %p38
    %p45 = scmp.eq.s32.totalorder %s8, 1
    %p46 = por %p44, %p45
    %p47 = scmp.ne.s32.totalorder %s39, %s42
    %p48 = scmp.eq.s32.totalorder %s8, 0
    %p49 = por %p47, %p48
    %p50 = scmp.ne.s32.totalorder %s39, %s42
    %p51 = scmp.eq.s32.totalorder %s13, 1
    %p52 = por %p50, %p51
    %p53 = scmp.ne.s32.totalorder %s42, %s43
    %p54 = scmp.eq.s32.totalorder %s13, 0
    %p55 = por %p53, %p54
    %p56 = scmp.ne.s32.totalorder %s42, %s43
    %p57 = scmp.eq.s32.totalorder %s14, 1
    %p58 = por %p56, %p57
    %p60 = scmp.ne.s32.totalorder %s43, %s59
    %p61 = scmp.eq.s32.totalorder %s14, 0
    %p62 = por %p60, %p61
    %s63 = ssub.s32 %s17, %s26
    %s64 = ssub.s32 %s16, %s30
    %s65 = sor.u32 %s63, %s64
    %p66 = scmp.eq.s32.totalorder %s65, 0
    %s68 = sadd.s32 %s67, 1
    %s69 = scalar_select %p66, %s67, %s68
    %p72 = pneg %p66
    %p73 = scmp.eq.s32.totalorder %s8, 1
    %p74 = por %p72, %p73
    %p75 = scmp.ne.s32.totalorder %s67, %s70
    %p76 = scmp.eq.s32.totalorder %s8, 0
    %p77 = por %p75, %p76
    %p78 = scmp.ne.s32.totalorder %s67, %s70
    %p79 = scmp.eq.s32.totalorder %s13, 1
    %p80 = por %p78, %p79
    %p81 = scmp.ne.s32.totalorder %s70, %s71
    %p82 = scmp.eq.s32.totalorder %s13, 0
    %p83 = por %p81, %p82
    %p84 = scmp.ne.s32.totalorder %s70, %s71
    %p85 = scmp.eq.s32.totalorder %s14, 1
    %p86 = por %p84, %p85
    %p88 = scmp.ne.s32.totalorder %s71, %s87
    %p89 = scmp.eq.s32.totalorder %s14, 0
    %p90 = por %p88, %p89
    %s91 = ssub.s32 %s15, %s34
    %s92 = ssub.s32 %s16, %s30
    %s93 = sor.u32 %s91, %s92
    %p94 = scmp.eq.s32.totalorder %s93, 0
    %s96 = sadd.s32 %s95, 1
    %s97 = scalar_select %p94, %s95, %s96
    %p100 = pneg %p94
    %p101 = scmp.eq.s32.totalorder %s8, 1
    %p102 = por %p100, %p101
    %p103 = scmp.ne.s32.totalorder %s95, %s98
    %p104 = scmp.eq.s32.totalorder %s8, 0
    %p105 = por %p103, %p104
    %p106 = scmp.ne.s32.totalorder %s95, %s98
    %p107 = scmp.eq.s32.totalorder %s13, 1
    %p108 = por %p106, %p107
    %p109 = scmp.ne.s32.totalorder %s98, %s99
    %p110 = scmp.eq.s32.totalorder %s13, 0
    %p111 = por %p109, %p110
    %p112 = scmp.ne.s32.totalorder %s98, %s99
    %p113 = scmp.eq.s32.totalorder %s14, 1
    %p114 = por %p112, %p113
    %p116 = scmp.ne.s32.totalorder %s99, %s115
    %p117 = scmp.eq.s32.totalorder %s14, 0
    %p118 = por %p116, %p117
    %p119 = scmp.le.s32.totalorder 1, %s8
    %p120 = scmp.lt.s32.totalorder %s8, 3
    %p121 = pnand %p119, %p120
    %p122 = pneg %p121
    // Predicated region
    $region9: #{bottleneck_forward.11} parent=5 // pred_check
      _
    $region10: #{bottleneck_forward.11} parent=5 // pred_check_branch
      %124 = sbr.rel (%p121) target = $region12
    $region11: #{bottleneck_forward.11} parent=5 // pred_region
      %s125 = ssub.s32 %s8, 1
      // Predicated region
      $region13: #{bottleneck_forward.11} parent=11 // pred_check
        %p126 = pneg %p83
      $region14: #{bottleneck_forward.11} parent=11 // pred_check_branch
        %128 = sbr.rel (%p126) target = $region16
      $region15: #{bottleneck_forward.11} parent=11 // pred_region
        %s129 = smul.u32 16, %s20
        %p130 = scmp.lt.s32.totalorder %s129, 15
        %s131 = scalar_select %p130, %s129, 15
        %p132 = scmp.lt.s32.totalorder %s19, 0
        %s133 = scalar_select %p132, %s19, 0
        %s134 = sadd.s32 %s133, %s131
        %s135 = smul.addr %s134, 4
        %s136 = scalar_lea.vmem %s1, %s135
        %s137 = smul.u32 16, %s20
      $region16: #{bottleneck_forward.11} parent=11 // pred_fallthru
        _
    $region12: #{bottleneck_forward.11} parent=5 // pred_fallthru
      _
    %p138 = scmp.lt.s32.totalorder %s8, 2
    // Predicated region
    $region17: #{bottleneck_forward.11} parent=5 // pred_check
      %p139 = pneg %p138
    $region18: #{bottleneck_forward.11} parent=5 // pred_check_branch
      %141 = sbr.rel (%p139) target = $region20
    $region19: #{bottleneck_forward.11} parent=5 // pred_region
      // Predicated region
      $region21: #{bottleneck_forward.11} parent=19 // pred_check
        %p142 = pneg %p49
      $region22: #{bottleneck_forward.11} parent=19 // pred_check_branch
        %144 = sbr.rel (%p142) target = $region24
      $region23: #{bottleneck_forward.11} parent=19 // pred_region
        %s145 = smul.u32 32, %s15
        %p146 = scmp.lt.s32.totalorder %s145, 63
        %s147 = scalar_select %p146, %s145, 63
        %p148 = scmp.lt.s32.totalorder %s17, 0
        %s149 = scalar_select %p148, %s17, 0
        %s150 = sadd.s32 %s149, %s147
        %s151 = smul.addr %s150, 4
        %s152 = scalar_lea.vmem %s0, %s151
        %s153 = smul.u32 32, %s15
      $region24: #{bottleneck_forward.11} parent=19 // pred_fallthru
        _
    $region20: #{bottleneck_forward.11} parent=5 // pred_fallthru
      _
    %p154 = scmp.le.s32.totalorder 1, %s8
    %p155 = scmp.lt.s32.totalorder %s8, 3
    %p156 = pnand %p154, %p155
    %p157 = pneg %p156
    // Predicated region
    $region25: #{bottleneck_forward.11} parent=5 // pred_check
      _
    $region26: #{bottleneck_forward.11} parent=5 // pred_check_branch
      %159 = sbr.rel (%p156) target = $region28
    $region27: #{bottleneck_forward.11} parent=5 // pred_region
      %s160 = ssub.s32 %s8, 1
      %s161 = smul.u32 32, %s18
      %p162 = scmp.lt.s32.totalorder %s161, 63
      %s163 = scalar_select %p162, %s161, 63
      %p164 = scmp.lt.s32.totalorder %s20, 0
      %s165 = scalar_select %p164, %s20, 0
      %s166 = sadd.s32 %s165, %s163
      %s167 = smul.addr %s166, 4
      %s168 = scalar_lea.vmem %s0, %s167
      %p169 = pneg %p55
      %p170 = pneg %p52
      %s171 = smul.u32 16, %s20
      %p172 = scmp.lt.s32.totalorder %s171, 15
      %s173 = scalar_select %p172, %s171, 15
      %p174 = scmp.lt.s32.totalorder %s19, 0
      %s175 = scalar_select %p174, %s19, 0
      %s176 = sadd.s32 %s175, %s173
      %s177 = smul.addr %s176, 4
      %s178 = scalar_lea.vmem %s1, %s177
      %p179 = pneg %p83
      %p180 = pneg %p80
      %p181 = pneg %p111
      %p182 = pneg %p108
      %s183 = smul.u32 32, %s18
      %p184 = scmp.lt.s32.totalorder %s183, 63
      %s185 = scalar_select %p184, %s183, 63
      %p186 = scmp.lt.s32.totalorder %s19, 0
      %s187 = scalar_select %p186, %s19, 0
      %s188 = sadd.s32 %s187, %s185
      %s189 = smul.addr %s188, 8
      %s190 = scalar_lea.vmem %s2, %s189
      %s191 = smul.u32 32, %s18
      %p192 = scmp.lt.s32.totalorder %s191, 63
      %s193 = scalar_select %p192, %s191, 63
      %p194 = scmp.lt.s32.totalorder %s20, 0
      %s195 = scalar_select %p194, %s20, 0
      %s196 = sadd.s32 %s195, %s193
      %s197 = smul.addr %s196, 4
      %s198 = scalar_lea.vmem %s0, %s197
      %s199 = smul.u32 32, %s18
      %s200 = smul.u32 16, %s20
      %p201 = scmp.lt.s32.totalorder %s200, 15
      %s202 = scalar_select %p201, %s200, 15
      %p203 = scmp.lt.s32.totalorder %s19, 0
      %s204 = scalar_select %p203, %s19, 0
      %s205 = sadd.s32 %s204, %s202
      %s206 = smul.addr %s205, 4
      %s207 = scalar_lea.vmem %s1, %s206
      %s208 = smul.u32 16, %s20
      %s209 = smul.u32 32, %s18
      %p210 = scmp.lt.s32.totalorder %s209, 63
      %s211 = scalar_select %p210, %s209, 63
      %p212 = scmp.lt.s32.totalorder %s19, 0
      %s213 = scalar_select %p212, %s19, 0
      %s214 = sadd.s32 %s213, %s211
      %s215 = smul.addr %s214, 8
      %s216 = scalar_lea.vmem %s2, %s215
      %s217 = smul.u32 32, %s18
      %p219 = scmp.eq.s32.totalorder %s20, 0
      // Predicated region
      $region29: #{bottleneck_forward.11} parent=27 // pred_check
        %p220 = pneg %p219
      $region30: #{bottleneck_forward.11} parent=27 // pred_check_branch
        %222 = sbr.rel (%p220) target = $region32
      $region31: #{bottleneck_forward.11} parent=27 // pred_region
        %223 = vst [vmem:[#allocation2] sm:$0xff] 0.0
        %224 = vst [vmem:[#allocation2 + $0x8] sm:$0xff] 0.0
        %225 = vst [vmem:[#allocation2 + $0x10] sm:$0xff] 0.0
        %226 = vst [vmem:[#allocation2 + $0x18] sm:$0xff] 0.0
        %227 = vst [vmem:[#allocation2 + $0x20] sm:$0xff] 0.0
        %228 = vst [vmem:[#allocation2 + $0x28] sm:$0xff] 0.0
        %229 = vst [vmem:[#allocation2 + $0x30] sm:$0xff] 0.0
        %230 = vst [vmem:[#allocation2 + $0x38] sm:$0xff] 0.0
        %231 = vst [vmem:[#allocation2 + $0x40] sm:$0xff] 0.0
        %232 = vst [vmem:[#allocation2 + $0x48] sm:$0xff] 0.0
        %233 = vst [vmem:[#allocation2 + $0x50] sm:$0xff] 0.0
        %234 = vst [vmem:[#allocation2 + $0x58] sm:$0xff] 0.0
        %235 = vst [vmem:[#allocation2 + $0x60] sm:$0xff] 0.0
        %236 = vst [vmem:[#allocation2 + $0x68] sm:$0xff] 0.0
        %237 = vst [vmem:[#allocation2 + $0x70] sm:$0xff] 0.0
        %238 = vst [vmem:[#allocation2 + $0x78] sm:$0xff] 0.0
        %239 = vst [vmem:[#allocation2 + $0x80] sm:$0xff] 0.0
        %240 = vst [vmem:[#allocation2 + $0x88] sm:$0xff] 0.0
        %241 = vst [vmem:[#allocation2 + $0x90] sm:$0xff] 0.0
        %242 = vst [vmem:[#allocation2 + $0x98] sm:$0xff] 0.0
        %243 = vst [vmem:[#allocation2 + $0xa0] sm:$0xff] 0.0
        %244 = vst [vmem:[#allocation2 + $0xa8] sm:$0xff] 0.0
        %245 = vst [vmem:[#allocation2 + $0xb0] sm:$0xff] 0.0
        %246 = vst [vmem:[#allocation2 + $0xb8] sm:$0xff] 0.0
        %247 = vst [vmem:[#allocation2 + $0xc0] sm:$0xff] 0.0
        %248 = vst [vmem:[#allocation2 + $0xc8] sm:$0xff] 0.0
        %249 = vst [vmem:[#allocation2 + $0xd0] sm:$0xff] 0.0
        %250 = vst [vmem:[#allocation2 + $0xd8] sm:$0xff] 0.0
        %251 = vst [vmem:[#allocation2 + $0xe0] sm:$0xff] 0.0
        %252 = vst [vmem:[#allocation2 + $0xe8] sm:$0xff] 0.0
        %253 = vst [vmem:[#allocation2 + $0xf0] sm:$0xff] 0.0
        %254 = vst [vmem:[#allocation2 + $0xf8] sm:$0xff] 0.0
      $region32: #{bottleneck_forward.11} parent=27 // pred_fallthru
        _
      %v255 = vld [vmem:[#allocation2] sm:$0xff]
      %v256 = vld [vmem:[#allocation2 + $0x8] sm:$0xff]
      %v257 = vld [vmem:[#allocation2 + $0x10] sm:$0xff]
      %v258 = vld [vmem:[#allocation2 + $0x18] sm:$0xff]
      %v259 = vld [vmem:[#allocation2 + $0x20] sm:$0xff]
      %v260 = vld [vmem:[#allocation2 + $0x28] sm:$0xff]
      %v261 = vld [vmem:[#allocation2 + $0x30] sm:$0xff]
      %v262 = vld [vmem:[#allocation2 + $0x38] sm:$0xff]
      %v263 = vld [vmem:[#allocation2 + $0x40] sm:$0xff]
      %v264 = vld [vmem:[#allocation2 + $0x48] sm:$0xff]
      %v265 = vld [vmem:[#allocation2 + $0x50] sm:$0xff]
      %v266 = vld [vmem:[#allocation2 + $0x58] sm:$0xff]
      %v267 = vld [vmem:[#allocation2 + $0x60] sm:$0xff]
      %v268 = vld [vmem:[#allocation2 + $0x68] sm:$0xff]
      %v269 = vld [vmem:[#allocation2 + $0x70] sm:$0xff]
      %v270 = vld [vmem:[#allocation2 + $0x78] sm:$0xff]
      %v271 = vld [vmem:[#allocation2 + $0x80] sm:$0xff]
      %v272 = vld [vmem:[#allocation2 + $0x88] sm:$0xff]
      %v273 = vld [vmem:[#allocation2 + $0x90] sm:$0xff]
      %v274 = vld [vmem:[#allocation2 + $0x98] sm:$0xff]
      %v275 = vld [vmem:[#allocation2 + $0xa0] sm:$0xff]
      %v276 = vld [vmem:[#allocation2 + $0xa8] sm:$0xff]
      %v277 = vld [vmem:[#allocation2 + $0xb0] sm:$0xff]
      %v278 = vld [vmem:[#allocation2 + $0xb8] sm:$0xff]
      %v279 = vld [vmem:[#allocation2 + $0xc0] sm:$0xff]
      %v280 = vld [vmem:[#allocation2 + $0xc8] sm:$0xff]
      %v281 = vld [vmem:[#allocation2 + $0xd0] sm:$0xff]
      %v282 = vld [vmem:[#allocation2 + $0xd8] sm:$0xff]
      %v283 = vld [vmem:[#allocation2 + $0xe0] sm:$0xff]
      %v284 = vld [vmem:[#allocation2 + $0xe8] sm:$0xff]
      %v285 = vld [vmem:[#allocation2 + $0xf0] sm:$0xff]
      %v286 = vld [vmem:[#allocation2 + $0xf8] sm:$0xff]
      %v287 = vld [vmem:[%s198] sm:$0xf]
      %v288 = vld [vmem:[%s198 + $0x4] sm:$0xf]
      %v289 = vld [vmem:[%s198 + $0x8] sm:$0xf]
      %v290 = vld [vmem:[%s198 + $0xc] sm:$0xf]
      %v291 = vld [vmem:[%s198 + $0x10] sm:$0xf]
      %v292 = vld [vmem:[%s198 + $0x14] sm:$0xf]
      %v293 = vld [vmem:[%s198 + $0x18] sm:$0xf]
      %v294 = vld [vmem:[%s198 + $0x1c] sm:$0xf]
      %v295 = vld [vmem:[%s198 + $0x20] sm:$0xf]
      %v296 = vld [vmem:[%s198 + $0x24] sm:$0xf]
      %v297 = vld [vmem:[%s198 + $0x28] sm:$0xf]
      %v298 = vld [vmem:[%s198 + $0x2c] sm:$0xf]
      %v299 = vld [vmem:[%s198 + $0x30] sm:$0xf]
      %v300 = vld [vmem:[%s198 + $0x34] sm:$0xf]
      %v301 = vld [vmem:[%s198 + $0x38] sm:$0xf]
      %v302 = vld [vmem:[%s198 + $0x3c] sm:$0xf]
      %v303 = vld [vmem:[%s198 + $0x40] sm:$0xf]
      %v304 = vld [vmem:[%s198 + $0x44] sm:$0xf]
      %v305 = vld [vmem:[%s198 + $0x48] sm:$0xf]
      %v306 = vld [vmem:[%s198 + $0x4c] sm:$0xf]
      %v307 = vld [vmem:[%s198 + $0x50] sm:$0xf]
      %v308 = vld [vmem:[%s198 + $0x54] sm:$0xf]
      %v309 = vld [vmem:[%s198 + $0x58] sm:$0xf]
      %v310 = vld [vmem:[%s198 + $0x5c] sm:$0xf]
      %v311 = vld [vmem:[%s198 + $0x60] sm:$0xf]
      %v312 = vld [vmem:[%s198 + $0x64] sm:$0xf]
      %v313 = vld [vmem:[%s198 + $0x68] sm:$0xf]
      %v314 = vld [vmem:[%s198 + $0x6c] sm:$0xf]
      %v315 = vld [vmem:[%s198 + $0x70] sm:$0xf]
      %v316 = vld [vmem:[%s198 + $0x74] sm:$0xf]
      %v317 = vld [vmem:[%s198 + $0x78] sm:$0xf]
      %v318 = vld [vmem:[%s198 + $0x7c] sm:$0xf]
      %v319 = vld [vmem:[%s207] sm:$0xf]
      %v320 = vld [vmem:[%s207 + $0x4] sm:$0xf]
      %v321 = vld [vmem:[%s207 + $0x8] sm:$0xf]
      %v322 = vld [vmem:[%s207 + $0xc] sm:$0xf]
      %v323 = vld [vmem:[%s207 + $0x10] sm:$0xf]
      %v324 = vld [vmem:[%s207 + $0x14] sm:$0xf]
      %v325 = vld [vmem:[%s207 + $0x18] sm:$0xf]
      %v326 = vld [vmem:[%s207 + $0x1c] sm:$0xf]
      %v327 = vld [vmem:[%s207 + $0x20] sm:$0xf]
      %v328 = vld [vmem:[%s207 + $0x24] sm:$0xf]
      %v329 = vld [vmem:[%s207 + $0x28] sm:$0xf]
      %v330 = vld [vmem:[%s207 + $0x2c] sm:$0xf]
      %v331 = vld [vmem:[%s207 + $0x30] sm:$0xf]
      %v332 = vld [vmem:[%s207 + $0x34] sm:$0xf]
      %v333 = vld [vmem:[%s207 + $0x38] sm:$0xf]
      %v334 = vld [vmem:[%s207 + $0x3c] sm:$0xf]
      %v367 = vunpack.c.l.b16 %v287
      %v368 = vunpack.c.l.b16 %v288
      %v369 = vunpack.c.l.b16 %v289
      %v370 = vunpack.c.l.b16 %v290
      %v371 = vunpack.c.l.b16 %v291
      %v372 = vunpack.c.l.b16 %v292
      %v373 = vunpack.c.l.b16 %v293
      %v374 = vunpack.c.l.b16 %v294
      %v375 = vunpack.c.l.b16 %v295
      %v376 = vunpack.c.l.b16 %v296
      %v377 = vunpack.c.l.b16 %v297
      %v378 = vunpack.c.l.b16 %v298
      %v379 = vunpack.c.l.b16 %v299
      %v380 = vunpack.c.l.b16 %v300
      %v381 = vunpack.c.l.b16 %v301
      %v382 = vunpack.c.l.b16 %v302
      %v383 = vunpack.c.l.b16 %v303
      %v384 = vunpack.c.l.b16 %v304
      %v385 = vunpack.c.l.b16 %v305
      %v386 = vunpack.c.l.b16 %v306
      %v387 = vunpack.c.l.b16 %v307
      %v388 = vunpack.c.l.b16 %v308
      %v389 = vunpack.c.l.b16 %v309
      %v390 = vunpack.c.l.b16 %v310
      %v391 = vunpack.c.l.b16 %v311
      %v392 = vunpack.c.l.b16 %v312
      %v393 = vunpack.c.l.b16 %v313
      %v394 = vunpack.c.l.b16 %v314
      %v395 = vunpack.c.l.b16 %v315
      %v396 = vunpack.c.l.b16 %v316
      %v397 = vunpack.c.l.b16 %v317
      %v398 = vunpack.c.l.b16 %v318
      %v399 = vpack.c.b16 %v368, %v367
      %v400 = vpack.c.b16 %v370, %v369
      %v401 = vpack.c.b16 %v372, %v371
      %v402 = vpack.c.b16 %v374, %v373
      %v403 = vpack.c.b16 %v376, %v375
      %v404 = vpack.c.b16 %v378, %v377
      %v405 = vpack.c.b16 %v380, %v379
      %v406 = vpack.c.b16 %v382, %v381
      %v407 = vpack.c.b16 %v384, %v383
      %v408 = vpack.c.b16 %v386, %v385
      %v409 = vpack.c.b16 %v388, %v387
      %v410 = vpack.c.b16 %v390, %v389
      %v411 = vpack.c.b16 %v392, %v391
      %v412 = vpack.c.b16 %v394, %v393
      %v413 = vpack.c.b16 %v396, %v395
      %v414 = vpack.c.b16 %v398, %v397
      %v447 = vunpack.c.l.b16 %v319
      %v448 = vunpack.c.l.b16 %v320
      %v449 = vunpack.c.l.b16 %v321
      %v450 = vunpack.c.l.b16 %v322
      %v451 = vunpack.c.l.b16 %v323
      %v452 = vunpack.c.l.b16 %v324
      %v453 = vunpack.c.l.b16 %v325
      %v454 = vunpack.c.l.b16 %v326
      %v455 = vunpack.c.l.b16 %v327
      %v456 = vunpack.c.l.b16 %v328
      %v457 = vunpack.c.l.b16 %v329
      %v458 = vunpack.c.l.b16 %v330
      %v459 = vunpack.c.l.b16 %v331
      %v460 = vunpack.c.l.b16 %v332
      %v461 = vunpack.c.l.b16 %v333
      %v462 = vunpack.c.l.b16 %v334
      %v463 = vpack.c.b16 %v448, %v447
      %v464 = vpack.c.b16 %v450, %v449
      %v465 = vpack.c.b16 %v452, %v451
      %v466 = vpack.c.b16 %v454, %v453
      %v467 = vpack.c.b16 %v456, %v455
      %v468 = vpack.c.b16 %v458, %v457
      %v469 = vpack.c.b16 %v460, %v459
      %v470 = vpack.c.b16 %v462, %v461
      %479 = vmatprep.subr.bf16.mxu0 0
      %480 = vmatpush1.bf16.msra.mxu0 %v470
      %481 = vmatprep.subr.bf16.mxu0 0
      %482 = vmatpush1.bf16.msra.mxu0 %v469
      %483 = vmatprep.subr.bf16.mxu0 0
      %484 = vmatpush1.bf16.msra.mxu0 %v468
      %485 = vmatprep.subr.bf16.mxu0 0
      %486 = vmatpush1.bf16.msra.mxu0 %v467
      %487 = vmatprep.subr.bf16.mxu0 0
      %488 = vmatpush1.bf16.msra.mxu0 %v466
      %489 = vmatprep.subr.bf16.mxu0 0
      %490 = vmatpush1.bf16.msra.mxu0 %v465
      %491 = vmatprep.subr.bf16.mxu0 0
      %492 = vmatpush1.bf16.msra.mxu0 %v464
      %493 = vmatprep.subr.bf16.mxu0 0
      %494 = vmatpush1.bf16.msra.mxu0 %v463
      %495 = vmatprep.subr.bf16.mxu0 0
      %496 = vmatpush2.bf16.msra.mxu0 0
      %497 = vmatprep.subr.bf16.mxu0 0
      %498 = vmatpush2.bf16.msra.mxu0 0
      %499 = vmatprep.subr.bf16.mxu0 0
      %500 = vmatpush2.bf16.msra.mxu0 0
      %501 = vmatprep.subr.bf16.mxu0 0
      %502 = vmatpush2.bf16.msra.mxu0 0
      %503 = vmatprep.subr.bf16.mxu0 0
      %504 = vmatpush2.bf16.msra.mxu0 0
      %505 = vmatprep.subr.bf16.mxu0 0
      %506 = vmatpush2.bf16.msra.mxu0 0
      %507 = vmatprep.subr.bf16.mxu0 0
      %508 = vmatpush2.bf16.msra.mxu0 0
      %509 = vmatprep.subr.bf16.mxu0 0
      %510 = vmatpush2.bf16.msra.mxu0 0
      %511 = vmatprep.mubr.bf16.mxu0 0
      %512 = vmatmul.mubr.bf16.gmra.mxu0 %v399
      %v513 = vpop.f32.mrf.mxu0
      %v514 = vadd.f32 0.0, %v513
      %v515 = vpop.f32.mrf.mxu0
      %v516 = vpop.f32.mrf.mxu0
      %v517 = vadd.f32 0.0, %v516
      %v518 = vpop.f32.mrf.mxu0
      %519 = vmatprep.mubr.bf16.mxu0 0
      %520 = vmatmul.mubr.bf16.gmra.mxu0 %v400
      %v521 = vpop.f32.mrf.mxu0
      %v522 = vadd.f32 0.0, %v521
      %v523 = vpop.f32.mrf.mxu0
      %v524 = vpop.f32.mrf.mxu0
      %v525 = vadd.f32 0.0, %v524
      %v526 = vpop.f32.mrf.mxu0
      %527 = vmatprep.mubr.bf16.mxu0 0
      %528 = vmatmul.mubr.bf16.gmra.mxu0 %v401
      %v529 = vpop.f32.mrf.mxu0
      %v530 = vadd.f32 0.0, %v529
      %v531 = vpop.f32.mrf.mxu0
      %v532 = vpop.f32.mrf.mxu0
      %v533 = vadd.f32 0.0, %v532
      %v534 = vpop.f32.mrf.mxu0
      %535 = vmatprep.mubr.bf16.mxu0 0
      %536 = vmatmul.mubr.bf16.gmra.mxu0 %v402
      %v537 = vpop.f32.mrf.mxu0
      %v538 = vadd.f32 0.0, %v537
      %v539 = vpop.f32.mrf.mxu0
      %v540 = vpop.f32.mrf.mxu0
      %v541 = vadd.f32 0.0, %v540
      %v542 = vpop.f32.mrf.mxu0
      %543 = vmatprep.mubr.bf16.mxu0 0
      %544 = vmatmul.mubr.bf16.gmra.mxu0 %v403
      %v545 = vpop.f32.mrf.mxu0
      %v546 = vadd.f32 0.0, %v545
      %v547 = vpop.f32.mrf.mxu0
      %v548 = vpop.f32.mrf.mxu0
      %v549 = vadd.f32 0.0, %v548
      %v550 = vpop.f32.mrf.mxu0
      %551 = vmatprep.mubr.bf16.mxu0 0
      %552 = vmatmul.mubr.bf16.gmra.mxu0 %v404
      %v553 = vpop.f32.mrf.mxu0
      %v554 = vadd.f32 0.0, %v553
      %v555 = vpop.f32.mrf.mxu0
      %v556 = vpop.f32.mrf.mxu0
      %v557 = vadd.f32 0.0, %v556
      %v558 = vpop.f32.mrf.mxu0
      %559 = vmatprep.mubr.bf16.mxu0 0
      %560 = vmatmul.mubr.bf16.gmra.mxu0 %v405
      %v561 = vpop.f32.mrf.mxu0
      %v562 = vadd.f32 0.0, %v561
      %v563 = vpop.f32.mrf.mxu0
      %v564 = vpop.f32.mrf.mxu0
      %v565 = vadd.f32 0.0, %v564
      %v566 = vpop.f32.mrf.mxu0
      %567 = vmatprep.mubr.bf16.mxu0 0
      %568 = vmatmul.mubr.bf16.gmra.mxu0 %v406
      %v569 = vpop.f32.mrf.mxu0
      %v570 = vadd.f32 0.0, %v569
      %v571 = vpop.f32.mrf.mxu0
      %v572 = vpop.f32.mrf.mxu0
      %v573 = vadd.f32 0.0, %v572
      %v574 = vpop.f32.mrf.mxu0
      %575 = vmatprep.mubr.bf16.mxu0 0
      %576 = vmatmul.mubr.bf16.gmra.mxu0 %v407
      %v577 = vpop.f32.mrf.mxu0
      %v578 = vadd.f32 0.0, %v577
      %v579 = vpop.f32.mrf.mxu0
      %v580 = vpop.f32.mrf.mxu0
      %v581 = vadd.f32 0.0, %v580
      %v582 = vpop.f32.mrf.mxu0
      %583 = vmatprep.mubr.bf16.mxu0 0
      %584 = vmatmul.mubr.bf16.gmra.mxu0 %v408
      %v585 = vpop.f32.mrf.mxu0
      %v586 = vadd.f32 0.0, %v585
      %v587 = vpop.f32.mrf.mxu0
      %v588 = vpop.f32.mrf.mxu0
      %v589 = vadd.f32 0.0, %v588
      %v590 = vpop.f32.mrf.mxu0
      %591 = vmatprep.mubr.bf16.mxu0 0
      %592 = vmatmul.mubr.bf16.gmra.mxu0 %v409
      %v593 = vpop.f32.mrf.mxu0
      %v594 = vadd.f32 0.0, %v593
      %v595 = vpop.f32.mrf.mxu0
      %v596 = vpop.f32.mrf.mxu0
      %v597 = vadd.f32 0.0, %v596
      %v598 = vpop.f32.mrf.mxu0
      %599 = vmatprep.mubr.bf16.mxu0 0
      %600 = vmatmul.mubr.bf16.gmra.mxu0 %v410
      %v601 = vpop.f32.mrf.mxu0
      %v602 = vadd.f32 0.0, %v601
      %v603 = vpop.f32.mrf.mxu0
      %v604 = vpop.f32.mrf.mxu0
      %v605 = vadd.f32 0.0, %v604
      %v606 = vpop.f32.mrf.mxu0
      %607 = vmatprep.mubr.bf16.mxu0 0
      %608 = vmatmul.mubr.bf16.gmra.mxu0 %v411
      %v609 = vpop.f32.mrf.mxu0
      %v610 = vadd.f32 0.0, %v609
      %v611 = vpop.f32.mrf.mxu0
      %v612 = vpop.f32.mrf.mxu0
      %v613 = vadd.f32 0.0, %v612
      %v614 = vpop.f32.mrf.mxu0
      %615 = vmatprep.mubr.bf16.mxu0 0
      %616 = vmatmul.mubr.bf16.gmra.mxu0 %v412
      %v617 = vpop.f32.mrf.mxu0
      %v618 = vadd.f32 0.0, %v617
      %v619 = vpop.f32.mrf.mxu0
      %v620 = vpop.f32.mrf.mxu0
      %v621 = vadd.f32 0.0, %v620
      %v622 = vpop.f32.mrf.mxu0
      %623 = vmatprep.mubr.bf16.mxu0 0
      %624 = vmatmul.mubr.bf16.gmra.mxu0 %v413
      %v625 = vpop.f32.mrf.mxu0
      %v626 = vadd.f32 0.0, %v625
      %v627 = vpop.f32.mrf.mxu0
      %v628 = vpop.f32.mrf.mxu0
      %v629 = vadd.f32 0.0, %v628
      %v630 = vpop.f32.mrf.mxu0
      %631 = vmatprep.mubr.bf16.mxu0 0
      %632 = vmatmul.mubr.bf16.gmra.mxu0 %v414
      %v633 = vpop.f32.mrf.mxu0
      %v634 = vadd.f32 0.0, %v633
      %v635 = vpop.f32.mrf.mxu0
      %v636 = vpop.f32.mrf.mxu0
      %v637 = vadd.f32 0.0, %v636
      %v638 = vpop.f32.mrf.mxu0
      %639 = vdwg.mxu0
      %v640 = vadd.f32 %v255, %v514
      %v641 = vadd.f32 %v256, %v517
      %v642 = vadd.f32 %v257, %v522
      %v643 = vadd.f32 %v258, %v525
      %v644 = vadd.f32 %v259, %v530
      %v645 = vadd.f32 %v260, %v533
      %v646 = vadd.f32 %v261, %v538
      %v647 = vadd.f32 %v262, %v541
      %v648 = vadd.f32 %v263, %v546
      %v649 = vadd.f32 %v264, %v549
      %v650 = vadd.f32 %v265, %v554
      %v651 = vadd.f32 %v266, %v557
      %v652 = vadd.f32 %v267, %v562
      %v653 = vadd.f32 %v268, %v565
      %v654 = vadd.f32 %v269, %v570
      %v655 = vadd.f32 %v270, %v573
      %v656 = vadd.f32 %v271, %v578
      %v657 = vadd.f32 %v272, %v581
      %v658 = vadd.f32 %v273, %v586
      %v659 = vadd.f32 %v274, %v589
      %v660 = vadd.f32 %v275, %v594
      %v661 = vadd.f32 %v276, %v597
      %v662 = vadd.f32 %v277, %v602
      %v663 = vadd.f32 %v278, %v605
      %v664 = vadd.f32 %v279, %v610
      %v665 = vadd.f32 %v280, %v613
      %v666 = vadd.f32 %v281, %v618
      %v667 = vadd.f32 %v282, %v621
      %v668 = vadd.f32 %v283, %v626
      %v669 = vadd.f32 %v284, %v629
      %v670 = vadd.f32 %v285, %v634
      %v671 = vadd.f32 %v286, %v637
      %672 = vst [vmem:[#allocation2] sm:$0xff] %v640
      %673 = vst [vmem:[#allocation2 + $0x8] sm:$0xff] %v641
      %674 = vst [vmem:[#allocation2 + $0x10] sm:$0xff] %v642
      %675 = vst [vmem:[#allocation2 + $0x18] sm:$0xff] %v643
      %676 = vst [vmem:[#allocation2 + $0x20] sm:$0xff] %v644
      %677 = vst [vmem:[#allocation2 + $0x28] sm:$0xff] %v645
      %678 = vst [vmem:[#allocation2 + $0x30] sm:$0xff] %v646
      %679 = vst [vmem:[#allocation2 + $0x38] sm:$0xff] %v647
      %680 = vst [vmem:[#allocation2 + $0x40] sm:$0xff] %v648
      %681 = vst [vmem:[#allocation2 + $0x48] sm:$0xff] %v649
      %682 = vst [vmem:[#allocation2 + $0x50] sm:$0xff] %v650
      %683 = vst [vmem:[#allocation2 + $0x58] sm:$0xff] %v651
      %684 = vst [vmem:[#allocation2 + $0x60] sm:$0xff] %v652
      %685 = vst [vmem:[#allocation2 + $0x68] sm:$0xff] %v653
      %686 = vst [vmem:[#allocation2 + $0x70] sm:$0xff] %v654
      %687 = vst [vmem:[#allocation2 + $0x78] sm:$0xff] %v655
      %688 = vst [vmem:[#allocation2 + $0x80] sm:$0xff] %v656
      %689 = vst [vmem:[#allocation2 + $0x88] sm:$0xff] %v657
      %690 = vst [vmem:[#allocation2 + $0x90] sm:$0xff] %v658
      %691 = vst [vmem:[#allocation2 + $0x98] sm:$0xff] %v659
      %692 = vst [vmem:[#allocation2 + $0xa0] sm:$0xff] %v660
      %693 = vst [vmem:[#allocation2 + $0xa8] sm:$0xff] %v661
      %694 = vst [vmem:[#allocation2 + $0xb0] sm:$0xff] %v662
      %695 = vst [vmem:[#allocation2 + $0xb8] sm:$0xff] %v663
      %696 = vst [vmem:[#allocation2 + $0xc0] sm:$0xff] %v664
      %697 = vst [vmem:[#allocation2 + $0xc8] sm:$0xff] %v665
      %698 = vst [vmem:[#allocation2 + $0xd0] sm:$0xff] %v666
      %699 = vst [vmem:[#allocation2 + $0xd8] sm:$0xff] %v667
      %700 = vst [vmem:[#allocation2 + $0xe0] sm:$0xff] %v668
      %701 = vst [vmem:[#allocation2 + $0xe8] sm:$0xff] %v669
      %702 = vst [vmem:[#allocation2 + $0xf0] sm:$0xff] %v670
      %703 = vst [vmem:[#allocation2 + $0xf8] sm:$0xff] %v671
      // Predicated region
      $region33: #{bottleneck_forward.11} parent=27 // pred_check
        %p704 = pneg %p219
      $region34: #{bottleneck_forward.11} parent=27 // pred_check_branch
        %706 = sbr.rel (%p704) target = $region36
      $region35: #{bottleneck_forward.11} parent=27 // pred_region
        %v707 = vld [vmem:[#allocation2] sm:$0xff]
        %v708 = vld [vmem:[#allocation2 + $0x8] sm:$0xff]
        %v709 = vld [vmem:[#allocation2 + $0x10] sm:$0xff]
        %v710 = vld [vmem:[#allocation2 + $0x18] sm:$0xff]
        %v711 = vld [vmem:[#allocation2 + $0x20] sm:$0xff]
        %v712 = vld [vmem:[#allocation2 + $0x28] sm:$0xff]
        %v713 = vld [vmem:[#allocation2 + $0x30] sm:$0xff]
        %v714 = vld [vmem:[#allocation2 + $0x38] sm:$0xff]
        %v715 = vld [vmem:[#allocation2 + $0x40] sm:$0xff]
        %v716 = vld [vmem:[#allocation2 + $0x48] sm:$0xff]
        %v717 = vld [vmem:[#allocation2 + $0x50] sm:$0xff]
        %v718 = vld [vmem:[#allocation2 + $0x58] sm:$0xff]
        %v719 = vld [vmem:[#allocation2 + $0x60] sm:$0xff]
        %v720 = vld [vmem:[#allocation2 + $0x68] sm:$0xff]
        %v721 = vld [vmem:[#allocation2 + $0x70] sm:$0xff]
        %v722 = vld [vmem:[#allocation2 + $0x78] sm:$0xff]
        %v723 = vld [vmem:[#allocation2 + $0x80] sm:$0xff]
        %v724 = vld [vmem:[#allocation2 + $0x88] sm:$0xff]
        %v725 = vld [vmem:[#allocation2 + $0x90] sm:$0xff]
        %v726 = vld [vmem:[#allocation2 + $0x98] sm:$0xff]
        %v727 = vld [vmem:[#allocation2 + $0xa0] sm:$0xff]
        %v728 = vld [vmem:[#allocation2 + $0xa8] sm:$0xff]
        %v729 = vld [vmem:[#allocation2 + $0xb0] sm:$0xff]
        %v730 = vld [vmem:[#allocation2 + $0xb8] sm:$0xff]
        %v731 = vld [vmem:[#allocation2 + $0xc0] sm:$0xff]
        %v732 = vld [vmem:[#allocation2 + $0xc8] sm:$0xff]
        %v733 = vld [vmem:[#allocation2 + $0xd0] sm:$0xff]
        %v734 = vld [vmem:[#allocation2 + $0xd8] sm:$0xff]
        %v735 = vld [vmem:[#allocation2 + $0xe0] sm:$0xff]
        %v736 = vld [vmem:[#allocation2 + $0xe8] sm:$0xff]
        %v737 = vld [vmem:[#allocation2 + $0xf0] sm:$0xff]
        %v738 = vld [vmem:[#allocation2 + $0xf8] sm:$0xff]
        %739 = vst [vmem:[%s216] sm:$0xff] %v707
        %740 = vst [vmem:[%s216 + $0x8] sm:$0xff] %v708
        %741 = vst [vmem:[%s216 + $0x10] sm:$0xff] %v709
        %742 = vst [vmem:[%s216 + $0x18] sm:$0xff] %v710
        %743 = vst [vmem:[%s216 + $0x20] sm:$0xff] %v711
        %744 = vst [vmem:[%s216 + $0x28] sm:$0xff] %v712
        %745 = vst [vmem:[%s216 + $0x30] sm:$0xff] %v713
        %746 = vst [vmem:[%s216 + $0x38] sm:$0xff] %v714
        %747 = vst [vmem:[%s216 + $0x40] sm:$0xff] %v715
        %748 = vst [vmem:[%s216 + $0x48] sm:$0xff] %v716
        %749 = vst [vmem:[%s216 + $0x50] sm:$0xff] %v717
        %750 = vst [vmem:[%s216 + $0x58] sm:$0xff] %v718
        %751 = vst [vmem:[%s216 + $0x60] sm:$0xff] %v719
        %752 = vst [vmem:[%s216 + $0x68] sm:$0xff] %v720
        %753 = vst [vmem:[%s216 + $0x70] sm:$0xff] %v721
        %754 = vst [vmem:[%s216 + $0x78] sm:$0xff] %v722
        %755 = vst [vmem:[%s216 + $0x80] sm:$0xff] %v723
        %756 = vst [vmem:[%s216 + $0x88] sm:$0xff] %v724
        %757 = vst [vmem:[%s216 + $0x90] sm:$0xff] %v725
        %758 = vst [vmem:[%s216 + $0x98] sm:$0xff] %v726
        %759 = vst [vmem:[%s216 + $0xa0] sm:$0xff] %v727
        %760 = vst [vmem:[%s216 + $0xa8] sm:$0xff] %v728
        %761 = vst [vmem:[%s216 + $0xb0] sm:$0xff] %v729
        %762 = vst [vmem:[%s216 + $0xb8] sm:$0xff] %v730
        %763 = vst [vmem:[%s216 + $0xc0] sm:$0xff] %v731
        %764 = vst [vmem:[%s216 + $0xc8] sm:$0xff] %v732
        %765 = vst [vmem:[%s216 + $0xd0] sm:$0xff] %v733
        %766 = vst [vmem:[%s216 + $0xd8] sm:$0xff] %v734
        %767 = vst [vmem:[%s216 + $0xe0] sm:$0xff] %v735
        %768 = vst [vmem:[%s216 + $0xe8] sm:$0xff] %v736
        %769 = vst [vmem:[%s216 + $0xf0] sm:$0xff] %v737
        %770 = vst [vmem:[%s216 + $0xf8] sm:$0xff] %v738
      $region36: #{bottleneck_forward.11} parent=27 // pred_fallthru
        _
      %s771 = smul.u32 32, %s18
      %p772 = scmp.lt.s32.totalorder %s771, 63
      %s773 = scalar_select %p772, %s771, 63
      %p774 = scmp.lt.s32.totalorder %s19, 0
      %s775 = scalar_select %p774, %s19, 0
      %s776 = sadd.s32 %s775, %s773
      %s777 = smul.addr %s776, 8
      %s778 = scalar_lea.vmem %s2, %s777
      // Predicated region
      $region37: #{bottleneck_forward.11} parent=27 // pred_check
        %p779 = pneg %p108
      $region38: #{bottleneck_forward.11} parent=27 // pred_check_branch
        %781 = sbr.rel (%p779) target = $region40
      $region39: #{bottleneck_forward.11} parent=27 // pred_region
        %s782 = smul.u32 32, %s18
      $region40: #{bottleneck_forward.11} parent=27 // pred_fallthru
        _
    $region28: #{bottleneck_forward.11} parent=5 // pred_fallthru
      _
    %p783 = scmp.le.s32.totalorder 2, %s8
    // Predicated region
    $region41: #{bottleneck_forward.11} parent=5 // pred_check
      %p784 = pneg %p783
    $region42: #{bottleneck_forward.11} parent=5 // pred_check_branch
      %786 = sbr.rel (%p784) target = $region44
    $region43: #{bottleneck_forward.11} parent=5 // pred_region
      %s787 = ssub.s32 %s8, 2
      // Predicated region
      $region45: #{bottleneck_forward.11} parent=43 // pred_check
        %p788 = pneg %p114
      $region46: #{bottleneck_forward.11} parent=43 // pred_check_branch
        %790 = sbr.rel (%p788) target = $region48
      $region47: #{bottleneck_forward.11} parent=43 // pred_region
        %s791 = smul.u32 32, %s21
        %p792 = scmp.lt.s32.totalorder %s791, 63
        %s793 = scalar_select %p792, %s791, 63
        %p794 = scmp.lt.s32.totalorder %s22, 0
        %s795 = scalar_select %p794, %s22, 0
        %s796 = sadd.s32 %s795, %s793
        %s797 = smul.addr %s796, 8
        %s798 = scalar_lea.vmem %s2, %s797
      $region48: #{bottleneck_forward.11} parent=43 // pred_fallthru
        _
    $region44: #{bottleneck_forward.11} parent=5 // pred_fallthru
      _
  $region6: #{bottleneck_forward.11} parent=0 // loop_footer
    %s12 = sadd.s32 1, %s8
  $region7: #{bottleneck_forward.11} parent=0 // loop_footer_branch
    %7 = sbr.rel target = $region3
  $region8: #{bottleneck_forward.11} parent=0 // loop_exit
    _

// kernel: bottleneck_forward.14
$region0: #{bottleneck_forward.14}
  #allocation0 [shape = 'u32[]', space=smem, size = 0x4, offset = 0x4, fixed_abs, tag = 'smem constant byte address 0x4 - core index']
  #allocation1 [shape = 'u32[144,128]{1,0:T(1,128)}', space=vmem, size = 0x12000, scoped, tag = 'internal scratch']
  #allocation2 [shape = 'f32[128,128]{1,0:T(8,128)}', space=vmem, size = 0x10000, scoped, tag = 'scratch operand']
  %s0 = inlined_call_operand.vmem [shape: bf16[128,384], index: 0, kind: input, shape index: {}]
  %s1 = inlined_call_operand.vmem [shape: bf16[384,128], index: 1, kind: input, shape index: {}]
  %s2 = inlined_call_operand.vmem [shape: f32[128,128], index: 2, kind: output, shape index: {}]
  %s3 = sld [smem:[#allocation0]]
  $region90: #{bottleneck_forward.14} parent=0
    _
  %s5 = ssub.s32 1, %s3
  %s6 = scalar_select 0, %s5, %s3
  $region1: #{bottleneck_forward.14} parent=0
    #allocation3 [shape = 'u8[65536]{0}', space=vmem, size = 0x10000, scoped, tag = 'input window, operand 0']
    loop: start=0, step=1, limit=5
    $region2: #{bottleneck_forward.14} parent=1 // loop_pre_header
      _
    $region3: #{bottleneck_forward.14} parent=1 // loop_header
      %s8 = sphi 0, %s12
      %p9 = scmp.ge.s32.totalorder %s8, 5
      %s15 = sphi 0, %s34
      %s16 = sphi 0, %s30
      %s17 = sphi 0, %s26
      %s18 = sphi 0, %s15
      %s19 = sphi 0, %s16
      %s20 = sphi 0, %s17
      %s21 = sphi 0, %s18
      %s22 = sphi 0, %s19
      %s23 = sphi 0, %s20
      %s39 = sphi 0, %s41
      %s42 = sphi 0, %s39
      %s43 = sphi 0, %s42
      %s59 = sphi 0, %s43
      %s67 = sphi 0, %s69
      %s70 = sphi 0, %s67
      %s71 = sphi 0, %s70
      %s87 = sphi 0, %s71
      %s95 = sphi 0, %s97
      %s98 = sphi 0, %s95
      %s99 = sphi 0, %s98
      %s115 = sphi 0, %s99
    $region4: #{bottleneck_forward.14} parent=1 // loop_header_branch
      %11 = sbr.rel (%p9) target = $region8
    $region5: #{bottleneck_forward.14} parent=1 // loop_body
      %s13 = ssub.s32 %s8, 1
      %s14 = ssub.s32 %s8, 2
      %s24 = sadd.s32 1, %s17
      %p25 = scmp.ge.s32.totalorder %s24, 3
      %s26 = scalar_select %p25, 0, %s24
      %s27 = sadd.s32 1, %s16
      %s28 = scalar_select %p25, %s27, %s16
      %p29 = scmp.ge.s32.totalorder %s28, 1
      %s30 = scalar_select %p29, 0, %s28
      %s31 = sadd.s32 1, %s15
      %s32 = scalar_select %p29, %s31, %s15
      %p33 = scmp.ge.s32.totalorder %s32, 1
      %s34 = scalar_select %p33, 0, %s32
      %s35 = ssub.s32 %s15, %s34
      %s36 = ssub.s32 %s17, %s26
      %s37 = sor.u32 %s35, %s36
      %p38 = scmp.eq.s32.totalorder %s37, 0
      %s40 = sadd.s32 %s39, 1
      %s41 = scalar_select %p38, %s39, %s40
      %p44 = pneg %p38
      %p45 = scmp.eq.s32.totalorder %s8, 2
      %p46 = por %p44, %p45
      %p47 = scmp.ne.s32.totalorder %s39, %s42
      %p48 = scmp.eq.s32.totalorder %s8, 0
      %p49 = por %p47, %p48
      %p50 = scmp.ne.s32.totalorder %s39, %s42
      %p51 = scmp.eq.s32.totalorder %s13, 2
      %p52 = por %p50, %p51
      %p53 = scmp.ne.s32.totalorder %s42, %s43
      %p54 = scmp.eq.s32.totalorder %s13, 0
      %p55 = por %p53, %p54
      %p56 = scmp.ne.s32.totalorder %s42, %s43
      %p57 = scmp.eq.s32.totalorder %s14, 2
      %p58 = por %p56, %p57
      %p60 = scmp.ne.s32.totalorder %s43, %s59
      %p61 = scmp.eq.s32.totalorder %s14, 0
      %p62 = por %p60, %p61
      %s63 = ssub.s32 %s17, %s26
      %s64 = ssub.s32 %s16, %s30
      %s65 = sor.u32 %s63, %s64
      %p66 = scmp.eq.s32.totalorder %s65, 0
      %s68 = sadd.s32 %s67, 1
      %s69 = scalar_select %p66, %s67, %s68
      %p72 = pneg %p66
      %p73 = scmp.eq.s32.totalorder %s8, 2
      %p74 = por %p72, %p73
      %p75 = scmp.ne.s32.totalorder %s67, %s70
      %p76 = scmp.eq.s32.totalorder %s8, 0
      %p77 = por %p75, %p76
      %p78 = scmp.ne.s32.totalorder %s67, %s70
      %p79 = scmp.eq.s32.totalorder %s13, 2
      %p80 = por %p78, %p79
      %p81 = scmp.ne.s32.totalorder %s70, %s71
      %p82 = scmp.eq.s32.totalorder %s13, 0
      %p83 = por %p81, %p82
      %p84 = scmp.ne.s32.totalorder %s70, %s71
      %p85 = scmp.eq.s32.totalorder %s14, 2
      %p86 = por %p84, %p85
      %p88 = scmp.ne.s32.totalorder %s71, %s87
      %p89 = scmp.eq.s32.totalorder %s14, 0
      %p90 = por %p88, %p89
      %s91 = ssub.s32 %s15, %s34
      %s92 = ssub.s32 %s16, %s30
      %s93 = sor.u32 %s91, %s92
      %p94 = scmp.eq.s32.totalorder %s93, 0
      %s96 = sadd.s32 %s95, 1
      %s97 = scalar_select %p94, %s95, %s96
      %p100 = pneg %p94
      %p101 = scmp.eq.s32.totalorder %s8, 2
      %p102 = por %p100, %p101
      %p103 = scmp.ne.s32.totalorder %s95, %s98
      %p104 = scmp.eq.s32.totalorder %s8, 0
      %p105 = por %p103, %p104
      %p106 = scmp.ne.s32.totalorder %s95, %s98
      %p107 = scmp.eq.s32.totalorder %s13, 2
      %p108 = por %p106, %p107
      %p109 = scmp.ne.s32.totalorder %s98, %s99
      %p110 = scmp.eq.s32.totalorder %s13, 0
      %p111 = por %p109, %p110
      %p112 = scmp.ne.s32.totalorder %s98, %s99
      %p113 = scmp.eq.s32.totalorder %s14, 2
      %p114 = por %p112, %p113
      %p116 = scmp.ne.s32.totalorder %s99, %s115
      %p117 = scmp.eq.s32.totalorder %s14, 0
      %p118 = por %p116, %p117
      %p119 = scmp.le.s32.totalorder 1, %s8
      %p120 = scmp.lt.s32.totalorder %s8, 4
      %p121 = pnand %p119, %p120
      %p122 = pneg %p121
      // Predicated region
      $region9: #{bottleneck_forward.14} parent=5 // pred_check
        _
      $region10: #{bottleneck_forward.14} parent=5 // pred_check_branch
        %124 = sbr.rel (%p121) target = $region12
      $region11: #{bottleneck_forward.14} parent=5 // pred_region
        %s125 = ssub.s32 %s8, 1
      $region12: #{bottleneck_forward.14} parent=5 // pred_fallthru
        _
      %p126 = scmp.lt.s32.totalorder %s8, 3
      // Predicated region
      $region13: #{bottleneck_forward.14} parent=5 // pred_check
        %p127 = pneg %p126
      $region14: #{bottleneck_forward.14} parent=5 // pred_check_branch
        %129 = sbr.rel (%p127) target = $region16
      $region15: #{bottleneck_forward.14} parent=5 // pred_region
        // Predicated region
        $region17: #{bottleneck_forward.14} parent=15 // pred_check
          %p130 = pneg %p49
        $region18: #{bottleneck_forward.14} parent=15 // pred_check_branch
          %132 = sbr.rel (%p130) target = $region20
        $region19: #{bottleneck_forward.14} parent=15 // pred_region
          %s133 = sand.u32 %s39, 1
          %s134 = sand.u32 %s39, 1
          %s135 = smul.addr %s134, 64
          %s136 = scalar_lea.vmem [#allocation3], %s135
          %s137 = smul.u32 16, %s15
          %s138 = smul.addr %s137, 3
          %s139 = sadd.s32 %s17, %s138
          %s140 = smul.addr %s139, 4
          %s141 = scalar_lea.vmem %s0, %s140
          // Predicated region
          $region21: #{bottleneck_forward.14} parent=19 // pred_check
            _
          $region22: #{bottleneck_forward.14} parent=19 // pred_check_branch
            %143 = sbr.rel (0) target = $region24
          $region23: #{bottleneck_forward.14} parent=19 // pred_region
            // Predicated region
            $region25: #{bottleneck_forward.14} parent=23 // pred_check
              _
            $region26: #{bottleneck_forward.14} parent=23 // pred_check_branch
              %145 = sbr.rel target = $region28
            $region27: #{bottleneck_forward.14} parent=23 // pred_region
              // Predicated region
              $region40: #{bottleneck_forward.14} parent=27 // pred_check
                _
              $region41: #{bottleneck_forward.14} parent=27 // pred_check_branch
                %191 = sbr.rel (0) target = $region43
              $region42: #{bottleneck_forward.14} parent=27 // pred_region
                loop: start=0, step=1, limit=1
                $region44: #{bottleneck_forward.14} parent=42 // loop_pre_header
                  _
                $region45: #{bottleneck_forward.14} parent=42 // loop_header
                  %s193 = sphi 0, %s197
                  %p194 = scmp.ge.s32.totalorder %s193, 1
                  %s198 = sphi %s141, %s141
                  %s199 = sphi %s136, %s136
                $region46: #{bottleneck_forward.14} parent=42 // loop_header_branch
                  %196 = sbr.rel (%p194) target = $region50
                $region47: #{bottleneck_forward.14} parent=42 // loop_body
                  _
                $region48: #{bottleneck_forward.14} parent=42 // loop_footer
                  %s197 = sadd.s32 1, %s193
                $region49: #{bottleneck_forward.14} parent=42 // loop_footer_branch
                  %192 = sbr.rel target = $region45
                $region50: #{bottleneck_forward.14} parent=42 // loop_exit
                  _
                %s201 = ssub.s32 16, 1
                loop: start=0, step=1, limit=1
                $region51: #{bottleneck_forward.14} parent=42 // loop_pre_header
                  _
                $region52: #{bottleneck_forward.14} parent=42 // loop_header
                  %s203 = sphi 0, %s207
                  %p204 = scmp.ge.s32.totalorder %s203, 1
                  %s208 = sphi %s141, %s141
                  %s209 = sphi %s136, %s136
                $region53: #{bottleneck_forward.14} parent=42 // loop_header_branch
                  %206 = sbr.rel (%p204) target = $region57
                $region54: #{bottleneck_forward.14} parent=42 // loop_body
                  %v210 = vld [vmem:[%s208] sm:%s201]
                  %211 = vst [vmem:[%s209] sm:%s201] %v210
                  %v212 = vld [vmem:[%s208 + $0xc] sm:%s201]
                  %213 = vst [vmem:[%s209 + $0x4] sm:%s201] %v212
                  %v214 = vld [vmem:[%s208 + $0x18] sm:%s201]
                  %215 = vst [vmem:[%s209 + $0x8] sm:%s201] %v214
                  %v216 = vld [vmem:[%s208 + $0x24] sm:%s201]
                  %217 = vst [vmem:[%s209 + $0xc] sm:%s201] %v216
                  %v218 = vld [vmem:[%s208 + $0x30] sm:%s201]
                  %219 = vst [vmem:[%s209 + $0x10] sm:%s201] %v218
                  %v220 = vld [vmem:[%s208 + $0x3c] sm:%s201]
                  %221 = vst [vmem:[%s209 + $0x14] sm:%s201] %v220
                  %v222 = vld [vmem:[%s208 + $0x48] sm:%s201]
                  %223 = vst [vmem:[%s209 + $0x18] sm:%s201] %v222
                  %v224 = vld [vmem:[%s208 + $0x54] sm:%s201]
                  %225 = vst [vmem:[%s209 + $0x1c] sm:%s201] %v224
                  %v226 = vld [vmem:[%s208 + $0x60] sm:%s201]
                  %227 = vst [vmem:[%s209 + $0x20] sm:%s201] %v226
                  %v228 = vld [vmem:[%s208 + $0x6c] sm:%s201]
                  %229 = vst [vmem:[%s209 + $0x24] sm:%s201] %v228
                  %v230 = vld [vmem:[%s208 + $0x78] sm:%s201]
                  %231 = vst [vmem:[%s209 + $0x28] sm:%s201] %v230
                  %v232 = vld [vmem:[%s208 + $0x84] sm:%s201]
                  %233 = vst [vmem:[%s209 + $0x2c] sm:%s201] %v232
                  %v234 = vld [vmem:[%s208 + $0x90] sm:%s201]
                  %235 = vst [vmem:[%s209 + $0x30] sm:%s201] %v234
                  %v236 = vld [vmem:[%s208 + $0x9c] sm:%s201]
                  %237 = vst [vmem:[%s209 + $0x34] sm:%s201] %v236
                  %v238 = vld [vmem:[%s208 + $0xa8] sm:%s201]
                  %239 = vst [vmem:[%s209 + $0x38] sm:%s201] %v238
                  %v240 = vld [vmem:[%s208 + $0xb4] sm:%s201]
                  %241 = vst [vmem:[%s209 + $0x3c] sm:%s201] %v240
                $region55: #{bottleneck_forward.14} parent=42 // loop_footer
                  %s207 = sadd.s32 1, %s203
                $region56: #{bottleneck_forward.14} parent=42 // loop_footer_branch
                  %202 = sbr.rel target = $region52
                $region57: #{bottleneck_forward.14} parent=42 // loop_exit
                  _
              $region43: #{bottleneck_forward.14} parent=27 // pred_fallthru
                _
            $region28: #{bottleneck_forward.14} parent=23 // pred_fallthru
              _
            // Predicated region
            $region29: #{bottleneck_forward.14} parent=23 // pred_check
              _
            $region30: #{bottleneck_forward.14} parent=23 // pred_check_branch
              %147 = sbr.rel (0) target = $region32
            $region31: #{bottleneck_forward.14} parent=23 // pred_region
              %s149 = ssub.s32 16, 1
              loop: start=0, step=1, limit=1
              $region33: #{bottleneck_forward.14} parent=31 // loop_pre_header
                _
              $region34: #{bottleneck_forward.14} parent=31 // loop_header
                %s151 = sphi 0, %s155
                %p152 = scmp.ge.s32.totalorder %s151, 1
                %s156 = sphi %s141, %s141
                %s157 = sphi %s136, %s136
              $region35: #{bottleneck_forward.14} parent=31 // loop_header_branch
                %154 = sbr.rel (%p152) target = $region39
              $region36: #{bottleneck_forward.14} parent=31 // loop_body
                %v158 = vld [vmem:[%s156] sm:%s149]
                %159 = vst [vmem:[%s157] sm:%s149] %v158
                %v160 = vld [vmem:[%s156 + $0xc] sm:%s149]
                %161 = vst [vmem:[%s157 + $0x4] sm:%s149] %v160
                %v162 = vld [vmem:[%s156 + $0x18] sm:%s149]
                %163 = vst [vmem:[%s157 + $0x8] sm:%s149] %v162
                %v164 = vld [vmem:[%s156 + $0x24] sm:%s149]
                %165 = vst [vmem:[%s157 + $0xc] sm:%s149] %v164
                %v166 = vld [vmem:[%s156 + $0x30] sm:%s149]
                %167 = vst [vmem:[%s157 + $0x10] sm:%s149] %v166
                %v168 = vld [vmem:[%s156 + $0x3c] sm:%s149]
                %169 = vst [vmem:[%s157 + $0x14] sm:%s149] %v168
                %v170 = vld [vmem:[%s156 + $0x48] sm:%s149]
                %171 = vst [vmem:[%s157 + $0x18] sm:%s149] %v170
                %v172 = vld [vmem:[%s156 + $0x54] sm:%s149]
                %173 = vst [vmem:[%s157 + $0x1c] sm:%s149] %v172
                %v174 = vld [vmem:[%s156 + $0x60] sm:%s149]
                %175 = vst [vmem:[%s157 + $0x20] sm:%s149] %v174
                %v176 = vld [vmem:[%s156 + $0x6c] sm:%s149]
                %177 = vst [vmem:[%s157 + $0x24] sm:%s149] %v176
                %v178 = vld [vmem:[%s156 + $0x78] sm:%s149]
                %179 = vst [vmem:[%s157 + $0x28] sm:%s149] %v178
                %v180 = vld [vmem:[%s156 + $0x84] sm:%s149]
                %181 = vst [vmem:[%s157 + $0x2c] sm:%s149] %v180
                %v182 = vld [vmem:[%s156 + $0x90] sm:%s149]
                %183 = vst [vmem:[%s157 + $0x30] sm:%s149] %v182
                %v184 = vld [vmem:[%s156 + $0x9c] sm:%s149]
                %185 = vst [vmem:[%s157 + $0x34] sm:%s149] %v184
                %v186 = vld [vmem:[%s156 + $0xa8] sm:%s149]
                %187 = vst [vmem:[%s157 + $0x38] sm:%s149] %v186
                %v188 = vld [vmem:[%s156 + $0xb4] sm:%s149]
                %189 = vst [vmem:[%s157 + $0x3c] sm:%s149] %v188
              $region37: #{bottleneck_forward.14} parent=31 // loop_footer
                %s155 = sadd.s32 1, %s151
              $region38: #{bottleneck_forward.14} parent=31 // loop_footer_branch
                %150 = sbr.rel target = $region34
              $region39: #{bottleneck_forward.14} parent=31 // loop_exit
                _
            $region32: #{bottleneck_forward.14} parent=23 // pred_fallthru
              _
          $region24: #{bottleneck_forward.14} parent=19 // pred_fallthru
            _
          %242 = vnop
        $region20: #{bottleneck_forward.14} parent=15 // pred_fallthru
          _
        // Predicated region
        $region58: #{bottleneck_forward.14} parent=15 // pred_check
          %p243 = pneg %p77
        $region59: #{bottleneck_forward.14} parent=15 // pred_check_branch
          %245 = sbr.rel (%p243) target = $region61
        $region60: #{bottleneck_forward.14} parent=15 // pred_region
          %s246 = smul.u32 16, %s17
          %p247 = scmp.lt.s32.totalorder %s246, 47
          %s248 = scalar_select %p247, %s246, 47
          %p249 = scmp.lt.s32.totalorder %s16, 0
          %s250 = scalar_select %p249, %s16, 0
          %s251 = sadd.s32 %s250, %s248
          %s252 = smul.addr %s251, 4
          %s253 = scalar_lea.vmem %s1, %s252
          %s254 = smul.u32 16, %s17
        $region61: #{bottleneck_forward.14} parent=15 // pred_fallthru
          _
      $region16: #{bottleneck_forward.14} parent=5 // pred_fallthru
        _
      %p255 = scmp.le.s32.totalorder 1, %s8
      %p256 = scmp.lt.s32.totalorder %s8, 4
      %p257 = pnand %p255, %p256
      %p258 = pneg %p257
      // Predicated region
      $region62: #{bottleneck_forward.14} parent=5 // pred_check
        _
      $region63: #{bottleneck_forward.14} parent=5 // pred_check_branch
        %260 = sbr.rel (%p257) target = $region65
      $region64: #{bottleneck_forward.14} parent=5 // pred_region
        %s261 = ssub.s32 %s8, 1
        %s262 = sand.u32 %s42, 1
        %s263 = sand.u32 %s42, 1
        %s264 = smul.addr %s263, 64
        %s265 = scalar_lea.vmem [#allocation3], %s264
        // Predicated region
        $region66: #{bottleneck_forward.14} parent=64 // pred_check
          %p266 = pneg %p55
        $region67: #{bottleneck_forward.14} parent=64 // pred_check_branch
          %268 = sbr.rel (%p266) target = $region69
        $region68: #{bottleneck_forward.14} parent=64 // pred_region
          _
        $region69: #{bottleneck_forward.14} parent=64 // pred_fallthru
          _
        %s269 = sand.u32 %s42, 1
        %s270 = sand.u32 %s42, 1
        %s271 = smul.addr %s270, 64
        %s272 = scalar_lea.vmem [#allocation3], %s271
        %p273 = pneg %p55
        %p274 = pneg %p52
        %s275 = smul.u32 16, %s20
        %p276 = scmp.lt.s32.totalorder %s275, 47
        %s277 = scalar_select %p276, %s275, 47
        %p278 = scmp.lt.s32.totalorder %s19, 0
        %s279 = scalar_select %p278, %s19, 0
        %s280 = sadd.s32 %s279, %s277
        %s281 = smul.addr %s280, 4
        %s282 = scalar_lea.vmem %s1, %s281
        %p283 = pneg %p83
        %p284 = pneg %p80
        %p285 = pneg %p111
        %p286 = pneg %p108
        %s287 = smul.u32 16, %s18
        %p288 = scmp.lt.s32.totalorder %s287, 15
        %s289 = scalar_select %p288, %s287, 15
        %p290 = scmp.lt.s32.totalorder %s19, 0
        %s291 = scalar_select %p290, %s19, 0
        %s292 = sadd.s32 %s291, %s289
        %s293 = smul.addr %s292, 8
        %s294 = scalar_lea.vmem %s2, %s293
        %s295 = smul.u32 16, %s18
        %s296 = smul.u32 16, %s20
        %p297 = scmp.lt.s32.totalorder %s296, 47
        %s298 = scalar_select %p297, %s296, 47
        %p299 = scmp.lt.s32.totalorder %s19, 0
        %s300 = scalar_select %p299, %s19, 0
        %s301 = sadd.s32 %s300, %s298
        %s302 = smul.addr %s301, 4
        %s303 = scalar_lea.vmem %s1, %s302
        %s304 = smul.u32 16, %s20
        %s305 = smul.u32 16, %s18
        %p306 = scmp.lt.s32.totalorder %s305, 15
        %s307 = scalar_select %p306, %s305, 15
        %p308 = scmp.lt.s32.totalorder %s19, 0
        %s309 = scalar_select %p308, %s19, 0
        %s310 = sadd.s32 %s309, %s307
        %s311 = smul.addr %s310, 8
        %s312 = scalar_lea.vmem %s2, %s311
        %s313 = smul.u32 16, %s18
        %p315 = scmp.eq.s32.totalorder %s20, 0
        // Predicated region
        $region70: #{bottleneck_forward.14} parent=64 // pred_check
          %p316 = pneg %p315
        $region71: #{bottleneck_forward.14} parent=64 // pred_check_branch
          %318 = sbr.rel (%p316) target = $region73
        $region72: #{bottleneck_forward.14} parent=64 // pred_region
          %319 = vst [vmem:[#allocation2] sm:$0xff] 0.0
          %320 = vst [vmem:[#allocation2 + $0x8] sm:$0xff] 0.0
          %321 = vst [vmem:[#allocation2 + $0x10] sm:$0xff] 0.0
          %322 = vst [vmem:[#allocation2 + $0x18] sm:$0xff] 0.0
          %323 = vst [vmem:[#allocation2 + $0x20] sm:$0xff] 0.0
          %324 = vst [vmem:[#allocation2 + $0x28] sm:$0xff] 0.0
          %325 = vst [vmem:[#allocation2 + $0x30] sm:$0xff] 0.0
          %326 = vst [vmem:[#allocation2 + $0x38] sm:$0xff] 0.0
          %327 = vst [vmem:[#allocation2 + $0x40] sm:$0xff] 0.0
          %328 = vst [vmem:[#allocation2 + $0x48] sm:$0xff] 0.0
          %329 = vst [vmem:[#allocation2 + $0x50] sm:$0xff] 0.0
          %330 = vst [vmem:[#allocation2 + $0x58] sm:$0xff] 0.0
          %331 = vst [vmem:[#allocation2 + $0x60] sm:$0xff] 0.0
          %332 = vst [vmem:[#allocation2 + $0x68] sm:$0xff] 0.0
          %333 = vst [vmem:[#allocation2 + $0x70] sm:$0xff] 0.0
          %334 = vst [vmem:[#allocation2 + $0x78] sm:$0xff] 0.0
        $region73: #{bottleneck_forward.14} parent=64 // pred_fallthru
          _
        %v335 = vld [vmem:[#allocation2] sm:$0xff]
        %v336 = vld [vmem:[#allocation2 + $0x8] sm:$0xff]
        %v337 = vld [vmem:[#allocation2 + $0x10] sm:$0xff]
        %v338 = vld [vmem:[#allocation2 + $0x18] sm:$0xff]
        %v339 = vld [vmem:[#allocation2 + $0x20] sm:$0xff]
        %v340 = vld [vmem:[#allocation2 + $0x28] sm:$0xff]
        %v341 = vld [vmem:[#allocation2 + $0x30] sm:$0xff]
        %v342 = vld [vmem:[#allocation2 + $0x38] sm:$0xff]
        %v343 = vld [vmem:[#allocation2 + $0x40] sm:$0xff]
        %v344 = vld [vmem:[#allocation2 + $0x48] sm:$0xff]
        %v345 = vld [vmem:[#allocation2 + $0x50] sm:$0xff]
        %v346 = vld [vmem:[#allocation2 + $0x58] sm:$0xff]
        %v347 = vld [vmem:[#allocation2 + $0x60] sm:$0xff]
        %v348 = vld [vmem:[#allocation2 + $0x68] sm:$0xff]
        %v349 = vld [vmem:[#allocation2 + $0x70] sm:$0xff]
        %v350 = vld [vmem:[#allocation2 + $0x78] sm:$0xff]
        %v351 = vld [vmem:[%s265] sm:$0xf]
        %v352 = vld [vmem:[%s265 + $0x4] sm:$0xf]
        %v353 = vld [vmem:[%s265 + $0x8] sm:$0xf]
        %v354 = vld [vmem:[%s265 + $0xc] sm:$0xf]
        %v355 = vld [vmem:[%s265 + $0x10] sm:$0xf]
        %v356 = vld [vmem:[%s265 + $0x14] sm:$0xf]
        %v357 = vld [vmem:[%s265 + $0x18] sm:$0xf]
        %v358 = vld [vmem:[%s265 + $0x1c] sm:$0xf]
        %v359 = vld [vmem:[%s265 + $0x20] sm:$0xf]
        %v360 = vld [vmem:[%s265 + $0x24] sm:$0xf]
        %v361 = vld [vmem:[%s265 + $0x28] sm:$0xf]
        %v362 = vld [vmem:[%s265 + $0x2c] sm:$0xf]
        %v363 = vld [vmem:[%s265 + $0x30] sm:$0xf]
        %v364 = vld [vmem:[%s265 + $0x34] sm:$0xf]
        %v365 = vld [vmem:[%s265 + $0x38] sm:$0xf]
        %v366 = vld [vmem:[%s265 + $0x3c] sm:$0xf]
        %v367 = vld [vmem:[%s303] sm:$0xf]
        %v368 = vld [vmem:[%s303 + $0x4] sm:$0xf]
        %v369 = vld [vmem:[%s303 + $0x8] sm:$0xf]
        %v370 = vld [vmem:[%s303 + $0xc] sm:$0xf]
        %v371 = vld [vmem:[%s303 + $0x10] sm:$0xf]
        %v372 = vld [vmem:[%s303 + $0x14] sm:$0xf]
        %v373 = vld [vmem:[%s303 + $0x18] sm:$0xf]
        %v374 = vld [vmem:[%s303 + $0x1c] sm:$0xf]
        %v375 = vld [vmem:[%s303 + $0x20] sm:$0xf]
        %v376 = vld [vmem:[%s303 + $0x24] sm:$0xf]
        %v377 = vld [vmem:[%s303 + $0x28] sm:$0xf]
        %v378 = vld [vmem:[%s303 + $0x2c] sm:$0xf]
        %v379 = vld [vmem:[%s303 + $0x30] sm:$0xf]
        %v380 = vld [vmem:[%s303 + $0x34] sm:$0xf]
        %v381 = vld [vmem:[%s303 + $0x38] sm:$0xf]
        %v382 = vld [vmem:[%s303 + $0x3c] sm:$0xf]
        %v399 = vunpack.c.l.b16 %v351
        %v400 = vunpack.c.l.b16 %v352
        %v401 = vunpack.c.l.b16 %v353
        %v402 = vunpack.c.l.b16 %v354
        %v403 = vunpack.c.l.b16 %v355
        %v404 = vunpack.c.l.b16 %v356
        %v405 = vunpack.c.l.b16 %v357
        %v406 = vunpack.c.l.b16 %v358
        %v407 = vunpack.c.l.b16 %v359
        %v408 = vunpack.c.l.b16 %v360
        %v409 = vunpack.c.l.b16 %v361
        %v410 = vunpack.c.l.b16 %v362
        %v411 = vunpack.c.l.b16 %v363
        %v412 = vunpack.c.l.b16 %v364
        %v413 = vunpack.c.l.b16 %v365
        %v414 = vunpack.c.l.b16 %v366
        %v415 = vpack.c.b16 %v400, %v399
        %v416 = vpack.c.b16 %v402, %v401
        %v417 = vpack.c.b16 %v404, %v403
        %v418 = vpack.c.b16 %v406, %v405
        %v419 = vpack.c.b16 %v408, %v407
        %v420 = vpack.c.b16 %v410, %v409
        %v421 = vpack.c.b16 %v412, %v411
        %v422 = vpack.c.b16 %v414, %v413
        %v447 = vunpack.c.l.b16 %v367
        %v448 = vunpack.c.l.b16 %v368
        %v449 = vunpack.c.l.b16 %v369
        %v450 = vunpack.c.l.b16 %v370
        %v451 = vunpack.c.l.b16 %v371
        %v452 = vunpack.c.l.b16 %v372
        %v453 = vunpack.c.l.b16 %v373
        %v454 = vunpack.c.l.b16 %v374
        %v455 = vunpack.c.l.b16 %v375
        %v456 = vunpack.c.l.b16 %v376
        %v457 = vunpack.c.l.b16 %v377
        %v458 = vunpack.c.l.b16 %v378
        %v459 = vunpack.c.l.b16 %v379
        %v460 = vunpack.c.l.b16 %v380
        %v461 = vunpack.c.l.b16 %v381
        %v462 = vunpack.c.l.b16 %v382
        %v463 = vpack.c.b16 %v448, %v447
        %v464 = vpack.c.b16 %v450, %v449
        %v465 = vpack.c.b16 %v452, %v451
        %v466 = vpack.c.b16 %v454, %v453
        %v467 = vpack.c.b16 %v456, %v455
        %v468 = vpack.c.b16 %v458, %v457
        %v469 = vpack.c.b16 %v460, %v459
        %v470 = vpack.c.b16 %v462, %v461
        %479 = vmatprep.subr.bf16.mxu0 0
        %480 = vmatpush1.bf16.msra.mxu0 %v470
        %481 = vmatprep.subr.bf16.mxu0 0
        %482 = vmatpush1.bf16.msra.mxu0 %v469
        %483 = vmatprep.subr.bf16.mxu0 0
        %484 = vmatpush1.bf16.msra.mxu0 %v468
        %485 = vmatprep.subr.bf16.mxu0 0
        %486 = vmatpush1.bf16.msra.mxu0 %v467
        %487 = vmatprep.subr.bf16.mxu0 0
        %488 = vmatpush1.bf16.msra.mxu0 %v466
        %489 = vmatprep.subr.bf16.mxu0 0
        %490 = vmatpush1.bf16.msra.mxu0 %v465
        %491 = vmatprep.subr.bf16.mxu0 0
        %492 = vmatpush1.bf16.msra.mxu0 %v464
        %493 = vmatprep.subr.bf16.mxu0 0
        %494 = vmatpush1.bf16.msra.mxu0 %v463
        %495 = vmatprep.subr.bf16.mxu0 0
        %496 = vmatpush2.bf16.msra.mxu0 0
        %497 = vmatprep.subr.bf16.mxu0 0
        %498 = vmatpush2.bf16.msra.mxu0 0
        %499 = vmatprep.subr.bf16.mxu0 0
        %500 = vmatpush2.bf16.msra.mxu0 0
        %501 = vmatprep.subr.bf16.mxu0 0
        %502 = vmatpush2.bf16.msra.mxu0 0
        %503 = vmatprep.subr.bf16.mxu0 0
        %504 = vmatpush2.bf16.msra.mxu0 0
        %505 = vmatprep.subr.bf16.mxu0 0
        %506 = vmatpush2.bf16.msra.mxu0 0
        %507 = vmatprep.subr.bf16.mxu0 0
        %508 = vmatpush2.bf16.msra.mxu0 0
        %509 = vmatprep.subr.bf16.mxu0 0
        %510 = vmatpush2.bf16.msra.mxu0 0
        %511 = vmatprep.mubr.bf16.mxu0 0
        %512 = vmatmul.mubr.bf16.gmra.mxu0 %v415
        %v513 = vpop.f32.mrf.mxu0
        %v514 = vadd.f32 0.0, %v513
        %v515 = vpop.f32.mrf.mxu0
        %v516 = vpop.f32.mrf.mxu0
        %v517 = vadd.f32 0.0, %v516
        %v518 = vpop.f32.mrf.mxu0
        %519 = vmatprep.mubr.bf16.mxu0 0
        %520 = vmatmul.mubr.bf16.gmra.mxu0 %v416
        %v521 = vpop.f32.mrf.mxu0
        %v522 = vadd.f32 0.0, %v521
        %v523 = vpop.f32.mrf.mxu0
        %v524 = vpop.f32.mrf.mxu0
        %v525 = vadd.f32 0.0, %v524
        %v526 = vpop.f32.mrf.mxu0
        %527 = vmatprep.mubr.bf16.mxu0 0
        %528 = vmatmul.mubr.bf16.gmra.mxu0 %v417
        %v529 = vpop.f32.mrf.mxu0
        %v530 = vadd.f32 0.0, %v529
        %v531 = vpop.f32.mrf.mxu0
        %v532 = vpop.f32.mrf.mxu0
        %v533 = vadd.f32 0.0, %v532
        %v534 = vpop.f32.mrf.mxu0
        %535 = vmatprep.mubr.bf16.mxu0 0
        %536 = vmatmul.mubr.bf16.gmra.mxu0 %v418
        %v537 = vpop.f32.mrf.mxu0
        %v538 = vadd.f32 0.0, %v537
        %v539 = vpop.f32.mrf.mxu0
        %v540 = vpop.f32.mrf.mxu0
        %v541 = vadd.f32 0.0, %v540
        %v542 = vpop.f32.mrf.mxu0
        %543 = vmatprep.mubr.bf16.mxu0 0
        %544 = vmatmul.mubr.bf16.gmra.mxu0 %v419
        %v545 = vpop.f32.mrf.mxu0
        %v546 = vadd.f32 0.0, %v545
        %v547 = vpop.f32.mrf.mxu0
        %v548 = vpop.f32.mrf.mxu0
        %v549 = vadd.f32 0.0, %v548
        %v550 = vpop.f32.mrf.mxu0
        %551 = vmatprep.mubr.bf16.mxu0 0
        %552 = vmatmul.mubr.bf16.gmra.mxu0 %v420
        %v553 = vpop.f32.mrf.mxu0
        %v554 = vadd.f32 0.0, %v553
        %v555 = vpop.f32.mrf.mxu0
        %v556 = vpop.f32.mrf.mxu0
        %v557 = vadd.f32 0.0, %v556
        %v558 = vpop.f32.mrf.mxu0
        %559 = vmatprep.mubr.bf16.mxu0 0
        %560 = vmatmul.mubr.bf16.gmra.mxu0 %v421
        %v561 = vpop.f32.mrf.mxu0
        %v562 = vadd.f32 0.0, %v561
        %v563 = vpop.f32.mrf.mxu0
        %v564 = vpop.f32.mrf.mxu0
        %v565 = vadd.f32 0.0, %v564
        %v566 = vpop.f32.mrf.mxu0
        %567 = vmatprep.mubr.bf16.mxu0 0
        %568 = vmatmul.mubr.bf16.gmra.mxu0 %v422
        %v569 = vpop.f32.mrf.mxu0
        %v570 = vadd.f32 0.0, %v569
        %v571 = vpop.f32.mrf.mxu0
        %v572 = vpop.f32.mrf.mxu0
        %v573 = vadd.f32 0.0, %v572
        %v574 = vpop.f32.mrf.mxu0
        %575 = vdwg.mxu0
        %v576 = vadd.f32 %v335, %v514
        %v577 = vadd.f32 %v336, %v517
        %v578 = vadd.f32 %v337, %v522
        %v579 = vadd.f32 %v338, %v525
        %v580 = vadd.f32 %v339, %v530
        %v581 = vadd.f32 %v340, %v533
        %v582 = vadd.f32 %v341, %v538
        %v583 = vadd.f32 %v342, %v541
        %v584 = vadd.f32 %v343, %v546
        %v585 = vadd.f32 %v344, %v549
        %v586 = vadd.f32 %v345, %v554
        %v587 = vadd.f32 %v346, %v557
        %v588 = vadd.f32 %v347, %v562
        %v589 = vadd.f32 %v348, %v565
        %v590 = vadd.f32 %v349, %v570
        %v591 = vadd.f32 %v350, %v573
        %592 = vst [vmem:[#allocation2] sm:$0xff] %v576
        %593 = vst [vmem:[#allocation2 + $0x8] sm:$0xff] %v577
        %594 = vst [vmem:[#allocation2 + $0x10] sm:$0xff] %v578
        %595 = vst [vmem:[#allocation2 + $0x18] sm:$0xff] %v579
        %596 = vst [vmem:[#allocation2 + $0x20] sm:$0xff] %v580
        %597 = vst [vmem:[#allocation2 + $0x28] sm:$0xff] %v581
        %598 = vst [vmem:[#allocation2 + $0x30] sm:$0xff] %v582
        %599 = vst [vmem:[#allocation2 + $0x38] sm:$0xff] %v583
        %600 = vst [vmem:[#allocation2 + $0x40] sm:$0xff] %v584
        %601 = vst [vmem:[#allocation2 + $0x48] sm:$0xff] %v585
        %602 = vst [vmem:[#allocation2 + $0x50] sm:$0xff] %v586
        %603 = vst [vmem:[#allocation2 + $0x58] sm:$0xff] %v587
        %604 = vst [vmem:[#allocation2 + $0x60] sm:$0xff] %v588
        %605 = vst [vmem:[#allocation2 + $0x68] sm:$0xff] %v589
        %606 = vst [vmem:[#allocation2 + $0x70] sm:$0xff] %v590
        %607 = vst [vmem:[#allocation2 + $0x78] sm:$0xff] %v591
        %p608 = scmp.eq.s32.totalorder %s20, 2
        // Predicated region
        $region74: #{bottleneck_forward.14} parent=64 // pred_check
          %p609 = pneg %p608
        $region75: #{bottleneck_forward.14} parent=64 // pred_check_branch
          %611 = sbr.rel (%p609) target = $region77
        $region76: #{bottleneck_forward.14} parent=64 // pred_region
          %v612 = vld [vmem:[#allocation2] sm:$0xff]
          %v613 = vld [vmem:[#allocation2 + $0x8] sm:$0xff]
          %v614 = vld [vmem:[#allocation2 + $0x10] sm:$0xff]
          %v615 = vld [vmem:[#allocation2 + $0x18] sm:$0xff]
          %v616 = vld [vmem:[#allocation2 + $0x20] sm:$0xff]
          %v617 = vld [vmem:[#allocation2 + $0x28] sm:$0xff]
          %v618 = vld [vmem:[#allocation2 + $0x30] sm:$0xff]
          %v619 = vld [vmem:[#allocation2 + $0x38] sm:$0xff]
          %v620 = vld [vmem:[#allocation2 + $0x40] sm:$0xff]
          %v621 = vld [vmem:[#allocation2 + $0x48] sm:$0xff]
          %v622 = vld [vmem:[#allocation2 + $0x50] sm:$0xff]
          %v623 = vld [vmem:[#allocation2 + $0x58] sm:$0xff]
          %v624 = vld [vmem:[#allocation2 + $0x60] sm:$0xff]
          %v625 = vld [vmem:[#allocation2 + $0x68] sm:$0xff]
          %v626 = vld [vmem:[#allocation2 + $0x70] sm:$0xff]
          %v627 = vld [vmem:[#allocation2 + $0x78] sm:$0xff]
          %628 = vst [vmem:[%s312] sm:$0xff] %v612
          %629 = vst [vmem:[%s312 + $0x8] sm:$0xff] %v613
          %630 = vst [vmem:[%s312 + $0x10] sm:$0xff] %v614
          %631 = vst [vmem:[%s312 + $0x18] sm:$0xff] %v615
          %632 = vst [vmem:[%s312 + $0x20] sm:$0xff] %v616
          %633 = vst [vmem:[%s312 + $0x28] sm:$0xff] %v617
          %634 = vst [vmem:[%s312 + $0x30] sm:$0xff] %v618
          %635 = vst [vmem:[%s312 + $0x38] sm:$0xff] %v619
          %636 = vst [vmem:[%s312 + $0x40] sm:$0xff] %v620
          %637 = vst [vmem:[%s312 + $0x48] sm:$0xff] %v621
          %638 = vst [vmem:[%s312 + $0x50] sm:$0xff] %v622
          %639 = vst [vmem:[%s312 + $0x58] sm:$0xff] %v623
          %640 = vst [vmem:[%s312 + $0x60] sm:$0xff] %v624
          %641 = vst [vmem:[%s312 + $0x68] sm:$0xff] %v625
          %642 = vst [vmem:[%s312 + $0x70] sm:$0xff] %v626
          %643 = vst [vmem:[%s312 + $0x78] sm:$0xff] %v627
        $region77: #{bottleneck_forward.14} parent=64 // pred_fallthru
          _
        %s644 = smul.u32 16, %s18
        %p645 = scmp.lt.s32.totalorder %s644, 15
        %s646 = scalar_select %p645, %s644, 15
        %p647 = scmp.lt.s32.totalorder %s19, 0
        %s648 = scalar_select %p647, %s19, 0
        %s649 = sadd.s32 %s648, %s646
        %s650 = smul.addr %s649, 8
        %s651 = scalar_lea.vmem %s2, %s650
        // Predicated region
        $region78: #{bottleneck_forward.14} parent=64 // pred_check
          %p652 = pneg %p108
        $region79: #{bottleneck_forward.14} parent=64 // pred_check_branch
          %654 = sbr.rel (%p652) target = $region81
        $region80: #{bottleneck_forward.14} parent=64 // pred_region
          %s655 = smul.u32 16, %s18
        $region81: #{bottleneck_forward.14} parent=64 // pred_fallthru
          _
        // Predicated region
        $region82: #{bottleneck_forward.14} parent=64 // pred_check
          %p656 = pneg %p108
        $region83: #{bottleneck_forward.14} parent=64 // pred_check_branch
          %658 = sbr.rel (%p656) target = $region85
        $region84: #{bottleneck_forward.14} parent=64 // pred_region
          %s659 = smul.u32 16, %s18
          %p660 = scmp.lt.s32.totalorder %s659, 15
          %s661 = scalar_select %p660, %s659, 15
          %p662 = scmp.lt.s32.totalorder %s19, 0
          %s663 = scalar_select %p662, %s19, 0
          %s664 = sadd.s32 %s663, %s661
          %s665 = smul.addr %s664, 8
          %s666 = scalar_lea.vmem %s2, %s665
        $region85: #{bottleneck_forward.14} parent=64 // pred_fallthru
          _
      $region65: #{bottleneck_forward.14} parent=5 // pred_fallthru
        _
      %p667 = scmp.le.s32.totalorder 2, %s8
      // Predicated region
      $region86: #{bottleneck_forward.14} parent=5 // pred_check
        %p668 = pneg %p667
      $region87: #{bottleneck_forward.14} parent=5 // pred_check_branch
        %670 = sbr.rel (%p668) target = $region89
      $region88: #{bottleneck_forward.14} parent=5 // pred_region
        %s671 = ssub.s32 %s8, 2
      $region89: #{bottleneck_forward.14} parent=5 // pred_fallthru
        _
    $region6: #{bottleneck_forward.14} parent=1 // loop_footer
      %s12 = sadd.s32 1, %s8
    $region7: #{bottleneck_forward.14} parent=1 // loop_footer_branch
      %7 = sbr.rel target = $region3
    $region8: #{bottleneck_forward.14} parent=1 // loop_exit
      _

// kernel: bottleneck_forward.15
$region0: #{bottleneck_forward.15}
  #allocation0 [shape = 'u32[]', space=smem, size = 0x4, offset = 0x4, fixed_abs, tag = 'smem constant byte address 0x4 - core index']
  #allocation1 [shape = 'u32[144,128]{1,0:T(1,128)}', space=vmem, size = 0x12000, scoped, tag = 'internal scratch']
  %s0 = inlined_call_operand.vmem [shape: f32[128,32], index: 0, kind: input, shape index: {}]
  %s1 = inlined_call_operand.vmem [shape: f32[2,32], index: 1, kind: output, shape index: {}]
  %s2 = sld [smem:[#allocation0]]
  $region18: #{bottleneck_forward.15} parent=0
    _
  %s4 = ssub.s32 1, %s2
  %s5 = scalar_select 0, %s4, %s2
  // Predicated region
  $region2: #{bottleneck_forward.15} parent=0 // pred_check
    _
  $region3: #{bottleneck_forward.15} parent=0 // pred_check_branch
    %7 = sbr.rel (0) target = $region5
  $region4: #{bottleneck_forward.15} parent=0 // pred_region
    _
  $region5: #{bottleneck_forward.15} parent=0 // pred_fallthru
    _
  %p8 = scmp.eq.s32.totalorder 0, 0
  // Predicated region
  $region6: #{bottleneck_forward.15} parent=0 // pred_check
    %p9 = pneg %p8
  $region7: #{bottleneck_forward.15} parent=0 // pred_check_branch
    %11 = sbr.rel (%p9) target = $region9
  $region8: #{bottleneck_forward.15} parent=0 // pred_region
    %vm12 = vcmask 254976
    %13 = vst.msk [vmem:[%s1] sm:$0x3] %vm12, 0.0
  $region9: #{bottleneck_forward.15} parent=0 // pred_fallthru
    _
  %v14 = vld [vmem:[%s0] sm:$0xff]
  %v15 = vld [vmem:[%s0 + $0x8] sm:$0xff]
  %v16 = vld [vmem:[%s0 + $0x10] sm:$0xff]
  %v17 = vld [vmem:[%s0 + $0x18] sm:$0xff]
  %v18 = vld [vmem:[%s0 + $0x20] sm:$0xff]
  %v19 = vld [vmem:[%s0 + $0x28] sm:$0xff]
  %v20 = vld [vmem:[%s0 + $0x30] sm:$0xff]
  %v21 = vld [vmem:[%s0 + $0x38] sm:$0xff]
  %v22 = vld [vmem:[%s0 + $0x40] sm:$0xff]
  %v23 = vld [vmem:[%s0 + $0x48] sm:$0xff]
  %v24 = vld [vmem:[%s0 + $0x50] sm:$0xff]
  %v25 = vld [vmem:[%s0 + $0x58] sm:$0xff]
  %v26 = vld [vmem:[%s0 + $0x60] sm:$0xff]
  %v27 = vld [vmem:[%s0 + $0x68] sm:$0xff]
  %v28 = vld [vmem:[%s0 + $0x70] sm:$0xff]
  %v29 = vld [vmem:[%s0 + $0x78] sm:$0xff]
  %vm30 = vcmask 261120
  %v31 = vsel %vm30, %v14, 0.0
  %v32 = vsel %vm30, %v15, 0.0
  %v33 = vadd.f32 %v31, %v32
  %v34 = vsel %vm30, %v16, 0.0
  %v35 = vadd.f32 %v33, %v34
  %v36 = vsel %vm30, %v17, 0.0
  %v37 = vadd.f32 %v35, %v36
  %v38 = vsel %vm30, %v18, 0.0
  %v39 = vadd.f32 %v37, %v38
  %v40 = vsel %vm30, %v19, 0.0
  %v41 = vadd.f32 %v39, %v40
  %v42 = vsel %vm30, %v20, 0.0
  %v43 = vadd.f32 %v41, %v42
  %v44 = vsel %vm30, %v21, 0.0
  %v45 = vadd.f32 %v43, %v44
  %v46 = vsel %vm30, %v22, 0.0
  %v47 = vadd.f32 %v45, %v46
  %v48 = vsel %vm30, %v23, 0.0
  %v49 = vadd.f32 %v47, %v48
  %v50 = vsel %vm30, %v24, 0.0
  %v51 = vadd.f32 %v49, %v50
  %v52 = vsel %vm30, %v25, 0.0
  %v53 = vadd.f32 %v51, %v52
  %v54 = vsel %vm30, %v26, 0.0
  %v55 = vadd.f32 %v53, %v54
  %v56 = vsel %vm30, %v27, 0.0
  %v57 = vadd.f32 %v55, %v56
  %v58 = vsel %vm30, %v28, 0.0
  %v59 = vadd.f32 %v57, %v58
  %v60 = vsel %vm30, %v29, 0.0
  %v61 = vadd.f32 %v59, %v60
  %v62 = vrot.slane %v61, 4
  %v63 = vadd.f32 %v61, %v62
  %v64 = vrot.slane %v63, 2
  %v65 = vadd.f32 %v63, %v64
  %v66 = vrot.slane %v65, 1
  %v67 = vadd.f32 %v65, %v66
  %v68 = vmul.f32 %v14, %v14
  %v69 = vmul.f32 %v15, %v15
  %v70 = vmul.f32 %v16, %v16
  %v71 = vmul.f32 %v17, %v17
  %v72 = vmul.f32 %v18, %v18
  %v73 = vmul.f32 %v19, %v19
  %v74 = vmul.f32 %v20, %v20
  %v75 = vmul.f32 %v21, %v21
  %v76 = vmul.f32 %v22, %v22
  %v77 = vmul.f32 %v23, %v23
  %v78 = vmul.f32 %v24, %v24
  %v79 = vmul.f32 %v25, %v25
  %v80 = vmul.f32 %v26, %v26
  %v81 = vmul.f32 %v27, %v27
  %v82 = vmul.f32 %v28, %v28
  %v83 = vmul.f32 %v29, %v29
  %v84 = vsel %vm30, %v68, 0.0
  %v85 = vsel %vm30, %v69, 0.0
  %v86 = vadd.f32 %v84, %v85
  %v87 = vsel %vm30, %v70, 0.0
  %v88 = vadd.f32 %v86, %v87
  %v89 = vsel %vm30, %v71, 0.0
  %v90 = vadd.f32 %v88, %v89
  %v91 = vsel %vm30, %v72, 0.0
  %v92 = vadd.f32 %v90, %v91
  %v93 = vsel %vm30, %v73, 0.0
  %v94 = vadd.f32 %v92, %v93
  %v95 = vsel %vm30, %v74, 0.0
  %v96 = vadd.f32 %v94, %v95
  %v97 = vsel %vm30, %v75, 0.0
  %v98 = vadd.f32 %v96, %v97
  %v99 = vsel %vm30, %v76, 0.0
  %v100 = vadd.f32 %v98, %v99
  %v101 = vsel %vm30, %v77, 0.0
  %v102 = vadd.f32 %v100, %v101
  %v103 = vsel %vm30, %v78, 0.0
  %v104 = vadd.f32 %v102, %v103
  %v105 = vsel %vm30, %v79, 0.0
  %v106 = vadd.f32 %v104, %v105
  %v107 = vsel %vm30, %v80, 0.0
  %v108 = vadd.f32 %v106, %v107
  %v109 = vsel %vm30, %v81, 0.0
  %v110 = vadd.f32 %v108, %v109
  %v111 = vsel %vm30, %v82, 0.0
  %v112 = vadd.f32 %v110, %v111
  %v113 = vsel %vm30, %v83, 0.0
  %v114 = vadd.f32 %v112, %v113
  %v115 = vrot.slane %v114, 4
  %v116 = vadd.f32 %v114, %v115
  %v117 = vrot.slane %v116, 2
  %v118 = vadd.f32 %v116, %v117
  %v119 = vrot.slane %v118, 1
  %v120 = vadd.f32 %v118, %v119
  %v121 = vld [vmem:[%s1] sm:$0x3]
  %vm122 = vcmask 1040384
  %v123 = vsel %vm122, %v67, %v120
  %v124 = vadd.f32 %v121, %v123
  %vm125 = vcmask 254976
  %126 = vst.msk [vmem:[%s1] sm:$0x3] %vm125, %v124
  // Predicated region
  $region10: #{bottleneck_forward.15} parent=0 // pred_check
    _
  $region11: #{bottleneck_forward.15} parent=0 // pred_check_branch
    %128 = sbr.rel (0) target = $region13
  $region12: #{bottleneck_forward.15} parent=0 // pred_region
    _
  $region13: #{bottleneck_forward.15} parent=0 // pred_fallthru
    _
  // Predicated region
  $region14: #{bottleneck_forward.15} parent=0 // pred_check
    _
  $region15: #{bottleneck_forward.15} parent=0 // pred_check_branch
    %130 = sbr.rel (0) target = $region17
  $region16: #{bottleneck_forward.15} parent=0 // pred_region
    _
  $region17: #{bottleneck_forward.15} parent=0 // pred_fallthru
    _

// kernel: bottleneck_forward.16
$region0: #{bottleneck_forward.16}
  #allocation0 [shape = 'u32[]', space=smem, size = 0x4, offset = 0x4, fixed_abs, tag = 'smem constant byte address 0x4 - core index']
  #allocation1 [shape = 'u32[144,128]{1,0:T(1,128)}', space=vmem, size = 0x12000, scoped, tag = 'internal scratch']
  %s0 = inlined_call_operand.vmem [shape: f32[128,32], index: 0, kind: input, shape index: {}]
  %s1 = inlined_call_operand.vmem [shape: f32[1,32], index: 1, kind: input, shape index: {}]
  %s2 = inlined_call_operand.vmem [shape: f32[1,32], index: 2, kind: input, shape index: {}]
  %s3 = inlined_call_operand.vmem [shape: f32[128,32], index: 3, kind: output, shape index: {}]
  %s4 = sld [smem:[#allocation0]]
  $region22: #{bottleneck_forward.16} parent=0
    _
  %s6 = ssub.s32 1, %s4
  %s7 = scalar_select 0, %s6, %s4
  // Predicated region
  $region2: #{bottleneck_forward.16} parent=0 // pred_check
    _
  $region3: #{bottleneck_forward.16} parent=0 // pred_check_branch
    %9 = sbr.rel (0) target = $region5
  $region4: #{bottleneck_forward.16} parent=0 // pred_region
    _
  $region5: #{bottleneck_forward.16} parent=0 // pred_fallthru
    _
  // Predicated region
  $region6: #{bottleneck_forward.16} parent=0 // pred_check
    _
  $region7: #{bottleneck_forward.16} parent=0 // pred_check_branch
    %11 = sbr.rel (0) target = $region9
  $region8: #{bottleneck_forward.16} parent=0 // pred_region
    _
  $region9: #{bottleneck_forward.16} parent=0 // pred_fallthru
    _
  // Predicated region
  $region10: #{bottleneck_forward.16} parent=0 // pred_check
    _
  $region11: #{bottleneck_forward.16} parent=0 // pred_check_branch
    %13 = sbr.rel (0) target = $region13
  $region12: #{bottleneck_forward.16} parent=0 // pred_region
    _
  $region13: #{bottleneck_forward.16} parent=0 // pred_fallthru
    _
  %v14 = vld [vmem:[%s0] sm:$0xff]
  %v15 = vld [vmem:[%s0 + $0x8] sm:$0xff]
  %v16 = vld [vmem:[%s0 + $0x10] sm:$0xff]
  %v17 = vld [vmem:[%s0 + $0x18] sm:$0xff]
  %v18 = vld [vmem:[%s0 + $0x20] sm:$0xff]
  %v19 = vld [vmem:[%s0 + $0x28] sm:$0xff]
  %v20 = vld [vmem:[%s0 + $0x30] sm:$0xff]
  %v21 = vld [vmem:[%s0 + $0x38] sm:$0xff]
  %v22 = vld [vmem:[%s0 + $0x40] sm:$0xff]
  %v23 = vld [vmem:[%s0 + $0x48] sm:$0xff]
  %v24 = vld [vmem:[%s0 + $0x50] sm:$0xff]
  %v25 = vld [vmem:[%s0 + $0x58] sm:$0xff]
  %v26 = vld [vmem:[%s0 + $0x60] sm:$0xff]
  %v27 = vld [vmem:[%s0 + $0x68] sm:$0xff]
  %v28 = vld [vmem:[%s0 + $0x70] sm:$0xff]
  %v29 = vld [vmem:[%s0 + $0x78] sm:$0xff]
  %v30 = vld [vmem:[%s1] sm:$0x1]
  %v32 = vlaneseq
  %v33 = vshrl.u32 %v32, 7
  %v34 = vsub.s32 0, %v33
  %v35 = vrot.slane %v30, %v34
  %v37 = vmul.f32 %v14, %v35
  %v38 = vmul.f32 %v15, %v35
  %v39 = vmul.f32 %v16, %v35
  %v40 = vmul.f32 %v17, %v35
  %v41 = vmul.f32 %v18, %v35
  %v42 = vmul.f32 %v19, %v35
  %v43 = vmul.f32 %v20, %v35
  %v44 = vmul.f32 %v21, %v35
  %v45 = vmul.f32 %v22, %v35
  %v46 = vmul.f32 %v23, %v35
  %v47 = vmul.f32 %v24, %v35
  %v48 = vmul.f32 %v25, %v35
  %v49 = vmul.f32 %v26, %v35
  %v50 = vmul.f32 %v27, %v35
  %v51 = vmul.f32 %v28, %v35
  %v52 = vmul.f32 %v29, %v35
  %v53 = vld [vmem:[%s2] sm:$0x1]
  %v55 = vlaneseq
  %v56 = vshrl.u32 %v55, 7
  %v57 = vsub.s32 0, %v56
  %v58 = vrot.slane %v53, %v57
  %v60 = vadd.f32 %v37, %v58
  %v61 = vadd.f32 %v38, %v58
  %v62 = vadd.f32 %v39, %v58
  %v63 = vadd.f32 %v40, %v58
  %v64 = vadd.f32 %v41, %v58
  %v65 = vadd.f32 %v42, %v58
  %v66 = vadd.f32 %v43, %v58
  %v67 = vadd.f32 %v44, %v58
  %v68 = vadd.f32 %v45, %v58
  %v69 = vadd.f32 %v46, %v58
  %v70 = vadd.f32 %v47, %v58
  %v71 = vadd.f32 %v48, %v58
  %v72 = vadd.f32 %v49, %v58
  %v73 = vadd.f32 %v50, %v58
  %v74 = vadd.f32 %v51, %v58
  %v75 = vadd.f32 %v52, %v58
  %v76 = vmax.f32 %v60, 0.0
  %v77 = vmax.f32 %v61, 0.0
  %v78 = vmax.f32 %v62, 0.0
  %v79 = vmax.f32 %v63, 0.0
  %v80 = vmax.f32 %v64, 0.0
  %v81 = vmax.f32 %v65, 0.0
  %v82 = vmax.f32 %v66, 0.0
  %v83 = vmax.f32 %v67, 0.0
  %v84 = vmax.f32 %v68, 0.0
  %v85 = vmax.f32 %v69, 0.0
  %v86 = vmax.f32 %v70, 0.0
  %v87 = vmax.f32 %v71, 0.0
  %v88 = vmax.f32 %v72, 0.0
  %v89 = vmax.f32 %v73, 0.0
  %v90 = vmax.f32 %v74, 0.0
  %v91 = vmax.f32 %v75, 0.0
  %vm92 = vcmask 261120
  %93 = vst.msk [vmem:[%s3] sm:$0xff] %vm92, %v76
  %94 = vst.msk [vmem:[%s3 + $0x8] sm:$0xff] %vm92, %v77
  %95 = vst.msk [vmem:[%s3 + $0x10] sm:$0xff] %vm92, %v78
  %96 = vst.msk [vmem:[%s3 + $0x18] sm:$0xff] %vm92, %v79
  %97 = vst.msk [vmem:[%s3 + $0x20] sm:$0xff] %vm92, %v80
  %98 = vst.msk [vmem:[%s3 + $0x28] sm:$0xff] %vm92, %v81
  %99 = vst.msk [vmem:[%s3 + $0x30] sm:$0xff] %vm92, %v82
  %100 = vst.msk [vmem:[%s3 + $0x38] sm:$0xff] %vm92, %v83
  %101 = vst.msk [vmem:[%s3 + $0x40] sm:$0xff] %vm92, %v84
  %102 = vst.msk [vmem:[%s3 + $0x48] sm:$0xff] %vm92, %v85
  %103 = vst.msk [vmem:[%s3 + $0x50] sm:$0xff] %vm92, %v86
  %104 = vst.msk [vmem:[%s3 + $0x58] sm:$0xff] %vm92, %v87
  %105 = vst.msk [vmem:[%s3 + $0x60] sm:$0xff] %vm92, %v88
  %106 = vst.msk [vmem:[%s3 + $0x68] sm:$0xff] %vm92, %v89
  %107 = vst.msk [vmem:[%s3 + $0x70] sm:$0xff] %vm92, %v90
  %108 = vst.msk [vmem:[%s3 + $0x78] sm:$0xff] %vm92, %v91
  // Predicated region
  $region14: #{bottleneck_forward.16} parent=0 // pred_check
    _
  $region15: #{bottleneck_forward.16} parent=0 // pred_check_branch
    %110 = sbr.rel (0) target = $region17
  $region16: #{bottleneck_forward.16} parent=0 // pred_region
    _
  $region17: #{bottleneck_forward.16} parent=0 // pred_fallthru
    _
  // Predicated region
  $region18: #{bottleneck_forward.16} parent=0 // pred_check
    _
  $region19: #{bottleneck_forward.16} parent=0 // pred_check_branch
    %112 = sbr.rel (0) target = $region21
  $region20: #{bottleneck_forward.16} parent=0 // pred_region
    _
  $region21: #{bottleneck_forward.16} parent=0 // pred_fallthru
    _

// kernel: bottleneck_forward.18
$region0: #{bottleneck_forward.18}
  #allocation0 [shape = 'u32[]', space=smem, size = 0x4, offset = 0x4, fixed_abs, tag = 'smem constant byte address 0x4 - core index']
  #allocation1 [shape = 'u32[144,128]{1,0:T(1,128)}', space=vmem, size = 0x12000, scoped, tag = 'internal scratch']
  %s0 = inlined_call_operand.vmem [shape: f32[128,128], index: 0, kind: input, shape index: {}]
  %s1 = inlined_call_operand.vmem [shape: f32[2,128], index: 1, kind: output, shape index: {}]
  %s2 = sld [smem:[#allocation0]]
  $region18: #{bottleneck_forward.18} parent=0
    _
  %s4 = ssub.s32 1, %s2
  %s5 = scalar_select 0, %s4, %s2
  // Predicated region
  $region2: #{bottleneck_forward.18} parent=0 // pred_check
    _
  $region3: #{bottleneck_forward.18} parent=0 // pred_check_branch
    %7 = sbr.rel (0) target = $region5
  $region4: #{bottleneck_forward.18} parent=0 // pred_region
    _
  $region5: #{bottleneck_forward.18} parent=0 // pred_fallthru
    _
  %p8 = scmp.eq.s32.totalorder 0, 0
  // Predicated region
  $region6: #{bottleneck_forward.18} parent=0 // pred_check
    %p9 = pneg %p8
  $region7: #{bottleneck_forward.18} parent=0 // pred_check_branch
    %11 = sbr.rel (%p9) target = $region9
  $region8: #{bottleneck_forward.18} parent=0 // pred_region
    %12 = vst [vmem:[%s1] sm:$0x3] 0.0
  $region9: #{bottleneck_forward.18} parent=0 // pred_fallthru
    _
  %v13 = vld [vmem:[%s0] sm:$0xff]
  %v14 = vld [vmem:[%s0 + $0x8] sm:$0xff]
  %v15 = vld [vmem:[%s0 + $0x10] sm:$0xff]
  %v16 = vld [vmem:[%s0 + $0x18] sm:$0xff]
  %v17 = vld [vmem:[%s0 + $0x20] sm:$0xff]
  %v18 = vld [vmem:[%s0 + $0x28] sm:$0xff]
  %v19 = vld [vmem:[%s0 + $0x30] sm:$0xff]
  %v20 = vld [vmem:[%s0 + $0x38] sm:$0xff]
  %v21 = vld [vmem:[%s0 + $0x40] sm:$0xff]
  %v22 = vld [vmem:[%s0 + $0x48] sm:$0xff]
  %v23 = vld [vmem:[%s0 + $0x50] sm:$0xff]
  %v24 = vld [vmem:[%s0 + $0x58] sm:$0xff]
  %v25 = vld [vmem:[%s0 + $0x60] sm:$0xff]
  %v26 = vld [vmem:[%s0 + $0x68] sm:$0xff]
  %v27 = vld [vmem:[%s0 + $0x70] sm:$0xff]
  %v28 = vld [vmem:[%s0 + $0x78] sm:$0xff]
  %v29 = vadd.f32 %v13, %v14
  %v30 = vadd.f32 %v29, %v15
  %v31 = vadd.f32 %v30, %v16
  %v32 = vadd.f32 %v31, %v17
  %v33 = vadd.f32 %v32, %v18
  %v34 = vadd.f32 %v33, %v19
  %v35 = vadd.f32 %v34, %v20
  %v36 = vadd.f32 %v35, %v21
  %v37 = vadd.f32 %v36, %v22
  %v38 = vadd.f32 %v37, %v23
  %v39 = vadd.f32 %v38, %v24
  %v40 = vadd.f32 %v39, %v25
  %v41 = vadd.f32 %v40, %v26
  %v42 = vadd.f32 %v41, %v27
  %v43 = vadd.f32 %v42, %v28
  %v44 = vrot.slane %v43, 4
  %v45 = vadd.f32 %v43, %v44
  %v46 = vrot.slane %v45, 2
  %v47 = vadd.f32 %v45, %v46
  %v48 = vrot.slane %v47, 1
  %v49 = vadd.f32 %v47, %v48
  %v50 = vmul.f32 %v13, %v13
  %v51 = vmul.f32 %v14, %v14
  %v52 = vmul.f32 %v15, %v15
  %v53 = vmul.f32 %v16, %v16
  %v54 = vmul.f32 %v17, %v17
  %v55 = vmul.f32 %v18, %v18
  %v56 = vmul.f32 %v19, %v19
  %v57 = vmul.f32 %v20, %v20
  %v58 = vmul.f32 %v21, %v21
  %v59 = vmul.f32 %v22, %v22
  %v60 = vmul.f32 %v23, %v23
  %v61 = vmul.f32 %v24, %v24
  %v62 = vmul.f32 %v25, %v25
  %v63 = vmul.f32 %v26, %v26
  %v64 = vmul.f32 %v27, %v27
  %v65 = vmul.f32 %v28, %v28
  %v66 = vadd.f32 %v50, %v51
  %v67 = vadd.f32 %v66, %v52
  %v68 = vadd.f32 %v67, %v53
  %v69 = vadd.f32 %v68, %v54
  %v70 = vadd.f32 %v69, %v55
  %v71 = vadd.f32 %v70, %v56
  %v72 = vadd.f32 %v71, %v57
  %v73 = vadd.f32 %v72, %v58
  %v74 = vadd.f32 %v73, %v59
  %v75 = vadd.f32 %v74, %v60
  %v76 = vadd.f32 %v75, %v61
  %v77 = vadd.f32 %v76, %v62
  %v78 = vadd.f32 %v77, %v63
  %v79 = vadd.f32 %v78, %v64
  %v80 = vadd.f32 %v79, %v65
  %v81 = vrot.slane %v80, 4
  %v82 = vadd.f32 %v80, %v81
  %v83 = vrot.slane %v82, 2
  %v84 = vadd.f32 %v82, %v83
  %v85 = vrot.slane %v84, 1
  %v86 = vadd.f32 %v84, %v85
  %v87 = vld [vmem:[%s1] sm:$0x3]
  %vm88 = vcmask 1040384
  %v89 = vsel %vm88, %v49, %v86
  %v90 = vadd.f32 %v87, %v89
  %91 = vst [vmem:[%s1] sm:$0x3] %v90
  // Predicated region
  $region10: #{bottleneck_forward.18} parent=0 // pred_check
    _
  $region11: #{bottleneck_forward.18} parent=0 // pred_check_branch
    %93 = sbr.rel (0) target = $region13
  $region12: #{bottleneck_forward.18} parent=0 // pred_region
    _
  $region13: #{bottleneck_forward.18} parent=0 // pred_fallthru
    _
  // Predicated region
  $region14: #{bottleneck_forward.18} parent=0 // pred_check
    _
  $region15: #{bottleneck_forward.18} parent=0 // pred_check_branch
    %95 = sbr.rel (0) target = $region17
  $region16: #{bottleneck_forward.18} parent=0 // pred_region
    _
  $region17: #{bottleneck_forward.18} parent=0 // pred_fallthru
    _

// kernel: bottleneck_forward.17
$region0: #{bottleneck_forward.17}
  #allocation0 [shape = 'u32[]', space=smem, size = 0x4, offset = 0x4, fixed_abs, tag = 'smem constant byte address 0x4 - core index']
  #allocation1 [shape = 'u32[144,128]{1,0:T(1,128)}', space=vmem, size = 0x12000, scoped, tag = 'internal scratch']
  #allocation2 [shape = 'f32[128,128]{1,0:T(8,128)}', space=vmem, size = 0x10000, scoped, tag = 'scratch operand']
  %s0 = inlined_call_operand.vmem [shape: bf16[128,128], index: 0, kind: input, shape index: {}]
  %s1 = inlined_call_operand.vmem [shape: bf16[128,128], index: 1, kind: input, shape index: {}]
  %s2 = inlined_call_operand.vmem [shape: f32[128,128], index: 2, kind: output, shape index: {}]
  %s3 = sld [smem:[#allocation0]]
  $region26: #{bottleneck_forward.17} parent=0
    _
  %s5 = ssub.s32 1, %s3
  %s6 = scalar_select 0, %s5, %s3
  // Predicated region
  $region2: #{bottleneck_forward.17} parent=0 // pred_check
    _
  $region3: #{bottleneck_forward.17} parent=0 // pred_check_branch
    %8 = sbr.rel (0) target = $region5
  $region4: #{bottleneck_forward.17} parent=0 // pred_region
    _
  $region5: #{bottleneck_forward.17} parent=0 // pred_fallthru
    _
  // Predicated region
  $region6: #{bottleneck_forward.17} parent=0 // pred_check
    _
  $region7: #{bottleneck_forward.17} parent=0 // pred_check_branch
    %10 = sbr.rel (0) target = $region9
  $region8: #{bottleneck_forward.17} parent=0 // pred_region
    _
  $region9: #{bottleneck_forward.17} parent=0 // pred_fallthru
    _
  %p12 = scmp.eq.s32.totalorder 0, 0
  // Predicated region
  $region10: #{bottleneck_forward.17} parent=0 // pred_check
    %p13 = pneg %p12
  $region11: #{bottleneck_forward.17} parent=0 // pred_check_branch
    %15 = sbr.rel (%p13) target = $region13
  $region12: #{bottleneck_forward.17} parent=0 // pred_region
    %16 = vst [vmem:[#allocation2] sm:$0xff] 0.0
    %17 = vst [vmem:[#allocation2 + $0x8] sm:$0xff] 0.0
    %18 = vst [vmem:[#allocation2 + $0x10] sm:$0xff] 0.0
    %19 = vst [vmem:[#allocation2 + $0x18] sm:$0xff] 0.0
    %20 = vst [vmem:[#allocation2 + $0x20] sm:$0xff] 0.0
    %21 = vst [vmem:[#allocation2 + $0x28] sm:$0xff] 0.0
    %22 = vst [vmem:[#allocation2 + $0x30] sm:$0xff] 0.0
    %23 = vst [vmem:[#allocation2 + $0x38] sm:$0xff] 0.0
    %24 = vst [vmem:[#allocation2 + $0x40] sm:$0xff] 0.0
    %25 = vst [vmem:[#allocation2 + $0x48] sm:$0xff] 0.0
    %26 = vst [vmem:[#allocation2 + $0x50] sm:$0xff] 0.0
    %27 = vst [vmem:[#allocation2 + $0x58] sm:$0xff] 0.0
    %28 = vst [vmem:[#allocation2 + $0x60] sm:$0xff] 0.0
    %29 = vst [vmem:[#allocation2 + $0x68] sm:$0xff] 0.0
    %30 = vst [vmem:[#allocation2 + $0x70] sm:$0xff] 0.0
    %31 = vst [vmem:[#allocation2 + $0x78] sm:$0xff] 0.0
  $region13: #{bottleneck_forward.17} parent=0 // pred_fallthru
    _
  %v32 = vld [vmem:[#allocation2] sm:$0xff]
  %v33 = vld [vmem:[#allocation2 + $0x8] sm:$0xff]
  %v34 = vld [vmem:[#allocation2 + $0x10] sm:$0xff]
  %v35 = vld [vmem:[#allocation2 + $0x18] sm:$0xff]
  %v36 = vld [vmem:[#allocation2 + $0x20] sm:$0xff]
  %v37 = vld [vmem:[#allocation2 + $0x28] sm:$0xff]
  %v38 = vld [vmem:[#allocation2 + $0x30] sm:$0xff]
  %v39 = vld [vmem:[#allocation2 + $0x38] sm:$0xff]
  %v40 = vld [vmem:[#allocation2 + $0x40] sm:$0xff]
  %v41 = vld [vmem:[#allocation2 + $0x48] sm:$0xff]
  %v42 = vld [vmem:[#allocation2 + $0x50] sm:$0xff]
  %v43 = vld [vmem:[#allocation2 + $0x58] sm:$0xff]
  %v44 = vld [vmem:[#allocation2 + $0x60] sm:$0xff]
  %v45 = vld [vmem:[#allocation2 + $0x68] sm:$0xff]
  %v46 = vld [vmem:[#allocation2 + $0x70] sm:$0xff]
  %v47 = vld [vmem:[#allocation2 + $0x78] sm:$0xff]
  %v48 = vld [vmem:[%s0] sm:$0xf]
  %v49 = vld [vmem:[%s0 + $0x4] sm:$0xf]
  %v50 = vld [vmem:[%s0 + $0x8] sm:$0xf]
  %v51 = vld [vmem:[%s0 + $0xc] sm:$0xf]
  %v52 = vld [vmem:[%s0 + $0x10] sm:$0xf]
  %v53 = vld [vmem:[%s0 + $0x14] sm:$0xf]
  %v54 = vld [vmem:[%s0 + $0x18] sm:$0xf]
  %v55 = vld [vmem:[%s0 + $0x1c] sm:$0xf]
  %v56 = vld [vmem:[%s0 + $0x20] sm:$0xf]
  %v57 = vld [vmem:[%s0 + $0x24] sm:$0xf]
  %v58 = vld [vmem:[%s0 + $0x28] sm:$0xf]
  %v59 = vld [vmem:[%s0 + $0x2c] sm:$0xf]
  %v60 = vld [vmem:[%s0 + $0x30] sm:$0xf]
  %v61 = vld [vmem:[%s0 + $0x34] sm:$0xf]
  %v62 = vld [vmem:[%s0 + $0x38] sm:$0xf]
  %v63 = vld [vmem:[%s0 + $0x3c] sm:$0xf]
  %v64 = vld [vmem:[%s1] sm:$0xf]
  %v65 = vld [vmem:[%s1 + $0x4] sm:$0xf]
  %v66 = vld [vmem:[%s1 + $0x8] sm:$0xf]
  %v67 = vld [vmem:[%s1 + $0xc] sm:$0xf]
  %v68 = vld [vmem:[%s1 + $0x10] sm:$0xf]
  %v69 = vld [vmem:[%s1 + $0x14] sm:$0xf]
  %v70 = vld [vmem:[%s1 + $0x18] sm:$0xf]
  %v71 = vld [vmem:[%s1 + $0x1c] sm:$0xf]
  %v72 = vld [vmem:[%s1 + $0x20] sm:$0xf]
  %v73 = vld [vmem:[%s1 + $0x24] sm:$0xf]
  %v74 = vld [vmem:[%s1 + $0x28] sm:$0xf]
  %v75 = vld [vmem:[%s1 + $0x2c] sm:$0xf]
  %v76 = vld [vmem:[%s1 + $0x30] sm:$0xf]
  %v77 = vld [vmem:[%s1 + $0x34] sm:$0xf]
  %v78 = vld [vmem:[%s1 + $0x38] sm:$0xf]
  %v79 = vld [vmem:[%s1 + $0x3c] sm:$0xf]
  %v96 = vunpack.c.l.b16 %v48
  %v97 = vunpack.c.l.b16 %v49
  %v98 = vunpack.c.l.b16 %v50
  %v99 = vunpack.c.l.b16 %v51
  %v100 = vunpack.c.l.b16 %v52
  %v101 = vunpack.c.l.b16 %v53
  %v102 = vunpack.c.l.b16 %v54
  %v103 = vunpack.c.l.b16 %v55
  %v104 = vunpack.c.l.b16 %v56
  %v105 = vunpack.c.l.b16 %v57
  %v106 = vunpack.c.l.b16 %v58
  %v107 = vunpack.c.l.b16 %v59
  %v108 = vunpack.c.l.b16 %v60
  %v109 = vunpack.c.l.b16 %v61
  %v110 = vunpack.c.l.b16 %v62
  %v111 = vunpack.c.l.b16 %v63
  %v112 = vpack.c.b16 %v97, %v96
  %v113 = vpack.c.b16 %v99, %v98
  %v114 = vpack.c.b16 %v101, %v100
  %v115 = vpack.c.b16 %v103, %v102
  %v116 = vpack.c.b16 %v105, %v104
  %v117 = vpack.c.b16 %v107, %v106
  %v118 = vpack.c.b16 %v109, %v108
  %v119 = vpack.c.b16 %v111, %v110
  %v144 = vunpack.c.l.b16 %v64
  %v145 = vunpack.c.l.b16 %v65
  %v146 = vunpack.c.l.b16 %v66
  %v147 = vunpack.c.l.b16 %v67
  %v148 = vunpack.c.l.b16 %v68
  %v149 = vunpack.c.l.b16 %v69
  %v150 = vunpack.c.l.b16 %v70
  %v151 = vunpack.c.l.b16 %v71
  %v152 = vunpack.c.l.b16 %v72
  %v153 = vunpack.c.l.b16 %v73
  %v154 = vunpack.c.l.b16 %v74
  %v155 = vunpack.c.l.b16 %v75
  %v156 = vunpack.c.l.b16 %v76
  %v157 = vunpack.c.l.b16 %v77
  %v158 = vunpack.c.l.b16 %v78
  %v159 = vunpack.c.l.b16 %v79
  %v160 = vpack.c.b16 %v145, %v144
  %v161 = vpack.c.b16 %v147, %v146
  %v162 = vpack.c.b16 %v149, %v148
  %v163 = vpack.c.b16 %v151, %v150
  %v164 = vpack.c.b16 %v153, %v152
  %v165 = vpack.c.b16 %v155, %v154
  %v166 = vpack.c.b16 %v157, %v156
  %v167 = vpack.c.b16 %v159, %v158
  %176 = vmatprep.subr.bf16.mxu0 0
  %177 = vmatpush1.bf16.msra.mxu0 %v167
  %178 = vmatprep.subr.bf16.mxu0 0
  %179 = vmatpush1.bf16.msra.mxu0 %v166
  %180 = vmatprep.subr.bf16.mxu0 0
  %181 = vmatpush1.bf16.msra.mxu0 %v165
  %182 = vmatprep.subr.bf16.mxu0 0
  %183 = vmatpush1.bf16.msra.mxu0 %v164
  %184 = vmatprep.subr.bf16.mxu0 0
  %185 = vmatpush1.bf16.msra.mxu0 %v163
  %186 = vmatprep.subr.bf16.mxu0 0
  %187 = vmatpush1.bf16.msra.mxu0 %v162
  %188 = vmatprep.subr.bf16.mxu0 0
  %189 = vmatpush1.bf16.msra.mxu0 %v161
  %190 = vmatprep.subr.bf16.mxu0 0
  %191 = vmatpush1.bf16.msra.mxu0 %v160
  %192 = vmatprep.subr.bf16.mxu0 0
  %193 = vmatpush2.bf16.msra.mxu0 0
  %194 = vmatprep.subr.bf16.mxu0 0
  %195 = vmatpush2.bf16.msra.mxu0 0
  %196 = vmatprep.subr.bf16.mxu0 0
  %197 = vmatpush2.bf16.msra.mxu0 0
  %198 = vmatprep.subr.bf16.mxu0 0
  %199 = vmatpush2.bf16.msra.mxu0 0
  %200 = vmatprep.subr.bf16.mxu0 0
  %201 = vmatpush2.bf16.msra.mxu0 0
  %202 = vmatprep.subr.bf16.mxu0 0
  %203 = vmatpush2.bf16.msra.mxu0 0
  %204 = vmatprep.subr.bf16.mxu0 0
  %205 = vmatpush2.bf16.msra.mxu0 0
  %206 = vmatprep.subr.bf16.mxu0 0
  %207 = vmatpush2.bf16.msra.mxu0 0
  %208 = vmatprep.mubr.bf16.mxu0 0
  %209 = vmatmul.mubr.bf16.gmra.mxu0 %v112
  %v210 = vpop.f32.mrf.mxu0
  %v211 = vadd.f32 0.0, %v210
  %v212 = vpop.f32.mrf.mxu0
  %v213 = vpop.f32.mrf.mxu0
  %v214 = vadd.f32 0.0, %v213
  %v215 = vpop.f32.mrf.mxu0
  %216 = vmatprep.mubr.bf16.mxu0 0
  %217 = vmatmul.mubr.bf16.gmra.mxu0 %v113
  %v218 = vpop.f32.mrf.mxu0
  %v219 = vadd.f32 0.0, %v218
  %v220 = vpop.f32.mrf.mxu0
  %v221 = vpop.f32.mrf.mxu0
  %v222 = vadd.f32 0.0, %v221
  %v223 = vpop.f32.mrf.mxu0
  %224 = vmatprep.mubr.bf16.mxu0 0
  %225 = vmatmul.mubr.bf16.gmra.mxu0 %v114
  %v226 = vpop.f32.mrf.mxu0
  %v227 = vadd.f32 0.0, %v226
  %v228 = vpop.f32.mrf.mxu0
  %v229 = vpop.f32.mrf.mxu0
  %v230 = vadd.f32 0.0, %v229
  %v231 = vpop.f32.mrf.mxu0
  %232 = vmatprep.mubr.bf16.mxu0 0
  %233 = vmatmul.mubr.bf16.gmra.mxu0 %v115
  %v234 = vpop.f32.mrf.mxu0
  %v235 = vadd.f32 0.0, %v234
  %v236 = vpop.f32.mrf.mxu0
  %v237 = vpop.f32.mrf.mxu0
  %v238 = vadd.f32 0.0, %v237
  %v239 = vpop.f32.mrf.mxu0
  %240 = vmatprep.mubr.bf16.mxu0 0
  %241 = vmatmul.mubr.bf16.gmra.mxu0 %v116
  %v242 = vpop.f32.mrf.mxu0
  %v243 = vadd.f32 0.0, %v242
  %v244 = vpop.f32.mrf.mxu0
  %v245 = vpop.f32.mrf.mxu0
  %v246 = vadd.f32 0.0, %v245
  %v247 = vpop.f32.mrf.mxu0
  %248 = vmatprep.mubr.bf16.mxu0 0
  %249 = vmatmul.mubr.bf16.gmra.mxu0 %v117
  %v250 = vpop.f32.mrf.mxu0
  %v251 = vadd.f32 0.0, %v250
  %v252 = vpop.f32.mrf.mxu0
  %v253 = vpop.f32.mrf.mxu0
  %v254 = vadd.f32 0.0, %v253
  %v255 = vpop.f32.mrf.mxu0
  %256 = vmatprep.mubr.bf16.mxu0 0
  %257 = vmatmul.mubr.bf16.gmra.mxu0 %v118
  %v258 = vpop.f32.mrf.mxu0
  %v259 = vadd.f32 0.0, %v258
  %v260 = vpop.f32.mrf.mxu0
  %v261 = vpop.f32.mrf.mxu0
  %v262 = vadd.f32 0.0, %v261
  %v263 = vpop.f32.mrf.mxu0
  %264 = vmatprep.mubr.bf16.mxu0 0
  %265 = vmatmul.mubr.bf16.gmra.mxu0 %v119
  %v266 = vpop.f32.mrf.mxu0
  %v267 = vadd.f32 0.0, %v266
  %v268 = vpop.f32.mrf.mxu0
  %v269 = vpop.f32.mrf.mxu0
  %v270 = vadd.f32 0.0, %v269
  %v271 = vpop.f32.mrf.mxu0
  %272 = vdwg.mxu0
  %v273 = vadd.f32 %v32, %v211
  %v274 = vadd.f32 %v33, %v214
  %v275 = vadd.f32 %v34, %v219
  %v276 = vadd.f32 %v35, %v222
  %v277 = vadd.f32 %v36, %v227
  %v278 = vadd.f32 %v37, %v230
  %v279 = vadd.f32 %v38, %v235
  %v280 = vadd.f32 %v39, %v238
  %v281 = vadd.f32 %v40, %v243
  %v282 = vadd.f32 %v41, %v246
  %v283 = vadd.f32 %v42, %v251
  %v284 = vadd.f32 %v43, %v254
  %v285 = vadd.f32 %v44, %v259
  %v286 = vadd.f32 %v45, %v262
  %v287 = vadd.f32 %v46, %v267
  %v288 = vadd.f32 %v47, %v270
  %289 = vst [vmem:[#allocation2] sm:$0xff] %v273
  %290 = vst [vmem:[#allocation2 + $0x8] sm:$0xff] %v274
  %291 = vst [vmem:[#allocation2 + $0x10] sm:$0xff] %v275
  %292 = vst [vmem:[#allocation2 + $0x18] sm:$0xff] %v276
  %293 = vst [vmem:[#allocation2 + $0x20] sm:$0xff] %v277
  %294 = vst [vmem:[#allocation2 + $0x28] sm:$0xff] %v278
  %295 = vst [vmem:[#allocation2 + $0x30] sm:$0xff] %v279
  %296 = vst [vmem:[#allocation2 + $0x38] sm:$0xff] %v280
  %297 = vst [vmem:[#allocation2 + $0x40] sm:$0xff] %v281
  %298 = vst [vmem:[#allocation2 + $0x48] sm:$0xff] %v282
  %299 = vst [vmem:[#allocation2 + $0x50] sm:$0xff] %v283
  %300 = vst [vmem:[#allocation2 + $0x58] sm:$0xff] %v284
  %301 = vst [vmem:[#allocation2 + $0x60] sm:$0xff] %v285
  %302 = vst [vmem:[#allocation2 + $0x68] sm:$0xff] %v286
  %303 = vst [vmem:[#allocation2 + $0x70] sm:$0xff] %v287
  %304 = vst [vmem:[#allocation2 + $0x78] sm:$0xff] %v288
  // Predicated region
  $region14: #{bottleneck_forward.17} parent=0 // pred_check
    %p305 = pneg %p12
  $region15: #{bottleneck_forward.17} parent=0 // pred_check_branch
    %307 = sbr.rel (%p305) target = $region17
  $region16: #{bottleneck_forward.17} parent=0 // pred_region
    %v308 = vld [vmem:[#allocation2] sm:$0xff]
    %v309 = vld [vmem:[#allocation2 + $0x8] sm:$0xff]
    %v310 = vld [vmem:[#allocation2 + $0x10] sm:$0xff]
    %v311 = vld [vmem:[#allocation2 + $0x18] sm:$0xff]
    %v312 = vld [vmem:[#allocation2 + $0x20] sm:$0xff]
    %v313 = vld [vmem:[#allocation2 + $0x28] sm:$0xff]
    %v314 = vld [vmem:[#allocation2 + $0x30] sm:$0xff]
    %v315 = vld [vmem:[#allocation2 + $0x38] sm:$0xff]
    %v316 = vld [vmem:[#allocation2 + $0x40] sm:$0xff]
    %v317 = vld [vmem:[#allocation2 + $0x48] sm:$0xff]
    %v318 = vld [vmem:[#allocation2 + $0x50] sm:$0xff]
    %v319 = vld [vmem:[#allocation2 + $0x58] sm:$0xff]
    %v320 = vld [vmem:[#allocation2 + $0x60] sm:$0xff]
    %v321 = vld [vmem:[#allocation2 + $0x68] sm:$0xff]
    %v322 = vld [vmem:[#allocation2 + $0x70] sm:$0xff]
    %v323 = vld [vmem:[#allocation2 + $0x78] sm:$0xff]
    %324 = vst [vmem:[%s2] sm:$0xff] %v308
    %325 = vst [vmem:[%s2 + $0x8] sm:$0xff] %v309
    %326 = vst [vmem:[%s2 + $0x10] sm:$0xff] %v310
    %327 = vst [vmem:[%s2 + $0x18] sm:$0xff] %v311
    %328 = vst [vmem:[%s2 + $0x20] sm:$0xff] %v312
    %329 = vst [vmem:[%s2 + $0x28] sm:$0xff] %v313
    %330 = vst [vmem:[%s2 + $0x30] sm:$0xff] %v314
    %331 = vst [vmem:[%s2 + $0x38] sm:$0xff] %v315
    %332 = vst [vmem:[%s2 + $0x40] sm:$0xff] %v316
    %333 = vst [vmem:[%s2 + $0x48] sm:$0xff] %v317
    %334 = vst [vmem:[%s2 + $0x50] sm:$0xff] %v318
    %335 = vst [vmem:[%s2 + $0x58] sm:$0xff] %v319
    %336 = vst [vmem:[%s2 + $0x60] sm:$0xff] %v320
    %337 = vst [vmem:[%s2 + $0x68] sm:$0xff] %v321
    %338 = vst [vmem:[%s2 + $0x70] sm:$0xff] %v322
    %339 = vst [vmem:[%s2 + $0x78] sm:$0xff] %v323
  $region17: #{bottleneck_forward.17} parent=0 // pred_fallthru
    _
  // Predicated region
  $region18: #{bottleneck_forward.17} parent=0 // pred_check
    _
  $region19: #{bottleneck_forward.17} parent=0 // pred_check_branch
    %341 = sbr.rel (0) target = $region21
  $region20: #{bottleneck_forward.17} parent=0 // pred_region
    _
  $region21: #{bottleneck_forward.17} parent=0 // pred_fallthru
    _
  // Predicated region
  $region22: #{bottleneck_forward.17} parent=0 // pred_check
    _
  $region23: #{bottleneck_forward.17} parent=0 // pred_check_branch
    %343 = sbr.rel (0) target = $region25
  $region24: #{bottleneck_forward.17} parent=0 // pred_region
    _
  $region25: #{bottleneck_forward.17} parent=0 // pred_fallthru
    _

// kernel: bottleneck_forward.21
$region0: #{bottleneck_forward.21}
  #allocation0 [shape = 'u32[]', space=smem, size = 0x4, offset = 0x4, fixed_abs, tag = 'smem constant byte address 0x4 - core index']
  #allocation1 [shape = 'u32[144,128]{1,0:T(1,128)}', space=vmem, size = 0x12000, scoped, tag = 'internal scratch']
  %s0 = inlined_call_operand.vmem [shape: f32[128,128], index: 0, kind: input, shape index: {}]
  %s1 = inlined_call_operand.vmem [shape: f32[1,128], index: 1, kind: input, shape index: {}]
  %s2 = inlined_call_operand.vmem [shape: f32[1,128], index: 2, kind: input, shape index: {}]
  %s3 = inlined_call_operand.vmem [shape: f32[128,128], index: 3, kind: input, shape index: {}]
  %s4 = inlined_call_operand.vmem [shape: f32[1,128], index: 4, kind: input, shape index: {}]
  %s5 = inlined_call_operand.vmem [shape: f32[1,128], index: 5, kind: input, shape index: {}]
  %s6 = inlined_call_operand.hbm [shape: f32[128,128], index: 6, kind: output, shape index: {}]
  %s7 = sld [smem:[#allocation0]]
  $region34: #{bottleneck_forward.21} parent=0
    _
  %s9 = ssub.s32 1, %s7
  %s10 = scalar_select 0, %s9, %s7
  $region1: #{bottleneck_forward.21} parent=0
    #allocation2 [shape = 'u8[65536]{0}', space=vmem, size = 0x10000, scoped, tag = 'output window, operand 0, single buffered']
    #allocation3 [shape = 's32[1]{0}', space=sflag, size = 0x4, scoped, tag = 'scoped memory for bottleneck_forward.21']
    %11 = vsyncpa [#allocation3], 0
    // Predicated region
    $region2: #{bottleneck_forward.21} parent=1 // pred_check
      _
    $region3: #{bottleneck_forward.21} parent=1 // pred_check_branch
      %13 = sbr.rel (0) target = $region5
    $region4: #{bottleneck_forward.21} parent=1 // pred_region
      _
    $region5: #{bottleneck_forward.21} parent=1 // pred_fallthru
      _
    // Predicated region
    $region6: #{bottleneck_forward.21} parent=1 // pred_check
      _
    $region7: #{bottleneck_forward.21} parent=1 // pred_check_branch
      %15 = sbr.rel (0) target = $region9
    $region8: #{bottleneck_forward.21} parent=1 // pred_region
      _
    $region9: #{bottleneck_forward.21} parent=1 // pred_fallthru
      _
    // Predicated region
    $region10: #{bottleneck_forward.21} parent=1 // pred_check
      _
    $region11: #{bottleneck_forward.21} parent=1 // pred_check_branch
      %17 = sbr.rel (0) target = $region13
    $region12: #{bottleneck_forward.21} parent=1 // pred_region
      _
    $region13: #{bottleneck_forward.21} parent=1 // pred_fallthru
      _
    // Predicated region
    $region14: #{bottleneck_forward.21} parent=1 // pred_check
      _
    $region15: #{bottleneck_forward.21} parent=1 // pred_check_branch
      %19 = sbr.rel (0) target = $region17
    $region16: #{bottleneck_forward.21} parent=1 // pred_region
      _
    $region17: #{bottleneck_forward.21} parent=1 // pred_fallthru
      _
    // Predicated region
    $region18: #{bottleneck_forward.21} parent=1 // pred_check
      _
    $region19: #{bottleneck_forward.21} parent=1 // pred_check_branch
      %21 = sbr.rel (0) target = $region21
    $region20: #{bottleneck_forward.21} parent=1 // pred_region
      _
    $region21: #{bottleneck_forward.21} parent=1 // pred_fallthru
      _
    // Predicated region
    $region22: #{bottleneck_forward.21} parent=1 // pred_check
      _
    $region23: #{bottleneck_forward.21} parent=1 // pred_check_branch
      %23 = sbr.rel (0) target = $region25
    $region24: #{bottleneck_forward.21} parent=1 // pred_region
      _
    $region25: #{bottleneck_forward.21} parent=1 // pred_fallthru
      _
    %v24 = vld [vmem:[%s0] sm:$0xff]
    %v25 = vld [vmem:[%s0 + $0x8] sm:$0xff]
    %v26 = vld [vmem:[%s0 + $0x10] sm:$0xff]
    %v27 = vld [vmem:[%s0 + $0x18] sm:$0xff]
    %v28 = vld [vmem:[%s0 + $0x20] sm:$0xff]
    %v29 = vld [vmem:[%s0 + $0x28] sm:$0xff]
    %v30 = vld [vmem:[%s0 + $0x30] sm:$0xff]
    %v31 = vld [vmem:[%s0 + $0x38] sm:$0xff]
    %v32 = vld [vmem:[%s0 + $0x40] sm:$0xff]
    %v33 = vld [vmem:[%s0 + $0x48] sm:$0xff]
    %v34 = vld [vmem:[%s0 + $0x50] sm:$0xff]
    %v35 = vld [vmem:[%s0 + $0x58] sm:$0xff]
    %v36 = vld [vmem:[%s0 + $0x60] sm:$0xff]
    %v37 = vld [vmem:[%s0 + $0x68] sm:$0xff]
    %v38 = vld [vmem:[%s0 + $0x70] sm:$0xff]
    %v39 = vld [vmem:[%s0 + $0x78] sm:$0xff]
    %v40 = vld [vmem:[%s1] sm:$0x1]
    %v42 = vlaneseq
    %v43 = vshrl.u32 %v42, 7
    %v44 = vsub.s32 0, %v43
    %v45 = vrot.slane %v40, %v44
    %v47 = vmul.f32 %v24, %v45
    %v48 = vmul.f32 %v25, %v45
    %v49 = vmul.f32 %v26, %v45
    %v50 = vmul.f32 %v27, %v45
    %v51 = vmul.f32 %v28, %v45
    %v52 = vmul.f32 %v29, %v45
    %v53 = vmul.f32 %v30, %v45
    %v54 = vmul.f32 %v31, %v45
    %v55 = vmul.f32 %v32, %v45
    %v56 = vmul.f32 %v33, %v45
    %v57 = vmul.f32 %v34, %v45
    %v58 = vmul.f32 %v35, %v45
    %v59 = vmul.f32 %v36, %v45
    %v60 = vmul.f32 %v37, %v45
    %v61 = vmul.f32 %v38, %v45
    %v62 = vmul.f32 %v39, %v45
    %v63 = vld [vmem:[%s2] sm:$0x1]
    %v65 = vlaneseq
    %v66 = vshrl.u32 %v65, 7
    %v67 = vsub.s32 0, %v66
    %v68 = vrot.slane %v63, %v67
    %v70 = vadd.f32 %v47, %v68
    %v71 = vadd.f32 %v48, %v68
    %v72 = vadd.f32 %v49, %v68
    %v73 = vadd.f32 %v50, %v68
    %v74 = vadd.f32 %v51, %v68
    %v75 = vadd.f32 %v52, %v68
    %v76 = vadd.f32 %v53, %v68
    %v77 = vadd.f32 %v54, %v68
    %v78 = vadd.f32 %v55, %v68
    %v79 = vadd.f32 %v56, %v68
    %v80 = vadd.f32 %v57, %v68
    %v81 = vadd.f32 %v58, %v68
    %v82 = vadd.f32 %v59, %v68
    %v83 = vadd.f32 %v60, %v68
    %v84 = vadd.f32 %v61, %v68
    %v85 = vadd.f32 %v62, %v68
    %v86 = vld [vmem:[%s3] sm:$0xff]
    %v87 = vld [vmem:[%s3 + $0x8] sm:$0xff]
    %v88 = vld [vmem:[%s3 + $0x10] sm:$0xff]
    %v89 = vld [vmem:[%s3 + $0x18] sm:$0xff]
    %v90 = vld [vmem:[%s3 + $0x20] sm:$0xff]
    %v91 = vld [vmem:[%s3 + $0x28] sm:$0xff]
    %v92 = vld [vmem:[%s3 + $0x30] sm:$0xff]
    %v93 = vld [vmem:[%s3 + $0x38] sm:$0xff]
    %v94 = vld [vmem:[%s3 + $0x40] sm:$0xff]
    %v95 = vld [vmem:[%s3 + $0x48] sm:$0xff]
    %v96 = vld [vmem:[%s3 + $0x50] sm:$0xff]
    %v97 = vld [vmem:[%s3 + $0x58] sm:$0xff]
    %v98 = vld [vmem:[%s3 + $0x60] sm:$0xff]
    %v99 = vld [vmem:[%s3 + $0x68] sm:$0xff]
    %v100 = vld [vmem:[%s3 + $0x70] sm:$0xff]
    %v101 = vld [vmem:[%s3 + $0x78] sm:$0xff]
    %v102 = vld [vmem:[%s4] sm:$0x1]
    %v104 = vlaneseq
    %v105 = vshrl.u32 %v104, 7
    %v106 = vsub.s32 0, %v105
    %v107 = vrot.slane %v102, %v106
    %v109 = vmul.f32 %v86, %v107
    %v110 = vmul.f32 %v87, %v107
    %v111 = vmul.f32 %v88, %v107
    %v112 = vmul.f32 %v89, %v107
    %v113 = vmul.f32 %v90, %v107
    %v114 = vmul.f32 %v91, %v107
    %v115 = vmul.f32 %v92, %v107
    %v116 = vmul.f32 %v93, %v107
    %v117 = vmul.f32 %v94, %v107
    %v118 = vmul.f32 %v95, %v107
    %v119 = vmul.f32 %v96, %v107
    %v120 = vmul.f32 %v97, %v107
    %v121 = vmul.f32 %v98, %v107
    %v122 = vmul.f32 %v99, %v107
    %v123 = vmul.f32 %v100, %v107
    %v124 = vmul.f32 %v101, %v107
    %v125 = vadd.f32 %v70, %v109
    %v126 = vadd.f32 %v71, %v110
    %v127 = vadd.f32 %v72, %v111
    %v128 = vadd.f32 %v73, %v112
    %v129 = vadd.f32 %v74, %v113
    %v130 = vadd.f32 %v75, %v114
    %v131 = vadd.f32 %v76, %v115
    %v132 = vadd.f32 %v77, %v116
    %v133 = vadd.f32 %v78, %v117
    %v134 = vadd.f32 %v79, %v118
    %v135 = vadd.f32 %v80, %v119
    %v136 = vadd.f32 %v81, %v120
    %v137 = vadd.f32 %v82, %v121
    %v138 = vadd.f32 %v83, %v122
    %v139 = vadd.f32 %v84, %v123
    %v140 = vadd.f32 %v85, %v124
    %v141 = vld [vmem:[%s5] sm:$0x1]
    %v143 = vlaneseq
    %v144 = vshrl.u32 %v143, 7
    %v145 = vsub.s32 0, %v144
    %v146 = vrot.slane %v141, %v145
    %v148 = vadd.f32 %v125, %v146
    %v149 = vadd.f32 %v126, %v146
    %v150 = vadd.f32 %v127, %v146
    %v151 = vadd.f32 %v128, %v146
    %v152 = vadd.f32 %v129, %v146
    %v153 = vadd.f32 %v130, %v146
    %v154 = vadd.f32 %v131, %v146
    %v155 = vadd.f32 %v132, %v146
    %v156 = vadd.f32 %v133, %v146
    %v157 = vadd.f32 %v134, %v146
    %v158 = vadd.f32 %v135, %v146
    %v159 = vadd.f32 %v136, %v146
    %v160 = vadd.f32 %v137, %v146
    %v161 = vadd.f32 %v138, %v146
    %v162 = vadd.f32 %v139, %v146
    %v163 = vadd.f32 %v140, %v146
    %v164 = vmax.f32 %v148, 0.0
    %v165 = vmax.f32 %v149, 0.0
    %v166 = vmax.f32 %v150, 0.0
    %v167 = vmax.f32 %v151, 0.0
    %v168 = vmax.f32 %v152, 0.0
    %v169 = vmax.f32 %v153, 0.0
    %v170 = vmax.f32 %v154, 0.0
    %v171 = vmax.f32 %v155, 0.0
    %v172 = vmax.f32 %v156, 0.0
    %v173 = vmax.f32 %v157, 0.0
    %v174 = vmax.f32 %v158, 0.0
    %v175 = vmax.f32 %v159, 0.0
    %v176 = vmax.f32 %v160, 0.0
    %v177 = vmax.f32 %v161, 0.0
    %v178 = vmax.f32 %v162, 0.0
    %v179 = vmax.f32 %v163, 0.0
    %180 = vst [vmem:[#allocation2] sm:$0xff] %v164
    %181 = vst [vmem:[#allocation2 + $0x8] sm:$0xff] %v165
    %182 = vst [vmem:[#allocation2 + $0x10] sm:$0xff] %v166
    %183 = vst [vmem:[#allocation2 + $0x18] sm:$0xff] %v167
    %184 = vst [vmem:[#allocation2 + $0x20] sm:$0xff] %v168
    %185 = vst [vmem:[#allocation2 + $0x28] sm:$0xff] %v169
    %186 = vst [vmem:[#allocation2 + $0x30] sm:$0xff] %v170
    %187 = vst [vmem:[#allocation2 + $0x38] sm:$0xff] %v171
    %188 = vst [vmem:[#allocation2 + $0x40] sm:$0xff] %v172
    %189 = vst [vmem:[#allocation2 + $0x48] sm:$0xff] %v173
    %190 = vst [vmem:[#allocation2 + $0x50] sm:$0xff] %v174
    %191 = vst [vmem:[#allocation2 + $0x58] sm:$0xff] %v175
    %192 = vst [vmem:[#allocation2 + $0x60] sm:$0xff] %v176
    %193 = vst [vmem:[#allocation2 + $0x68] sm:$0xff] %v177
    %194 = vst [vmem:[#allocation2 + $0x70] sm:$0xff] %v178
    %195 = vst [vmem:[#allocation2 + $0x78] sm:$0xff] %v179
    // Predicated region
    $region26: #{bottleneck_forward.21} parent=1 // pred_check
      _
    $region27: #{bottleneck_forward.21} parent=1 // pred_check_branch
      %197 = sbr.rel (0) target = $region29
    $region28: #{bottleneck_forward.21} parent=1 // pred_region
      %s199 = ssub.s32 2048, 2048
      %200 = vsyncadd [#allocation3], %s199
      %s201 = sshll.u32 [#allocation2], 4
      %s202 = int_to_ptr.vmem [resolvable:$true] %s201
      %207 = dma.vmem_to_hbm [thread:$0]  %s202, 2048, %s6, [#allocation3], 128, 128, 8
    $region29: #{bottleneck_forward.21} parent=1 // pred_fallthru
      _
    // Predicated region
    $region30: #{bottleneck_forward.21} parent=1 // pred_check
      _
    $region31: #{bottleneck_forward.21} parent=1 // pred_check_branch
      %209 = sbr.rel (0) target = $region33
    $region32: #{bottleneck_forward.21} parent=1 // pred_region
      %210 = dma.done [#allocation3], 2048
    $region33: #{bottleneck_forward.21} parent=1 // pred_fallthru
      _
    %211 = vsyncpa [#allocation3], 1

</llo_original>
